<compile_context>
chip_gen: v5e
topology: v5e:2x2
jax: 0.10.0
libtpu: 0.0.40
codegen_flags: <defaults>
</compile_context>

<pallas_src>
import functools

import jax
import jax.numpy as jnp
from jax import lax
from jax.experimental import pallas as pl
from jax.experimental.pallas import tpu as pltpu


# ---------------------------------------------------------------------------
# VMEM-aware tiling
# ---------------------------------------------------------------------------
def _vmem_capacity_bytes():
    try:
        return int(pltpu.get_tpu_info().vmem_capacity_bytes)
    except Exception:
        return 64 << 20          # conservative fallback (v7x physical VMEM)


def _vmem_limit_bytes():
    # Raise the scoped-VMEM default but leave headroom: 48 MiB on v7x (64 MiB
    # physical), 96 MiB on v5e/v6e (128 MiB physical).
    return int(min(_vmem_capacity_bytes() * 3 // 4, 96 << 20))


def _round_up8(x):
    return ((x + 7) // 8) * 8


def _choose_tile_n(n, bsz, d, itemsize, vmem_limit):
    """Tile along N for the two-pass kernels (multiple of 8; need not divide N)."""
    if n < 16:
        return n
    # Per grid step, per modality: pass 2 holds in+out blocks double-buffered
    # (~4x block); pass 1 holds the input block plus ~3x block of f32 temporaries.
    # Two modalities share each call -> budget ~1/16 of the VMEM limit per block.
    # TODO(synk): a D-chunked fori_loop accumulation in the stats kernel would let
    # bf16 inputs take even fatter tiles on v7x; the budget below accounts for the
    # f32 temporaries instead.
    target = max(1 << 20, min(8 << 20, vmem_limit // 16))
    row_bytes = max(1, bsz * d * max(itemsize, 4))     # f32 temporaries dominate
    fit = max(8, target // row_bytes)
    if fit >= n:
        # Whole N would fit in one block: split in two anyway so the "parallel"
        # grid axis has >= 2 steps (keeps both v7x TensorCores busy).
        return min(n, _round_up8((n + 1) // 2))
    return max(8, fit - (fit % 8))


# ---------------------------------------------------------------------------
# Two-pass path, pass 1: per-row (over D) mean + unbiased variance, f32.
# Both modalities in one call; two-pass (centered) variance within the block.
# ---------------------------------------------------------------------------
def _row_stats_kernel(f1_ref, f2_ref, mu1_ref, var1_ref, mu2_ref, var2_ref, *, d):
    def stats(f_ref, mu_ref, var_ref):
        f = f_ref[...].astype(jnp.float32)                     # (B, tN, D)
        mu = jnp.sum(f, axis=-1, keepdims=True) * (1.0 / d)
        c = f - mu
        var_ref[...] = jnp.sum(c * c, axis=-1, keepdims=True) * (1.0 / (d - 1))
        mu_ref[...] = mu
    stats(f1_ref, mu1_ref, var1_ref)
    stats(f2_ref, mu2_ref, var2_ref)


def row_stats(f1, f2, tile_n, vmem_limit):
    bsz, n, d = f1.shape
    grid = (pl.cdiv(n, tile_n),)
    data_spec = pl.BlockSpec((bsz, tile_n, d), lambda i: (0, i, 0))
    stat_spec = pl.BlockSpec((bsz, tile_n, 1), lambda i: (0, i, 0))
    stat_shape = jax.ShapeDtypeStruct((bsz, n, 1), jnp.float32)
    # TODO(synk): the stats outputs are lane-width-1 (masked vst); they are ~1/D of
    # the read bytes and hide under the input DMA, so we leave them non-lane-dense.
    return pl.pallas_call(
        functools.partial(_row_stats_kernel, d=d),
        grid=grid,
        in_specs=[data_spec, data_spec],
        out_specs=(stat_spec, stat_spec, stat_spec, stat_spec),
        out_shape=(stat_shape, stat_shape, stat_shape, stat_shape),
        compiler_params=pltpu.CompilerParams(
            dimension_semantics=("parallel",),
            vmem_limit_bytes=vmem_limit),
    )(f1, f2)


# ---------------------------------------------------------------------------
# Two-pass path, pass 2: fused per-row affine  out = f * A + B
# (mask + normalize + blend all folded into f32 A/B; downcast only on store)
# ---------------------------------------------------------------------------
def _affine_kernel(f1_ref, a1_ref, b1_ref, f2_ref, a2_ref, b2_ref, o1_ref, o2_ref):
    o1_ref[...] = (f1_ref[...].astype(jnp.float32) * a1_ref[...] + b1_ref[...]
                   ).astype(o1_ref.dtype)
    o2_ref[...] = (f2_ref[...].astype(jnp.float32) * a2_ref[...] + b2_ref[...]
                   ).astype(o2_ref.dtype)


def affine(f1, a1, b1, f2, a2, b2, tile_n, vmem_limit):
    bsz, n, d = f1.shape
    grid = (pl.cdiv(n, tile_n),)
    data_spec = pl.BlockSpec((bsz, tile_n, d), lambda i: (0, i, 0))
    stat_spec = pl.BlockSpec((bsz, tile_n, 1), lambda i: (0, i, 0))
    return pl.pallas_call(
        _affine_kernel,
        grid=grid,
        in_specs=[data_spec, stat_spec, stat_spec,
                  data_spec, stat_spec, stat_spec],
        out_specs=(data_spec, data_spec),
        out_shape=(jax.ShapeDtypeStruct((bsz, n, d), f1.dtype),
                   jax.ShapeDtypeStruct((bsz, n, d), f2.dtype)),
        compiler_params=pltpu.CompilerParams(
            dimension_semantics=("parallel",),
            vmem_limit_bytes=vmem_limit),
    )(f1, a1, b1, f2, a2, b2)


# ---------------------------------------------------------------------------
# Fused single-dispatch path (B == 1, everything VMEM-resident):
# mask + stats + in-kernel permutation gather + blend + affine, one kernel.
# ---------------------------------------------------------------------------
def _fused_entangle_kernel(f1_ref, f2_ref, m1_ref, m2_ref, c1_ref, c2_ref,
                           g12_ref, g21_ref, o1_ref, o2_ref, *, d, n, eps):
    f1 = f1_ref[...].astype(jnp.float32) * m1_ref[...]          # masked, (1, N, D)
    f2 = f2_ref[...].astype(jnp.float32) * m2_ref[...]

    def stats_of(f):
        mu = jnp.sum(f, axis=-1, keepdims=True) * (1.0 / d)     # (1, N, 1)
        c = f - mu
        var = jnp.sum(c * c, axis=-1, keepdims=True) * (1.0 / (d - 1))
        return mu.reshape(n, 1), jnp.sqrt(var + eps).reshape(n, 1)

    mu1, sd1 = stats_of(f1)                                     # (N, 1) f32
    mu2, sd2 = stats_of(f2)

    # Permutation gather without HBM traffic: one-hot (N, N) from the (N, 1) int32
    # index vector (iota + compare), applied with an MXU dot.
    col = lax.broadcasted_iota(jnp.int32, (n, n), 1)
    oh12 = jnp.where(col == g12_ref[...], 1.0, 0.0).astype(jnp.float32)
    oh21 = jnp.where(col == g21_ref[...], 1.0, 0.0).astype(jnp.float32)

    def gather(onehot, x):                                      # (N, 1)
        return jnp.dot(onehot, x, preferred_element_type=jnp.float32)

    c1 = c1_ref[...]                                            # (N, 1) f32
    c2 = c2_ref[...]
    bmu1 = mu1 * c1 + gather(oh12, mu2) * (1.0 - c1)
    bsd1 = sd1 * c1 + gather(oh12, sd2) * (1.0 - c1)
    bmu2 = mu2 * c2 + gather(oh21, mu1) * (1.0 - c2)
    bsd2 = sd2 * c2 + gather(oh21, sd1) * (1.0 - c2)

    r1 = bsd1 / sd1
    r2 = bsd2 / sd2
    a1 = r1.reshape(1, n, 1)
    b1 = (bmu1 - mu1 * r1).reshape(1, n, 1)
    a2 = r2.reshape(1, n, 1)
    b2 = (bmu2 - mu2 * r2).reshape(1, n, 1)

    o1_ref[...] = (f1 * a1 + b1).astype(o1_ref.dtype)
    o2_ref[...] = (f2 * a2 + b2).astype(o2_ref.dtype)


def fused_call(f1, f2, m1, m2, c1, c2, g12, g21, *, eps, vmem_limit):
    bsz, n, d = f1.shape
    data_spec = pl.BlockSpec((bsz, n, d), lambda i: (0, 0, 0))
    mask_spec = pl.BlockSpec((1, n, 1), lambda i: (0, 0, 0))
    vec_spec = pl.BlockSpec((n, 1), lambda i: (0, 0))
    return pl.pallas_call(
        functools.partial(_fused_entangle_kernel, d=d, n=n, eps=eps),
        grid=(1,),
        in_specs=[data_spec, data_spec, mask_spec, mask_spec,
                  vec_spec, vec_spec, vec_spec, vec_spec],
        out_specs=(data_spec, data_spec),
        out_shape=(jax.ShapeDtypeStruct((bsz, n, d), f1.dtype),
                   jax.ShapeDtypeStruct((bsz, n, d), f2.dtype)),
        compiler_params=pltpu.CompilerParams(
            dimension_semantics=("arbitrary",),
            vmem_limit_bytes=vmem_limit),
    )(f1, f2, m1, m2, c1, c2, g12, g21)


# ---------------------------------------------------------------------------
# Glue: RNG mirroring the torch module's host-side randomness (all on device)
# ---------------------------------------------------------------------------
def draw_randoms(key, n1, n2, p_mask, alpha):
    ks = jax.random.split(key, 9)

    def make_mask(kprob, kperm, n):
        prob = jax.random.uniform(kprob, (n,))
        vec = prob >= p_mask
        # "if not mask_vec.any(): mask_vec[0] = True"
        vec = jnp.where(jnp.any(vec), vec, vec.at[0].set(True))
        # "mask_vec = mask_vec[torch.randperm(...)]"
        return jax.random.permutation(kperm, vec)

    return dict(
        mask1=make_mask(ks[0], ks[1], n1),
        mask2=make_mask(ks[2], ks[3], n2),
        u=jax.random.uniform(ks[4], ()),                  # device scalar: no host sync
        c1=jax.random.beta(ks[5], alpha, alpha, (n1,)),   # Beta(alpha, alpha)
        c2=jax.random.beta(ks[6], alpha, alpha, (n2,)),
        idx1=jax.random.permutation(ks[7], n1),
        idx2=jax.random.permutation(ks[8], n2),
    )


# ---------------------------------------------------------------------------
# Forward (jit-able end to end)
# ---------------------------------------------------------------------------
def mccsdg_forward_pallas(f1, f2, randoms, *, p_aug, eps, training=True,
                          enabled=True, allow_fused=True):
    if not training:
        return f1, f2

    # NOTE: the reference broadcast (f1 stats [*,N1,1] against gathered f2 stats
    # [*,N2,1]) only type-checks when the modalities match; we keep those semantics,
    # which also lets both modalities share one grid per pallas_call.
    assert f1.shape == f2.shape, "MCCSDG entanglement requires matching [B, N, D]"
    bsz, n, d = f1.shape
    itemsize = jnp.dtype(f1.dtype).itemsize

    mask1 = randoms["mask1"].astype(jnp.float32).reshape(1, n, 1)
    mask2 = randoms["mask2"].astype(jnp.float32).reshape(1, n, 1)
    c1 = randoms["c1"].astype(jnp.float32)
    c2 = randoms["c2"].astype(jnp.float32)
    g12 = (randoms["idx2"] % n).astype(jnp.int32)
    g21 = (randoms["idx1"] % n).astype(jnp.int32)

    always_entangle = enabled and (p_aug >= 1.0)          # static python decision
    never_entangle = not enabled
    gate = randoms["u"] <= p_aug                          # device scalar gate

    vmem_limit = _vmem_limit_bytes()

    # ---- fused single-dispatch path (2x HBM traffic, one launch) ----
    fused_budget = min(24 << 20, vmem_limit // 2)
    fused_bytes = (8 * bsz * n * d * itemsize     # in+out blocks, double-buffered
                   + 8 * bsz * n * d * 4          # f32 temporaries (generous)
                   + 8 * n * n * 4)               # one-hot gather matrices (generous)
    if allow_fused and bsz == 1 and n >= 8 and fused_bytes <= fused_budget:
        if always_entangle:
            c1e, c2e = c1, c2
        elif never_entangle:
            c1e, c2e = jnp.ones_like(c1), jnp.ones_like(c2)
        else:
            # blend coeff == 1 makes the kernel reduce exactly to masking-only
            c1e = jnp.where(gate, c1, 1.0)
            c2e = jnp.where(gate, c2, 1.0)
        return fused_call(f1, f2, mask1, mask2,
                          c1e.reshape(n, 1), c2e.reshape(n, 1),
                          g12.reshape(n, 1), g21.reshape(n, 1),
                          eps=eps, vmem_limit=vmem_limit)

    # ---- two-pass path (stats kernel + fused per-row affine kernel) ----
    tile_n = _choose_tile_n(n, bsz, d, itemsize, vmem_limit)

    def entangle_params(_):
        mu1r, var1r, mu2r, var2r = row_stats(f1, f2, tile_n, vmem_limit)
        # mask is 0/1 per row, so stats of (f * mask) == mask * stats(f).
        mu1 = mask1 * mu1r
        mu2 = mask2 * mu2r
        sd1 = jnp.sqrt(mask1 * var1r + eps)
        sd2 = jnp.sqrt(mask2 * var2r + eps)
        c1e = c1[None, :, None]
        c2e = c2[None, :, None]
        bmu1 = mu1 * c1e + mu2[:, g12, :] * (1.0 - c1e)
        bsd1 = sd1 * c1e + sd2[:, g12, :] * (1.0 - c1e)
        bmu2 = mu2 * c2e + mu1[:, g21, :] * (1.0 - c2e)
        bsd2 = sd2 * c2e + sd1[:, g21, :] * (1.0 - c2e)
        r1 = bsd1 / sd1
        r2 = bsd2 / sd2
        return (mask1 * r1, bmu1 - mu1 * r1,
                mask2 * r2, bmu2 - mu2 * r2)              # all (B, N, 1) f32

    def mask_params(_):
        z = jnp.zeros((bsz, n, 1), jnp.float32)
        return (jnp.broadcast_to(mask1, (bsz, n, 1)), z,
                jnp.broadcast_to(mask2, (bsz, n, 1)), z)

    if always_entangle:
        a1, b1, a2, b2 = entangle_params(None)
    elif never_entangle:
        a1, b1, a2, b2 = mask_params(None)
    else:
        # stats kernel is skipped entirely when the gate is off (branch not taken)
        a1, b1, a2, b2 = lax.cond(gate, entangle_params, mask_params, None)

    return affine(f1, a1, b1, f2, a2, b2, tile_n, vmem_limit)


# ---------------------------------------------------------------------------
# Pure-JAX reference (mirrors the PyTorch forward) for verification
# ---------------------------------------------------------------------------
def mccsdg_forward_reference(f1, f2, r, *, p_aug, eps, enabled=True):
    f1m = f1 * r["mask1"].astype(f1.dtype)[None, :, None]
    f2m = f2 * r["mask2"].astype(f2.dtype)[None, :, None]
    if (not enabled) or (float(r["u"]) > p_aug):
        return f1m, f2m

    def stats(f):
        mu = jnp.mean(f, axis=2, keepdims=True)
        var = jnp.var(f, axis=2, keepdims=True, ddof=1)
        return mu, jnp.sqrt(var + eps)

    mu1, sd1 = stats(f1m)
    mu2, sd2 = stats(f2m)
    n1, n2 = f1.shape[1], f2.shape[1]
    c1 = r["c1"].astype(jnp.float32)[None, :, None]
    c2 = r["c2"].astype(jnp.float32)[None, :, None]
    f1n = (f1m - mu1) / sd1
    f2n = (f2m - mu2) / sd2
    bmu1 = mu1 * c1 + mu2[:, r["idx2"] % n1, :] * (1 - c1)
    bsd1 = sd1 * c1 + sd2[:, r["idx2"] % n1, :] * (1 - c1)
    bmu2 = mu2 * c2 + mu1[:, r["idx1"] % n2, :] * (1 - c2)
    bsd2 = sd2 * c2 + sd1[:, r["idx1"] % n2, :] * (1 - c2)
    return f1n * bsd1 + bmu1, f2n * bsd2 + bmu2


if __name__ == "__main__":
    p_mask, alpha, eps = 0.5, 0.1, 1e-6
    root = jax.random.PRNGKey(0)

    def run_case(name, bsz, n, d, p_aug, allow_fused, salt):
        kf1, kf2, kr = jax.random.split(jax.random.fold_in(root, salt), 3)
        f1 = jax.random.normal(kf1, (bsz, n, d), jnp.float32)
        f2 = jax.random.normal(kf2, (bsz, n, d), jnp.float32) * 2.0 + 0.5
        randoms = draw_randoms(kr, n, n, p_mask, alpha)
        fwd = jax.jit(functools.partial(
            mccsdg_forward_pallas, p_aug=p_aug, eps=eps,
            training=True, enabled=True, allow_fused=allow_fused))
        o1, o2 = fwd(f1, f2, randoms)
        jax.block_until_ready((o1, o2))
        r1, r2 = mccsdg_forward_reference(f1, f2, randoms, p_aug=p_aug, eps=eps)
        assert o1.shape == f1.shape and o2.shape == f2.shape, name
        assert jnp.allclose(o1, r1, atol=1e-4, rtol=1e-4), name
        assert jnp.allclose(o2, r2, atol=1e-4, rtol=1e-4), name

    # 1) small shape -> fused single-dispatch path (entanglement statically on)
    run_case("fused", bsz=1, n=128, d=256, p_aug=1.0, allow_fused=True, salt=0)
    # 2) two-pass path: ragged N tiles (cdiv grid, 2 "parallel" steps), batch > 1
    run_case("two_pass", bsz=2, n=200, d=128, p_aug=1.0, allow_fused=False, salt=1)
    # 3) masking-only gate taken on device (p_aug = 0 -> entanglement skipped)
    run_case("mask_only", bsz=1, n=128, d=256, p_aug=0.0, allow_fused=True, salt=2)

    print("KERNEL_OK")
</pallas_src>

<mosaic_0001>
module attributes {stable_mosaic.version = 11 : i64} {
  func.func @_fused_entangle_kernel(%arg0: i32, %arg1: memref<1x128x256xf32, #tpu.memory_space<vmem>>, %arg2: memref<1x128x256xf32, #tpu.memory_space<vmem>>, %arg3: memref<1x128x1xf32, #tpu.memory_space<vmem>>, %arg4: memref<1x128x1xf32, #tpu.memory_space<vmem>>, %arg5: memref<128x1xf32, #tpu.memory_space<vmem>>, %arg6: memref<128x1xf32, #tpu.memory_space<vmem>>, %arg7: memref<128x1xi32, #tpu.memory_space<vmem>>, %arg8: memref<128x1xi32, #tpu.memory_space<vmem>>, %arg9: memref<1x128x256xf32, #tpu.memory_space<vmem>>, %arg10: memref<1x128x256xf32, #tpu.memory_space<vmem>>) attributes {dimension_semantics = [#tpu.dimension_semantics<arbitrary>], iteration_bounds = array<i64: 1>, scalar_prefetch = 0 : i64, scratch_operands = 0 : i64, tpu.core_type = #tpu.core_type<tc>, window_params = [{pipeline_mode = #tpu.pipeline_mode<synchronous>, transform_indices = @transform_0, window_bounds = array<i64: 1, 128, 256>}, {pipeline_mode = #tpu.pipeline_mode<synchronous>, transform_indices = @transform_1, window_bounds = array<i64: 1, 128, 256>}, {pipeline_mode = #tpu.pipeline_mode<synchronous>, transform_indices = @transform_2, window_bounds = array<i64: 1, 128, 1>}, {pipeline_mode = #tpu.pipeline_mode<synchronous>, transform_indices = @transform_3, window_bounds = array<i64: 1, 128, 1>}, {pipeline_mode = #tpu.pipeline_mode<synchronous>, transform_indices = @transform_4, window_bounds = array<i64: 128, 1>}, {pipeline_mode = #tpu.pipeline_mode<synchronous>, transform_indices = @transform_5, window_bounds = array<i64: 128, 1>}, {pipeline_mode = #tpu.pipeline_mode<synchronous>, transform_indices = @transform_6, window_bounds = array<i64: 128, 1>}, {pipeline_mode = #tpu.pipeline_mode<synchronous>, transform_indices = @transform_7, window_bounds = array<i64: 128, 1>}, {pipeline_mode = #tpu.pipeline_mode<synchronous>, transform_indices = @transform_8, window_bounds = array<i64: 1, 128, 256>}, {pipeline_mode = #tpu.pipeline_mode<synchronous>, transform_indices = @transform_9, window_bounds = array<i64: 1, 128, 256>}]} {
    %c0 = arith.constant 0 : index
    %c0_0 = arith.constant 0 : index
    %c0_1 = arith.constant 0 : index
    %0 = vector.load %arg1[%c0, %c0_0, %c0_1] : memref<1x128x256xf32, #tpu.memory_space<vmem>>, vector<1x128x256xf32>
    %c0_2 = arith.constant 0 : index
    %c0_3 = arith.constant 0 : index
    %c0_4 = arith.constant 0 : index
    %1 = vector.load %arg3[%c0_2, %c0_3, %c0_4] : memref<1x128x1xf32, #tpu.memory_space<vmem>>, vector<1x128x1xf32>
    %2 = vector.broadcast %1 : vector<1x128x1xf32> to vector<1x128x256xf32>
    %3 = arith.mulf %0, %2 : vector<1x128x256xf32>
    %c0_5 = arith.constant 0 : index
    %c0_6 = arith.constant 0 : index
    %c0_7 = arith.constant 0 : index
    %4 = vector.load %arg2[%c0_5, %c0_6, %c0_7] : memref<1x128x256xf32, #tpu.memory_space<vmem>>, vector<1x128x256xf32>
    %c0_8 = arith.constant 0 : index
    %c0_9 = arith.constant 0 : index
    %c0_10 = arith.constant 0 : index
    %5 = vector.load %arg4[%c0_8, %c0_9, %c0_10] : memref<1x128x1xf32, #tpu.memory_space<vmem>>, vector<1x128x1xf32>
    %6 = vector.broadcast %5 : vector<1x128x1xf32> to vector<1x128x256xf32>
    %7 = arith.mulf %4, %6 : vector<1x128x256xf32>
    %cst = arith.constant dense<0.000000e+00> : vector<1x128xf32>
    %8 = vector.multi_reduction <add>, %3, %cst [2] : vector<1x128x256xf32> to vector<1x128xf32>
    %9 = vector.shape_cast %8 : vector<1x128xf32> to vector<1x128x1xf32>
    %cst_11 = arith.constant 3.906250e-03 : f32
    %10 = vector.broadcast %cst_11 : f32 to vector<1x128x1xf32>
    %11 = arith.mulf %9, %10 : vector<1x128x1xf32>
    %12 = vector.broadcast %11 : vector<1x128x1xf32> to vector<1x128x256xf32>
    %13 = arith.subf %3, %12 : vector<1x128x256xf32>
    %14 = arith.mulf %13, %13 : vector<1x128x256xf32>
    %cst_12 = arith.constant dense<0.000000e+00> : vector<1x128xf32>
    %15 = vector.multi_reduction <add>, %14, %cst_12 [2] : vector<1x128x256xf32> to vector<1x128xf32>
    %16 = vector.shape_cast %15 : vector<1x128xf32> to vector<1x128x1xf32>
    %cst_13 = arith.constant 0.00392156886 : f32
    %17 = vector.broadcast %cst_13 : f32 to vector<1x128x1xf32>
    %18 = arith.mulf %16, %17 : vector<1x128x1xf32>
    %19 = vector.shape_cast %11 : vector<1x128x1xf32> to vector<128x1xf32>
    %cst_14 = arith.constant 9.99999997E-7 : f32
    %20 = vector.broadcast %cst_14 : f32 to vector<1x128x1xf32>
    %21 = arith.addf %18, %20 : vector<1x128x1xf32>
    %22 = math.sqrt %21 : vector<1x128x1xf32>
    %23 = vector.shape_cast %22 : vector<1x128x1xf32> to vector<128x1xf32>
    %cst_15 = arith.constant dense<0.000000e+00> : vector<1x128xf32>
    %24 = vector.multi_reduction <add>, %7, %cst_15 [2] : vector<1x128x256xf32> to vector<1x128xf32>
    %25 = vector.shape_cast %24 : vector<1x128xf32> to vector<1x128x1xf32>
    %cst_16 = arith.constant 3.906250e-03 : f32
    %26 = vector.broadcast %cst_16 : f32 to vector<1x128x1xf32>
    %27 = arith.mulf %25, %26 : vector<1x128x1xf32>
    %28 = vector.broadcast %27 : vector<1x128x1xf32> to vector<1x128x256xf32>
    %29 = arith.subf %7, %28 : vector<1x128x256xf32>
    %30 = arith.mulf %29, %29 : vector<1x128x256xf32>
    %cst_17 = arith.constant dense<0.000000e+00> : vector<1x128xf32>
    %31 = vector.multi_reduction <add>, %30, %cst_17 [2] : vector<1x128x256xf32> to vector<1x128xf32>
    %32 = vector.shape_cast %31 : vector<1x128xf32> to vector<1x128x1xf32>
    %cst_18 = arith.constant 0.00392156886 : f32
    %33 = vector.broadcast %cst_18 : f32 to vector<1x128x1xf32>
    %34 = arith.mulf %32, %33 : vector<1x128x1xf32>
    %35 = vector.shape_cast %27 : vector<1x128x1xf32> to vector<128x1xf32>
    %cst_19 = arith.constant 9.99999997E-7 : f32
    %36 = vector.broadcast %cst_19 : f32 to vector<1x128x1xf32>
    %37 = arith.addf %34, %36 : vector<1x128x1xf32>
    %38 = math.sqrt %37 : vector<1x128x1xf32>
    %39 = vector.shape_cast %38 : vector<1x128x1xf32> to vector<128x1xf32>
    %40 = tpu.iota {dimensions = array<i32: 1>} : vector<128x128xi32>
    %c0_20 = arith.constant 0 : index
    %c0_21 = arith.constant 0 : index
    %41 = vector.load %arg7[%c0_20, %c0_21] : memref<128x1xi32, #tpu.memory_space<vmem>>, vector<128x1xi32>
    %42 = vector.broadcast %41 : vector<128x1xi32> to vector<128x128xi32>
    %43 = arith.cmpi eq, %40, %42 : vector<128x128xi32>
    %cst_22 = arith.constant 1.000000e+00 : f32
    %cst_23 = arith.constant 0.000000e+00 : f32
    %44 = vector.broadcast %cst_22 : f32 to vector<128x128xf32>
    %45 = vector.broadcast %cst_23 : f32 to vector<128x128xf32>
    %46 = arith.select %43, %44, %45 : vector<128x128xi1>, vector<128x128xf32>
    %c0_24 = arith.constant 0 : index
    %c0_25 = arith.constant 0 : index
    %47 = vector.load %arg8[%c0_24, %c0_25] : memref<128x1xi32, #tpu.memory_space<vmem>>, vector<128x1xi32>
    %48 = vector.broadcast %47 : vector<128x1xi32> to vector<128x128xi32>
    %49 = arith.cmpi eq, %40, %48 : vector<128x128xi32>
    %cst_26 = arith.constant 1.000000e+00 : f32
    %cst_27 = arith.constant 0.000000e+00 : f32
    %50 = vector.broadcast %cst_26 : f32 to vector<128x128xf32>
    %51 = vector.broadcast %cst_27 : f32 to vector<128x128xf32>
    %52 = arith.select %49, %50, %51 : vector<128x128xi1>, vector<128x128xf32>
    %c0_28 = arith.constant 0 : index
    %c0_29 = arith.constant 0 : index
    %53 = vector.load %arg5[%c0_28, %c0_29] : memref<128x1xf32, #tpu.memory_space<vmem>>, vector<128x1xf32>
    %c0_30 = arith.constant 0 : index
    %c0_31 = arith.constant 0 : index
    %54 = vector.load %arg6[%c0_30, %c0_31] : memref<128x1xf32, #tpu.memory_space<vmem>>, vector<128x1xf32>
    %55 = arith.mulf %19, %53 : vector<128x1xf32>
    %cst_32 = arith.constant dense<0.000000e+00> : vector<128x1xf32>
    %56 = tpu.matmul %46, %35, %cst_32 {dimension_numbers = #tpu.dot_dimension_numbers<[1], [0], [0], [1], [0, 0, 1, 1], [], []>} : vector<128x128xf32>, vector<128x1xf32>, vector<128x1xf32> -> vector<128x1xf32>
    %cst_33 = arith.constant 1.000000e+00 : f32
    %57 = vector.broadcast %cst_33 : f32 to vector<128x1xf32>
    %58 = arith.subf %57, %53 : vector<128x1xf32>
    %59 = arith.mulf %56, %58 : vector<128x1xf32>
    %60 = arith.addf %55, %59 : vector<128x1xf32>
    %61 = arith.mulf %23, %53 : vector<128x1xf32>
    %cst_34 = arith.constant dense<0.000000e+00> : vector<128x1xf32>
    %62 = tpu.matmul %46, %39, %cst_34 {dimension_numbers = #tpu.dot_dimension_numbers<[1], [0], [0], [1], [0, 0, 1, 1], [], []>} : vector<128x128xf32>, vector<128x1xf32>, vector<128x1xf32> -> vector<128x1xf32>
    %cst_35 = arith.constant 1.000000e+00 : f32
    %63 = vector.broadcast %cst_35 : f32 to vector<128x1xf32>
    %64 = arith.subf %63, %53 : vector<128x1xf32>
    %65 = arith.mulf %62, %64 : vector<128x1xf32>
    %66 = arith.addf %61, %65 : vector<128x1xf32>
    %67 = arith.mulf %35, %54 : vector<128x1xf32>
    %cst_36 = arith.constant dense<0.000000e+00> : vector<128x1xf32>
    %68 = tpu.matmul %52, %19, %cst_36 {dimension_numbers = #tpu.dot_dimension_numbers<[1], [0], [0], [1], [0, 0, 1, 1], [], []>} : vector<128x128xf32>, vector<128x1xf32>, vector<128x1xf32> -> vector<128x1xf32>
    %cst_37 = arith.constant 1.000000e+00 : f32
    %69 = vector.broadcast %cst_37 : f32 to vector<128x1xf32>
    %70 = arith.subf %69, %54 : vector<128x1xf32>
    %71 = arith.mulf %68, %70 : vector<128x1xf32>
    %72 = arith.addf %67, %71 : vector<128x1xf32>
    %73 = arith.mulf %39, %54 : vector<128x1xf32>
    %cst_38 = arith.constant dense<0.000000e+00> : vector<128x1xf32>
    %74 = tpu.matmul %52, %23, %cst_38 {dimension_numbers = #tpu.dot_dimension_numbers<[1], [0], [0], [1], [0, 0, 1, 1], [], []>} : vector<128x128xf32>, vector<128x1xf32>, vector<128x1xf32> -> vector<128x1xf32>
    %cst_39 = arith.constant 1.000000e+00 : f32
    %75 = vector.broadcast %cst_39 : f32 to vector<128x1xf32>
    %76 = arith.subf %75, %54 : vector<128x1xf32>
    %77 = arith.mulf %74, %76 : vector<128x1xf32>
    %78 = arith.addf %73, %77 : vector<128x1xf32>
    %79 = arith.divf %66, %23 : vector<128x1xf32>
    %80 = arith.divf %78, %39 : vector<128x1xf32>
    %81 = vector.shape_cast %79 : vector<128x1xf32> to vector<1x128x1xf32>
    %82 = arith.mulf %19, %79 : vector<128x1xf32>
    %83 = arith.subf %60, %82 : vector<128x1xf32>
    %84 = vector.shape_cast %83 : vector<128x1xf32> to vector<1x128x1xf32>
    %85 = vector.shape_cast %80 : vector<128x1xf32> to vector<1x128x1xf32>
    %86 = arith.mulf %35, %80 : vector<128x1xf32>
    %87 = arith.subf %72, %86 : vector<128x1xf32>
    %88 = vector.shape_cast %87 : vector<128x1xf32> to vector<1x128x1xf32>
    %89 = vector.broadcast %81 : vector<1x128x1xf32> to vector<1x128x256xf32>
    %90 = arith.mulf %3, %89 : vector<1x128x256xf32>
    %91 = vector.broadcast %84 : vector<1x128x1xf32> to vector<1x128x256xf32>
    %92 = arith.addf %90, %91 : vector<1x128x256xf32>
    %c0_40 = arith.constant 0 : index
    %c0_41 = arith.constant 0 : index
    %c0_42 = arith.constant 0 : index
    %93 = vector.load %arg9[%c0_40, %c0_41, %c0_42] : memref<1x128x256xf32, #tpu.memory_space<vmem>>, vector<1x128x256xf32>
    tpu.vector_store %arg9[%c0_40, %c0_41, %c0_42], %92 {strides = array<i32>} : memref<1x128x256xf32, #tpu.memory_space<vmem>>, vector<1x128x256xf32>,
    %94 = vector.broadcast %85 : vector<1x128x1xf32> to vector<1x128x256xf32>
    %95 = arith.mulf %7, %94 : vector<1x128x256xf32>
    %96 = vector.broadcast %88 : vector<1x128x1xf32> to vector<1x128x256xf32>
    %97 = arith.addf %95, %96 : vector<1x128x256xf32>
    %c0_43 = arith.constant 0 : index
    %c0_44 = arith.constant 0 : index
    %c0_45 = arith.constant 0 : index
    %98 = vector.load %arg10[%c0_43, %c0_44, %c0_45] : memref<1x128x256xf32, #tpu.memory_space<vmem>>, vector<1x128x256xf32>
    tpu.vector_store %arg10[%c0_43, %c0_44, %c0_45], %97 {strides = array<i32>} : memref<1x128x256xf32, #tpu.memory_space<vmem>>, vector<1x128x256xf32>,
    return
  }
  func.func @transform_0(%arg0: i32) -> (i32, i32, i32) {
    %c0_i32 = arith.constant 0 : i32
    %c0_i32_0 = arith.constant 0 : i32
    %c0_i32_1 = arith.constant 0 : i32
    %c0_i32_2 = arith.constant 0 : i32
    return %c0_i32, %c0_i32_0, %c0_i32_1 : i32, i32, i32
  }
  func.func @transform_1(%arg0: i32) -> (i32, i32, i32) {
    %c0_i32 = arith.constant 0 : i32
    %c0_i32_0 = arith.constant 0 : i32
    %c0_i32_1 = arith.constant 0 : i32
    %c0_i32_2 = arith.constant 0 : i32
    return %c0_i32, %c0_i32_0, %c0_i32_1 : i32, i32, i32
  }
  func.func @transform_2(%arg0: i32) -> (i32, i32, i32) {
    %c0_i32 = arith.constant 0 : i32
    %c0_i32_0 = arith.constant 0 : i32
    %c0_i32_1 = arith.constant 0 : i32
    %c0_i32_2 = arith.constant 0 : i32
    return %c0_i32, %c0_i32_0, %c0_i32_1 : i32, i32, i32
  }
  func.func @transform_3(%arg0: i32) -> (i32, i32, i32) {
    %c0_i32 = arith.constant 0 : i32
    %c0_i32_0 = arith.constant 0 : i32
    %c0_i32_1 = arith.constant 0 : i32
    %c0_i32_2 = arith.constant 0 : i32
    return %c0_i32, %c0_i32_0, %c0_i32_1 : i32, i32, i32
  }
  func.func @transform_4(%arg0: i32) -> (i32, i32) {
    %c0_i32 = arith.constant 0 : i32
    %c0_i32_0 = arith.constant 0 : i32
    %c0_i32_1 = arith.constant 0 : i32
    return %c0_i32, %c0_i32_0 : i32, i32
  }
  func.func @transform_5(%arg0: i32) -> (i32, i32) {
    %c0_i32 = arith.constant 0 : i32
    %c0_i32_0 = arith.constant 0 : i32
    %c0_i32_1 = arith.constant 0 : i32
    return %c0_i32, %c0_i32_0 : i32, i32
  }
  func.func @transform_6(%arg0: i32) -> (i32, i32) {
    %c0_i32 = arith.constant 0 : i32
    %c0_i32_0 = arith.constant 0 : i32
    %c0_i32_1 = arith.constant 0 : i32
    return %c0_i32, %c0_i32_0 : i32, i32
  }
  func.func @transform_7(%arg0: i32) -> (i32, i32) {
    %c0_i32 = arith.constant 0 : i32
    %c0_i32_0 = arith.constant 0 : i32
    %c0_i32_1 = arith.constant 0 : i32
    return %c0_i32, %c0_i32_0 : i32, i32
  }
  func.func @transform_8(%arg0: i32) -> (i32, i32, i32) {
    %c0_i32 = arith.constant 0 : i32
    %c0_i32_0 = arith.constant 0 : i32
    %c0_i32_1 = arith.constant 0 : i32
    %c0_i32_2 = arith.constant 0 : i32
    return %c0_i32, %c0_i32_0, %c0_i32_1 : i32, i32, i32
  }
  func.func @transform_9(%arg0: i32) -> (i32, i32, i32) {
    %c0_i32 = arith.constant 0 : i32
    %c0_i32_0 = arith.constant 0 : i32
    %c0_i32_1 = arith.constant 0 : i32
    %c0_i32_2 = arith.constant 0 : i32
    return %c0_i32, %c0_i32_0, %c0_i32_1 : i32, i32, i32
  }
}

</mosaic_0001>

<llo_original>
// kernel: mccsdg_forward_pallas.1
$region0: #{mccsdg_forward_pallas.1}
  #allocation0 [shape = 'u32[]', space=smem, size = 0x4, offset = 0x4, fixed_abs, tag = 'smem constant byte address 0x4 - core index']
  #allocation1 [shape = 'u32[72,128]{1,0:T(1,128)}', space=vmem, size = 0x9000, scoped, tag = 'internal scratch']
  %s0 = inlined_call_operand.vmem [shape: f32[1,128,256], index: 0, kind: input, shape index: {}]
  %s1 = inlined_call_operand.vmem [shape: f32[1,128,256], index: 1, kind: input, shape index: {}]
  %s2 = inlined_call_operand.vmem [shape: f32[1,128,1], index: 2, kind: input, shape index: {}]
  %s3 = inlined_call_operand.vmem [shape: f32[1,128,1], index: 3, kind: input, shape index: {}]
  %s4 = inlined_call_operand.vmem [shape: f32[128,1], index: 4, kind: input, shape index: {}]
  %s5 = inlined_call_operand.vmem [shape: f32[128,1], index: 5, kind: input, shape index: {}]
  %s6 = inlined_call_operand.vmem [shape: s32[128,1], index: 6, kind: input, shape index: {}]
  %s7 = inlined_call_operand.vmem [shape: s32[128,1], index: 7, kind: input, shape index: {}]
  %s8 = inlined_call_operand.hbm [shape: f32[1,128,256], index: 8, kind: output, shape index: {0}]
  %s9 = inlined_call_operand.hbm [shape: f32[1,128,256], index: 9, kind: output, shape index: {1}]
  %10 = xla_tuple %s8, %s9
  %s11 = sld [smem:[#allocation0]]
  $region50: #{mccsdg_forward_pallas.1} parent=0
    _
  %s13 = ssub.s32 1, %s11
  %s14 = scalar_select 0, %s13, %s11
  $region1: #{mccsdg_forward_pallas.1} parent=0
    #allocation2 [shape = 'u8[131072]{0}', space=vmem, size = 0x20000, scoped, tag = 'output window, operand 0, single buffered']
    #allocation3 [shape = 's32[1]{0}', space=sflag, size = 0x4, scoped, tag = 'scoped memory for mccsdg_forward_pallas.1']
    #allocation4 [shape = 'u8[131072]{0}', space=vmem, size = 0x20000, scoped, tag = 'output window, operand 1, single buffered']
    #allocation5 [shape = 's32[1]{0}', space=sflag, size = 0x4, scoped, tag = 'scoped memory for mccsdg_forward_pallas.1']
    %15 = vsyncpa [#allocation3], 0
    %16 = vsyncpa [#allocation5], 0
    // Predicated region
    $region2: #{mccsdg_forward_pallas.1} parent=1 // pred_check
      _
    $region3: #{mccsdg_forward_pallas.1} parent=1 // pred_check_branch
      %18 = sbr.rel (0) target = $region5
    $region4: #{mccsdg_forward_pallas.1} parent=1 // pred_region
      _
    $region5: #{mccsdg_forward_pallas.1} parent=1 // pred_fallthru
      _
    // Predicated region
    $region6: #{mccsdg_forward_pallas.1} parent=1 // pred_check
      _
    $region7: #{mccsdg_forward_pallas.1} parent=1 // pred_check_branch
      %20 = sbr.rel (0) target = $region9
    $region8: #{mccsdg_forward_pallas.1} parent=1 // pred_region
      _
    $region9: #{mccsdg_forward_pallas.1} parent=1 // pred_fallthru
      _
    // Predicated region
    $region10: #{mccsdg_forward_pallas.1} parent=1 // pred_check
      _
    $region11: #{mccsdg_forward_pallas.1} parent=1 // pred_check_branch
      %22 = sbr.rel (0) target = $region13
    $region12: #{mccsdg_forward_pallas.1} parent=1 // pred_region
      _
    $region13: #{mccsdg_forward_pallas.1} parent=1 // pred_fallthru
      _
    // Predicated region
    $region14: #{mccsdg_forward_pallas.1} parent=1 // pred_check
      _
    $region15: #{mccsdg_forward_pallas.1} parent=1 // pred_check_branch
      %24 = sbr.rel (0) target = $region17
    $region16: #{mccsdg_forward_pallas.1} parent=1 // pred_region
      _
    $region17: #{mccsdg_forward_pallas.1} parent=1 // pred_fallthru
      _
    // Predicated region
    $region18: #{mccsdg_forward_pallas.1} parent=1 // pred_check
      _
    $region19: #{mccsdg_forward_pallas.1} parent=1 // pred_check_branch
      %26 = sbr.rel (0) target = $region21
    $region20: #{mccsdg_forward_pallas.1} parent=1 // pred_region
      _
    $region21: #{mccsdg_forward_pallas.1} parent=1 // pred_fallthru
      _
    // Predicated region
    $region22: #{mccsdg_forward_pallas.1} parent=1 // pred_check
      _
    $region23: #{mccsdg_forward_pallas.1} parent=1 // pred_check_branch
      %28 = sbr.rel (0) target = $region25
    $region24: #{mccsdg_forward_pallas.1} parent=1 // pred_region
      _
    $region25: #{mccsdg_forward_pallas.1} parent=1 // pred_fallthru
      _
    // Predicated region
    $region26: #{mccsdg_forward_pallas.1} parent=1 // pred_check
      _
    $region27: #{mccsdg_forward_pallas.1} parent=1 // pred_check_branch
      %30 = sbr.rel (0) target = $region29
    $region28: #{mccsdg_forward_pallas.1} parent=1 // pred_region
      _
    $region29: #{mccsdg_forward_pallas.1} parent=1 // pred_fallthru
      _
    // Predicated region
    $region30: #{mccsdg_forward_pallas.1} parent=1 // pred_check
      _
    $region31: #{mccsdg_forward_pallas.1} parent=1 // pred_check_branch
      %32 = sbr.rel (0) target = $region33
    $region32: #{mccsdg_forward_pallas.1} parent=1 // pred_region
      _
    $region33: #{mccsdg_forward_pallas.1} parent=1 // pred_fallthru
      _
    %v33 = vld [vmem:[%s0] sm:$0xff]
    %v34 = vld [vmem:[%s0 + $0x8] sm:$0xff]
    %v35 = vld [vmem:[%s0 + $0x10] sm:$0xff]
    %v36 = vld [vmem:[%s0 + $0x18] sm:$0xff]
    %v37 = vld [vmem:[%s0 + $0x20] sm:$0xff]
    %v38 = vld [vmem:[%s0 + $0x28] sm:$0xff]
    %v39 = vld [vmem:[%s0 + $0x30] sm:$0xff]
    %v40 = vld [vmem:[%s0 + $0x38] sm:$0xff]
    %v41 = vld [vmem:[%s0 + $0x40] sm:$0xff]
    %v42 = vld [vmem:[%s0 + $0x48] sm:$0xff]
    %v43 = vld [vmem:[%s0 + $0x50] sm:$0xff]
    %v44 = vld [vmem:[%s0 + $0x58] sm:$0xff]
    %v45 = vld [vmem:[%s0 + $0x60] sm:$0xff]
    %v46 = vld [vmem:[%s0 + $0x68] sm:$0xff]
    %v47 = vld [vmem:[%s0 + $0x70] sm:$0xff]
    %v48 = vld [vmem:[%s0 + $0x78] sm:$0xff]
    %v49 = vld [vmem:[%s0 + $0x80] sm:$0xff]
    %v50 = vld [vmem:[%s0 + $0x88] sm:$0xff]
    %v51 = vld [vmem:[%s0 + $0x90] sm:$0xff]
    %v52 = vld [vmem:[%s0 + $0x98] sm:$0xff]
    %v53 = vld [vmem:[%s0 + $0xa0] sm:$0xff]
    %v54 = vld [vmem:[%s0 + $0xa8] sm:$0xff]
    %v55 = vld [vmem:[%s0 + $0xb0] sm:$0xff]
    %v56 = vld [vmem:[%s0 + $0xb8] sm:$0xff]
    %v57 = vld [vmem:[%s0 + $0xc0] sm:$0xff]
    %v58 = vld [vmem:[%s0 + $0xc8] sm:$0xff]
    %v59 = vld [vmem:[%s0 + $0xd0] sm:$0xff]
    %v60 = vld [vmem:[%s0 + $0xd8] sm:$0xff]
    %v61 = vld [vmem:[%s0 + $0xe0] sm:$0xff]
    %v62 = vld [vmem:[%s0 + $0xe8] sm:$0xff]
    %v63 = vld [vmem:[%s0 + $0xf0] sm:$0xff]
    %v64 = vld [vmem:[%s0 + $0xf8] sm:$0xff]
    %v65 = vld [vmem:[%s2] sm:$0xff]
    %v66 = vld [vmem:[%s2 + $0x8] sm:$0xff]
    %v67 = vld [vmem:[%s2 + $0x10] sm:$0xff]
    %v68 = vld [vmem:[%s2 + $0x18] sm:$0xff]
    %v69 = vld [vmem:[%s2 + $0x20] sm:$0xff]
    %v70 = vld [vmem:[%s2 + $0x28] sm:$0xff]
    %v71 = vld [vmem:[%s2 + $0x30] sm:$0xff]
    %v72 = vld [vmem:[%s2 + $0x38] sm:$0xff]
    %v73 = vld [vmem:[%s2 + $0x40] sm:$0xff]
    %v74 = vld [vmem:[%s2 + $0x48] sm:$0xff]
    %v75 = vld [vmem:[%s2 + $0x50] sm:$0xff]
    %v76 = vld [vmem:[%s2 + $0x58] sm:$0xff]
    %v77 = vld [vmem:[%s2 + $0x60] sm:$0xff]
    %v78 = vld [vmem:[%s2 + $0x68] sm:$0xff]
    %v79 = vld [vmem:[%s2 + $0x70] sm:$0xff]
    %v80 = vld [vmem:[%s2 + $0x78] sm:$0xff]
    %82 = vset.pattern.permute.xlu0 0
    %83 = vperm.xlu0 %82, %v65
    %v84 = vpop.permute.xlu0 %83
    %87 = vset.pattern.permute.xlu0 0
    %88 = vperm.xlu0 %87, %v66
    %v89 = vpop.permute.xlu0 %88
    %92 = vset.pattern.permute.xlu0 0
    %93 = vperm.xlu0 %92, %v67
    %v94 = vpop.permute.xlu0 %93
    %97 = vset.pattern.permute.xlu0 0
    %98 = vperm.xlu0 %97, %v68
    %v99 = vpop.permute.xlu0 %98
    %102 = vset.pattern.permute.xlu0 0
    %103 = vperm.xlu0 %102, %v69
    %v104 = vpop.permute.xlu0 %103
    %107 = vset.pattern.permute.xlu0 0
    %108 = vperm.xlu0 %107, %v70
    %v109 = vpop.permute.xlu0 %108
    %112 = vset.pattern.permute.xlu0 0
    %113 = vperm.xlu0 %112, %v71
    %v114 = vpop.permute.xlu0 %113
    %117 = vset.pattern.permute.xlu0 0
    %118 = vperm.xlu0 %117, %v72
    %v119 = vpop.permute.xlu0 %118
    %122 = vset.pattern.permute.xlu0 0
    %123 = vperm.xlu0 %122, %v73
    %v124 = vpop.permute.xlu0 %123
    %127 = vset.pattern.permute.xlu0 0
    %128 = vperm.xlu0 %127, %v74
    %v129 = vpop.permute.xlu0 %128
    %132 = vset.pattern.permute.xlu0 0
    %133 = vperm.xlu0 %132, %v75
    %v134 = vpop.permute.xlu0 %133
    %137 = vset.pattern.permute.xlu0 0
    %138 = vperm.xlu0 %137, %v76
    %v139 = vpop.permute.xlu0 %138
    %142 = vset.pattern.permute.xlu0 0
    %143 = vperm.xlu0 %142, %v77
    %v144 = vpop.permute.xlu0 %143
    %147 = vset.pattern.permute.xlu0 0
    %148 = vperm.xlu0 %147, %v78
    %v149 = vpop.permute.xlu0 %148
    %152 = vset.pattern.permute.xlu0 0
    %153 = vperm.xlu0 %152, %v79
    %v154 = vpop.permute.xlu0 %153
    %157 = vset.pattern.permute.xlu0 0
    %158 = vperm.xlu0 %157, %v80
    %v159 = vpop.permute.xlu0 %158
    %v161 = vmul.f32 %v33, %v84
    %v162 = vmul.f32 %v34, %v84
    %v163 = vmul.f32 %v35, %v89
    %v164 = vmul.f32 %v36, %v89
    %v165 = vmul.f32 %v37, %v94
    %v166 = vmul.f32 %v38, %v94
    %v167 = vmul.f32 %v39, %v99
    %v168 = vmul.f32 %v40, %v99
    %v169 = vmul.f32 %v41, %v104
    %v170 = vmul.f32 %v42, %v104
    %v171 = vmul.f32 %v43, %v109
    %v172 = vmul.f32 %v44, %v109
    %v173 = vmul.f32 %v45, %v114
    %v174 = vmul.f32 %v46, %v114
    %v175 = vmul.f32 %v47, %v119
    %v176 = vmul.f32 %v48, %v119
    %v177 = vmul.f32 %v49, %v124
    %v178 = vmul.f32 %v50, %v124
    %v179 = vmul.f32 %v51, %v129
    %v180 = vmul.f32 %v52, %v129
    %v181 = vmul.f32 %v53, %v134
    %v182 = vmul.f32 %v54, %v134
    %v183 = vmul.f32 %v55, %v139
    %v184 = vmul.f32 %v56, %v139
    %v185 = vmul.f32 %v57, %v144
    %v186 = vmul.f32 %v58, %v144
    %v187 = vmul.f32 %v59, %v149
    %v188 = vmul.f32 %v60, %v149
    %v189 = vmul.f32 %v61, %v154
    %v190 = vmul.f32 %v62, %v154
    %v191 = vmul.f32 %v63, %v159
    %v192 = vmul.f32 %v64, %v159
    %v193 = vld [vmem:[%s1] sm:$0xff]
    %v194 = vld [vmem:[%s1 + $0x8] sm:$0xff]
    %v195 = vld [vmem:[%s1 + $0x10] sm:$0xff]
    %v196 = vld [vmem:[%s1 + $0x18] sm:$0xff]
    %v197 = vld [vmem:[%s1 + $0x20] sm:$0xff]
    %v198 = vld [vmem:[%s1 + $0x28] sm:$0xff]
    %v199 = vld [vmem:[%s1 + $0x30] sm:$0xff]
    %v200 = vld [vmem:[%s1 + $0x38] sm:$0xff]
    %v201 = vld [vmem:[%s1 + $0x40] sm:$0xff]
    %v202 = vld [vmem:[%s1 + $0x48] sm:$0xff]
    %v203 = vld [vmem:[%s1 + $0x50] sm:$0xff]
    %v204 = vld [vmem:[%s1 + $0x58] sm:$0xff]
    %v205 = vld [vmem:[%s1 + $0x60] sm:$0xff]
    %v206 = vld [vmem:[%s1 + $0x68] sm:$0xff]
    %v207 = vld [vmem:[%s1 + $0x70] sm:$0xff]
    %v208 = vld [vmem:[%s1 + $0x78] sm:$0xff]
    %v209 = vld [vmem:[%s1 + $0x80] sm:$0xff]
    %v210 = vld [vmem:[%s1 + $0x88] sm:$0xff]
    %v211 = vld [vmem:[%s1 + $0x90] sm:$0xff]
    %v212 = vld [vmem:[%s1 + $0x98] sm:$0xff]
    %v213 = vld [vmem:[%s1 + $0xa0] sm:$0xff]
    %v214 = vld [vmem:[%s1 + $0xa8] sm:$0xff]
    %v215 = vld [vmem:[%s1 + $0xb0] sm:$0xff]
    %v216 = vld [vmem:[%s1 + $0xb8] sm:$0xff]
    %v217 = vld [vmem:[%s1 + $0xc0] sm:$0xff]
    %v218 = vld [vmem:[%s1 + $0xc8] sm:$0xff]
    %v219 = vld [vmem:[%s1 + $0xd0] sm:$0xff]
    %v220 = vld [vmem:[%s1 + $0xd8] sm:$0xff]
    %v221 = vld [vmem:[%s1 + $0xe0] sm:$0xff]
    %v222 = vld [vmem:[%s1 + $0xe8] sm:$0xff]
    %v223 = vld [vmem:[%s1 + $0xf0] sm:$0xff]
    %v224 = vld [vmem:[%s1 + $0xf8] sm:$0xff]
    %v225 = vld [vmem:[%s3] sm:$0xff]
    %v226 = vld [vmem:[%s3 + $0x8] sm:$0xff]
    %v227 = vld [vmem:[%s3 + $0x10] sm:$0xff]
    %v228 = vld [vmem:[%s3 + $0x18] sm:$0xff]
    %v229 = vld [vmem:[%s3 + $0x20] sm:$0xff]
    %v230 = vld [vmem:[%s3 + $0x28] sm:$0xff]
    %v231 = vld [vmem:[%s3 + $0x30] sm:$0xff]
    %v232 = vld [vmem:[%s3 + $0x38] sm:$0xff]
    %v233 = vld [vmem:[%s3 + $0x40] sm:$0xff]
    %v234 = vld [vmem:[%s3 + $0x48] sm:$0xff]
    %v235 = vld [vmem:[%s3 + $0x50] sm:$0xff]
    %v236 = vld [vmem:[%s3 + $0x58] sm:$0xff]
    %v237 = vld [vmem:[%s3 + $0x60] sm:$0xff]
    %v238 = vld [vmem:[%s3 + $0x68] sm:$0xff]
    %v239 = vld [vmem:[%s3 + $0x70] sm:$0xff]
    %v240 = vld [vmem:[%s3 + $0x78] sm:$0xff]
    %242 = vset.pattern.permute.xlu0 0
    %243 = vperm.xlu0 %242, %v225
    %v244 = vpop.permute.xlu0 %243
    %247 = vset.pattern.permute.xlu0 0
    %248 = vperm.xlu0 %247, %v226
    %v249 = vpop.permute.xlu0 %248
    %252 = vset.pattern.permute.xlu0 0
    %253 = vperm.xlu0 %252, %v227
    %v254 = vpop.permute.xlu0 %253
    %257 = vset.pattern.permute.xlu0 0
    %258 = vperm.xlu0 %257, %v228
    %v259 = vpop.permute.xlu0 %258
    %262 = vset.pattern.permute.xlu0 0
    %263 = vperm.xlu0 %262, %v229
    %v264 = vpop.permute.xlu0 %263
    %267 = vset.pattern.permute.xlu0 0
    %268 = vperm.xlu0 %267, %v230
    %v269 = vpop.permute.xlu0 %268
    %272 = vset.pattern.permute.xlu0 0
    %273 = vperm.xlu0 %272, %v231
    %v274 = vpop.permute.xlu0 %273
    %277 = vset.pattern.permute.xlu0 0
    %278 = vperm.xlu0 %277, %v232
    %v279 = vpop.permute.xlu0 %278
    %282 = vset.pattern.permute.xlu0 0
    %283 = vperm.xlu0 %282, %v233
    %v284 = vpop.permute.xlu0 %283
    %287 = vset.pattern.permute.xlu0 0
    %288 = vperm.xlu0 %287, %v234
    %v289 = vpop.permute.xlu0 %288
    %292 = vset.pattern.permute.xlu0 0
    %293 = vperm.xlu0 %292, %v235
    %v294 = vpop.permute.xlu0 %293
    %297 = vset.pattern.permute.xlu0 0
    %298 = vperm.xlu0 %297, %v236
    %v299 = vpop.permute.xlu0 %298
    %302 = vset.pattern.permute.xlu0 0
    %303 = vperm.xlu0 %302, %v237
    %v304 = vpop.permute.xlu0 %303
    %307 = vset.pattern.permute.xlu0 0
    %308 = vperm.xlu0 %307, %v238
    %v309 = vpop.permute.xlu0 %308
    %312 = vset.pattern.permute.xlu0 0
    %313 = vperm.xlu0 %312, %v239
    %v314 = vpop.permute.xlu0 %313
    %317 = vset.pattern.permute.xlu0 0
    %318 = vperm.xlu0 %317, %v240
    %v319 = vpop.permute.xlu0 %318
    %v321 = vmul.f32 %v193, %v244
    %v322 = vmul.f32 %v194, %v244
    %v323 = vmul.f32 %v195, %v249
    %v324 = vmul.f32 %v196, %v249
    %v325 = vmul.f32 %v197, %v254
    %v326 = vmul.f32 %v198, %v254
    %v327 = vmul.f32 %v199, %v259
    %v328 = vmul.f32 %v200, %v259
    %v329 = vmul.f32 %v201, %v264
    %v330 = vmul.f32 %v202, %v264
    %v331 = vmul.f32 %v203, %v269
    %v332 = vmul.f32 %v204, %v269
    %v333 = vmul.f32 %v205, %v274
    %v334 = vmul.f32 %v206, %v274
    %v335 = vmul.f32 %v207, %v279
    %v336 = vmul.f32 %v208, %v279
    %v337 = vmul.f32 %v209, %v284
    %v338 = vmul.f32 %v210, %v284
    %v339 = vmul.f32 %v211, %v289
    %v340 = vmul.f32 %v212, %v289
    %v341 = vmul.f32 %v213, %v294
    %v342 = vmul.f32 %v214, %v294
    %v343 = vmul.f32 %v215, %v299
    %v344 = vmul.f32 %v216, %v299
    %v345 = vmul.f32 %v217, %v304
    %v346 = vmul.f32 %v218, %v304
    %v347 = vmul.f32 %v219, %v309
    %v348 = vmul.f32 %v220, %v309
    %v349 = vmul.f32 %v221, %v314
    %v350 = vmul.f32 %v222, %v314
    %v351 = vmul.f32 %v223, %v319
    %v352 = vmul.f32 %v224, %v319
    %v353 = vadd.f32 %v161, %v162
    %354 = vadd.xlane.f32.xlu0 %v353
    %v355 = vpop.xlane.xlu0 %354
    %v356 = vadd.f32 %v163, %v164
    %357 = vadd.xlane.f32.xlu0 %v356
    %v358 = vpop.xlane.xlu0 %357
    %v359 = vadd.f32 %v165, %v166
    %360 = vadd.xlane.f32.xlu0 %v359
    %v361 = vpop.xlane.xlu0 %360
    %v362 = vadd.f32 %v167, %v168
    %363 = vadd.xlane.f32.xlu0 %v362
    %v364 = vpop.xlane.xlu0 %363
    %v365 = vadd.f32 %v169, %v170
    %366 = vadd.xlane.f32.xlu0 %v365
    %v367 = vpop.xlane.xlu0 %366
    %v368 = vadd.f32 %v171, %v172
    %369 = vadd.xlane.f32.xlu0 %v368
    %v370 = vpop.xlane.xlu0 %369
    %v371 = vadd.f32 %v173, %v174
    %372 = vadd.xlane.f32.xlu0 %v371
    %v373 = vpop.xlane.xlu0 %372
    %v374 = vadd.f32 %v175, %v176
    %375 = vadd.xlane.f32.xlu0 %v374
    %v376 = vpop.xlane.xlu0 %375
    %v377 = vadd.f32 %v177, %v178
    %378 = vadd.xlane.f32.xlu0 %v377
    %v379 = vpop.xlane.xlu0 %378
    %v380 = vadd.f32 %v179, %v180
    %381 = vadd.xlane.f32.xlu0 %v380
    %v382 = vpop.xlane.xlu0 %381
    %v383 = vadd.f32 %v181, %v182
    %384 = vadd.xlane.f32.xlu0 %v383
    %v385 = vpop.xlane.xlu0 %384
    %v386 = vadd.f32 %v183, %v184
    %387 = vadd.xlane.f32.xlu0 %v386
    %v388 = vpop.xlane.xlu0 %387
    %v389 = vadd.f32 %v185, %v186
    %390 = vadd.xlane.f32.xlu0 %v389
    %v391 = vpop.xlane.xlu0 %390
    %v392 = vadd.f32 %v187, %v188
    %393 = vadd.xlane.f32.xlu0 %v392
    %v394 = vpop.xlane.xlu0 %393
    %v395 = vadd.f32 %v189, %v190
    %396 = vadd.xlane.f32.xlu0 %v395
    %v397 = vpop.xlane.xlu0 %396
    %v398 = vadd.f32 %v191, %v192
    %399 = vadd.xlane.f32.xlu0 %v398
    %v400 = vpop.xlane.xlu0 %399
    %v401 = vmul.f32 %v355, 0.00390625
    %v402 = vmul.f32 %v358, 0.00390625
    %v403 = vmul.f32 %v361, 0.00390625
    %v404 = vmul.f32 %v364, 0.00390625
    %v405 = vmul.f32 %v367, 0.00390625
    %v406 = vmul.f32 %v370, 0.00390625
    %v407 = vmul.f32 %v373, 0.00390625
    %v408 = vmul.f32 %v376, 0.00390625
    %v409 = vmul.f32 %v379, 0.00390625
    %v410 = vmul.f32 %v382, 0.00390625
    %v411 = vmul.f32 %v385, 0.00390625
    %v412 = vmul.f32 %v388, 0.00390625
    %v413 = vmul.f32 %v391, 0.00390625
    %v414 = vmul.f32 %v394, 0.00390625
    %v415 = vmul.f32 %v397, 0.00390625
    %v416 = vmul.f32 %v400, 0.00390625
    %v417 = vsub.f32 %v161, %v401
    %v418 = vsub.f32 %v162, %v401
    %v419 = vsub.f32 %v163, %v402
    %v420 = vsub.f32 %v164, %v402
    %v421 = vsub.f32 %v165, %v403
    %v422 = vsub.f32 %v166, %v403
    %v423 = vsub.f32 %v167, %v404
    %v424 = vsub.f32 %v168, %v404
    %v425 = vsub.f32 %v169, %v405
    %v426 = vsub.f32 %v170, %v405
    %v427 = vsub.f32 %v171, %v406
    %v428 = vsub.f32 %v172, %v406
    %v429 = vsub.f32 %v173, %v407
    %v430 = vsub.f32 %v174, %v407
    %v431 = vsub.f32 %v175, %v408
    %v432 = vsub.f32 %v176, %v408
    %v433 = vsub.f32 %v177, %v409
    %v434 = vsub.f32 %v178, %v409
    %v435 = vsub.f32 %v179, %v410
    %v436 = vsub.f32 %v180, %v410
    %v437 = vsub.f32 %v181, %v411
    %v438 = vsub.f32 %v182, %v411
    %v439 = vsub.f32 %v183, %v412
    %v440 = vsub.f32 %v184, %v412
    %v441 = vsub.f32 %v185, %v413
    %v442 = vsub.f32 %v186, %v413
    %v443 = vsub.f32 %v187, %v414
    %v444 = vsub.f32 %v188, %v414
    %v445 = vsub.f32 %v189, %v415
    %v446 = vsub.f32 %v190, %v415
    %v447 = vsub.f32 %v191, %v416
    %v448 = vsub.f32 %v192, %v416
    %v449 = vmul.f32 %v417, %v417
    %v450 = vmul.f32 %v418, %v418
    %v451 = vmul.f32 %v419, %v419
    %v452 = vmul.f32 %v420, %v420
    %v453 = vmul.f32 %v421, %v421
    %v454 = vmul.f32 %v422, %v422
    %v455 = vmul.f32 %v423, %v423
    %v456 = vmul.f32 %v424, %v424
    %v457 = vmul.f32 %v425, %v425
    %v458 = vmul.f32 %v426, %v426
    %v459 = vmul.f32 %v427, %v427
    %v460 = vmul.f32 %v428, %v428
    %v461 = vmul.f32 %v429, %v429
    %v462 = vmul.f32 %v430, %v430
    %v463 = vmul.f32 %v431, %v431
    %v464 = vmul.f32 %v432, %v432
    %v465 = vmul.f32 %v433, %v433
    %v466 = vmul.f32 %v434, %v434
    %v467 = vmul.f32 %v435, %v435
    %v468 = vmul.f32 %v436, %v436
    %v469 = vmul.f32 %v437, %v437
    %v470 = vmul.f32 %v438, %v438
    %v471 = vmul.f32 %v439, %v439
    %v472 = vmul.f32 %v440, %v440
    %v473 = vmul.f32 %v441, %v441
    %v474 = vmul.f32 %v442, %v442
    %v475 = vmul.f32 %v443, %v443
    %v476 = vmul.f32 %v444, %v444
    %v477 = vmul.f32 %v445, %v445
    %v478 = vmul.f32 %v446, %v446
    %v479 = vmul.f32 %v447, %v447
    %v480 = vmul.f32 %v448, %v448
    %v481 = vadd.f32 %v449, %v450
    %482 = vadd.xlane.f32.xlu0 %v481
    %v483 = vpop.xlane.xlu0 %482
    %v484 = vadd.f32 %v451, %v452
    %485 = vadd.xlane.f32.xlu0 %v484
    %v486 = vpop.xlane.xlu0 %485
    %v487 = vadd.f32 %v453, %v454
    %488 = vadd.xlane.f32.xlu0 %v487
    %v489 = vpop.xlane.xlu0 %488
    %v490 = vadd.f32 %v455, %v456
    %491 = vadd.xlane.f32.xlu0 %v490
    %v492 = vpop.xlane.xlu0 %491
    %v493 = vadd.f32 %v457, %v458
    %494 = vadd.xlane.f32.xlu0 %v493
    %v495 = vpop.xlane.xlu0 %494
    %v496 = vadd.f32 %v459, %v460
    %497 = vadd.xlane.f32.xlu0 %v496
    %v498 = vpop.xlane.xlu0 %497
    %v499 = vadd.f32 %v461, %v462
    %500 = vadd.xlane.f32.xlu0 %v499
    %v501 = vpop.xlane.xlu0 %500
    %v502 = vadd.f32 %v463, %v464
    %503 = vadd.xlane.f32.xlu0 %v502
    %v504 = vpop.xlane.xlu0 %503
    %v505 = vadd.f32 %v465, %v466
    %506 = vadd.xlane.f32.xlu0 %v505
    %v507 = vpop.xlane.xlu0 %506
    %v508 = vadd.f32 %v467, %v468
    %509 = vadd.xlane.f32.xlu0 %v508
    %v510 = vpop.xlane.xlu0 %509
    %v511 = vadd.f32 %v469, %v470
    %512 = vadd.xlane.f32.xlu0 %v511
    %v513 = vpop.xlane.xlu0 %512
    %v514 = vadd.f32 %v471, %v472
    %515 = vadd.xlane.f32.xlu0 %v514
    %v516 = vpop.xlane.xlu0 %515
    %v517 = vadd.f32 %v473, %v474
    %518 = vadd.xlane.f32.xlu0 %v517
    %v519 = vpop.xlane.xlu0 %518
    %v520 = vadd.f32 %v475, %v476
    %521 = vadd.xlane.f32.xlu0 %v520
    %v522 = vpop.xlane.xlu0 %521
    %v523 = vadd.f32 %v477, %v478
    %524 = vadd.xlane.f32.xlu0 %v523
    %v525 = vpop.xlane.xlu0 %524
    %v526 = vadd.f32 %v479, %v480
    %527 = vadd.xlane.f32.xlu0 %v526
    %v528 = vpop.xlane.xlu0 %527
    %v529 = vmul.f32 %v483, 0.003921569
    %v530 = vmul.f32 %v486, 0.003921569
    %v531 = vmul.f32 %v489, 0.003921569
    %v532 = vmul.f32 %v492, 0.003921569
    %v533 = vmul.f32 %v495, 0.003921569
    %v534 = vmul.f32 %v498, 0.003921569
    %v535 = vmul.f32 %v501, 0.003921569
    %v536 = vmul.f32 %v504, 0.003921569
    %v537 = vmul.f32 %v507, 0.003921569
    %v538 = vmul.f32 %v510, 0.003921569
    %v539 = vmul.f32 %v513, 0.003921569
    %v540 = vmul.f32 %v516, 0.003921569
    %v541 = vmul.f32 %v519, 0.003921569
    %v542 = vmul.f32 %v522, 0.003921569
    %v543 = vmul.f32 %v525, 0.003921569
    %v544 = vmul.f32 %v528, 0.003921569
    %v545 = vadd.f32 %v529, 1e-06
    %v546 = vadd.f32 %v530, 1e-06
    %v547 = vadd.f32 %v531, 1e-06
    %v548 = vadd.f32 %v532, 1e-06
    %v549 = vadd.f32 %v533, 1e-06
    %v550 = vadd.f32 %v534, 1e-06
    %v551 = vadd.f32 %v535, 1e-06
    %v552 = vadd.f32 %v536, 1e-06
    %v553 = vadd.f32 %v537, 1e-06
    %v554 = vadd.f32 %v538, 1e-06
    %v555 = vadd.f32 %v539, 1e-06
    %v556 = vadd.f32 %v540, 1e-06
    %v557 = vadd.f32 %v541, 1e-06
    %v558 = vadd.f32 %v542, 1e-06
    %v559 = vadd.f32 %v543, 1e-06
    %v560 = vadd.f32 %v544, 1e-06
    %v561 = vrsqrt.pop %v545
    %v562 = vmul.f32 %v561, %v545
    %v563 = vmul.f32 %v562, %v561
    %v564 = vmul.f32 0.5, %v563
    %v565 = vsub.f32 1.5, %v564
    %v566 = vmul.f32 %v561, %v565
    %v567 = vmul.f32 %v545, %v566
    %vm568 = vcmp.eq.f32.partialorder %v545, inf
    %v569 = vsel %vm568, %v545, %v567
    %vm570 = vcmp.eq.f32.partialorder %v545, 0.0
    %v571 = vand.u32 %v545, 2147483648
    %v572 = vsel %vm570, %v571, %v569
    %v573 = vrsqrt.pop %v546
    %v574 = vmul.f32 %v573, %v546
    %v575 = vmul.f32 %v574, %v573
    %v576 = vmul.f32 0.5, %v575
    %v577 = vsub.f32 1.5, %v576
    %v578 = vmul.f32 %v573, %v577
    %v579 = vmul.f32 %v546, %v578
    %vm580 = vcmp.eq.f32.partialorder %v546, inf
    %v581 = vsel %vm580, %v546, %v579
    %vm582 = vcmp.eq.f32.partialorder %v546, 0.0
    %v583 = vand.u32 %v546, 2147483648
    %v584 = vsel %vm582, %v583, %v581
    %v585 = vrsqrt.pop %v547
    %v586 = vmul.f32 %v585, %v547
    %v587 = vmul.f32 %v586, %v585
    %v588 = vmul.f32 0.5, %v587
    %v589 = vsub.f32 1.5, %v588
    %v590 = vmul.f32 %v585, %v589
    %v591 = vmul.f32 %v547, %v590
    %vm592 = vcmp.eq.f32.partialorder %v547, inf
    %v593 = vsel %vm592, %v547, %v591
    %vm594 = vcmp.eq.f32.partialorder %v547, 0.0
    %v595 = vand.u32 %v547, 2147483648
    %v596 = vsel %vm594, %v595, %v593
    %v597 = vrsqrt.pop %v548
    %v598 = vmul.f32 %v597, %v548
    %v599 = vmul.f32 %v598, %v597
    %v600 = vmul.f32 0.5, %v599
    %v601 = vsub.f32 1.5, %v600
    %v602 = vmul.f32 %v597, %v601
    %v603 = vmul.f32 %v548, %v602
    %vm604 = vcmp.eq.f32.partialorder %v548, inf
    %v605 = vsel %vm604, %v548, %v603
    %vm606 = vcmp.eq.f32.partialorder %v548, 0.0
    %v607 = vand.u32 %v548, 2147483648
    %v608 = vsel %vm606, %v607, %v605
    %v609 = vrsqrt.pop %v549
    %v610 = vmul.f32 %v609, %v549
    %v611 = vmul.f32 %v610, %v609
    %v612 = vmul.f32 0.5, %v611
    %v613 = vsub.f32 1.5, %v612
    %v614 = vmul.f32 %v609, %v613
    %v615 = vmul.f32 %v549, %v614
    %vm616 = vcmp.eq.f32.partialorder %v549, inf
    %v617 = vsel %vm616, %v549, %v615
    %vm618 = vcmp.eq.f32.partialorder %v549, 0.0
    %v619 = vand.u32 %v549, 2147483648
    %v620 = vsel %vm618, %v619, %v617
    %v621 = vrsqrt.pop %v550
    %v622 = vmul.f32 %v621, %v550
    %v623 = vmul.f32 %v622, %v621
    %v624 = vmul.f32 0.5, %v623
    %v625 = vsub.f32 1.5, %v624
    %v626 = vmul.f32 %v621, %v625
    %v627 = vmul.f32 %v550, %v626
    %vm628 = vcmp.eq.f32.partialorder %v550, inf
    %v629 = vsel %vm628, %v550, %v627
    %vm630 = vcmp.eq.f32.partialorder %v550, 0.0
    %v631 = vand.u32 %v550, 2147483648
    %v632 = vsel %vm630, %v631, %v629
    %v633 = vrsqrt.pop %v551
    %v634 = vmul.f32 %v633, %v551
    %v635 = vmul.f32 %v634, %v633
    %v636 = vmul.f32 0.5, %v635
    %v637 = vsub.f32 1.5, %v636
    %v638 = vmul.f32 %v633, %v637
    %v639 = vmul.f32 %v551, %v638
    %vm640 = vcmp.eq.f32.partialorder %v551, inf
    %v641 = vsel %vm640, %v551, %v639
    %vm642 = vcmp.eq.f32.partialorder %v551, 0.0
    %v643 = vand.u32 %v551, 2147483648
    %v644 = vsel %vm642, %v643, %v641
    %v645 = vrsqrt.pop %v552
    %v646 = vmul.f32 %v645, %v552
    %v647 = vmul.f32 %v646, %v645
    %v648 = vmul.f32 0.5, %v647
    %v649 = vsub.f32 1.5, %v648
    %v650 = vmul.f32 %v645, %v649
    %v651 = vmul.f32 %v552, %v650
    %vm652 = vcmp.eq.f32.partialorder %v552, inf
    %v653 = vsel %vm652, %v552, %v651
    %vm654 = vcmp.eq.f32.partialorder %v552, 0.0
    %v655 = vand.u32 %v552, 2147483648
    %v656 = vsel %vm654, %v655, %v653
    %v657 = vrsqrt.pop %v553
    %v658 = vmul.f32 %v657, %v553
    %v659 = vmul.f32 %v658, %v657
    %v660 = vmul.f32 0.5, %v659
    %v661 = vsub.f32 1.5, %v660
    %v662 = vmul.f32 %v657, %v661
    %v663 = vmul.f32 %v553, %v662
    %vm664 = vcmp.eq.f32.partialorder %v553, inf
    %v665 = vsel %vm664, %v553, %v663
    %vm666 = vcmp.eq.f32.partialorder %v553, 0.0
    %v667 = vand.u32 %v553, 2147483648
    %v668 = vsel %vm666, %v667, %v665
    %v669 = vrsqrt.pop %v554
    %v670 = vmul.f32 %v669, %v554
    %v671 = vmul.f32 %v670, %v669
    %v672 = vmul.f32 0.5, %v671
    %v673 = vsub.f32 1.5, %v672
    %v674 = vmul.f32 %v669, %v673
    %v675 = vmul.f32 %v554, %v674
    %vm676 = vcmp.eq.f32.partialorder %v554, inf
    %v677 = vsel %vm676, %v554, %v675
    %vm678 = vcmp.eq.f32.partialorder %v554, 0.0
    %v679 = vand.u32 %v554, 2147483648
    %v680 = vsel %vm678, %v679, %v677
    %v681 = vrsqrt.pop %v555
    %v682 = vmul.f32 %v681, %v555
    %v683 = vmul.f32 %v682, %v681
    %v684 = vmul.f32 0.5, %v683
    %v685 = vsub.f32 1.5, %v684
    %v686 = vmul.f32 %v681, %v685
    %v687 = vmul.f32 %v555, %v686
    %vm688 = vcmp.eq.f32.partialorder %v555, inf
    %v689 = vsel %vm688, %v555, %v687
    %vm690 = vcmp.eq.f32.partialorder %v555, 0.0
    %v691 = vand.u32 %v555, 2147483648
    %v692 = vsel %vm690, %v691, %v689
    %v693 = vrsqrt.pop %v556
    %v694 = vmul.f32 %v693, %v556
    %v695 = vmul.f32 %v694, %v693
    %v696 = vmul.f32 0.5, %v695
    %v697 = vsub.f32 1.5, %v696
    %v698 = vmul.f32 %v693, %v697
    %v699 = vmul.f32 %v556, %v698
    %vm700 = vcmp.eq.f32.partialorder %v556, inf
    %v701 = vsel %vm700, %v556, %v699
    %vm702 = vcmp.eq.f32.partialorder %v556, 0.0
    %v703 = vand.u32 %v556, 2147483648
    %v704 = vsel %vm702, %v703, %v701
    %v705 = vrsqrt.pop %v557
    %v706 = vmul.f32 %v705, %v557
    %v707 = vmul.f32 %v706, %v705
    %v708 = vmul.f32 0.5, %v707
    %v709 = vsub.f32 1.5, %v708
    %v710 = vmul.f32 %v705, %v709
    %v711 = vmul.f32 %v557, %v710
    %vm712 = vcmp.eq.f32.partialorder %v557, inf
    %v713 = vsel %vm712, %v557, %v711
    %vm714 = vcmp.eq.f32.partialorder %v557, 0.0
    %v715 = vand.u32 %v557, 2147483648
    %v716 = vsel %vm714, %v715, %v713
    %v717 = vrsqrt.pop %v558
    %v718 = vmul.f32 %v717, %v558
    %v719 = vmul.f32 %v718, %v717
    %v720 = vmul.f32 0.5, %v719
    %v721 = vsub.f32 1.5, %v720
    %v722 = vmul.f32 %v717, %v721
    %v723 = vmul.f32 %v558, %v722
    %vm724 = vcmp.eq.f32.partialorder %v558, inf
    %v725 = vsel %vm724, %v558, %v723
    %vm726 = vcmp.eq.f32.partialorder %v558, 0.0
    %v727 = vand.u32 %v558, 2147483648
    %v728 = vsel %vm726, %v727, %v725
    %v729 = vrsqrt.pop %v559
    %v730 = vmul.f32 %v729, %v559
    %v731 = vmul.f32 %v730, %v729
    %v732 = vmul.f32 0.5, %v731
    %v733 = vsub.f32 1.5, %v732
    %v734 = vmul.f32 %v729, %v733
    %v735 = vmul.f32 %v559, %v734
    %vm736 = vcmp.eq.f32.partialorder %v559, inf
    %v737 = vsel %vm736, %v559, %v735
    %vm738 = vcmp.eq.f32.partialorder %v559, 0.0
    %v739 = vand.u32 %v559, 2147483648
    %v740 = vsel %vm738, %v739, %v737
    %v741 = vrsqrt.pop %v560
    %v742 = vmul.f32 %v741, %v560
    %v743 = vmul.f32 %v742, %v741
    %v744 = vmul.f32 0.5, %v743
    %v745 = vsub.f32 1.5, %v744
    %v746 = vmul.f32 %v741, %v745
    %v747 = vmul.f32 %v560, %v746
    %vm748 = vcmp.eq.f32.partialorder %v560, inf
    %v749 = vsel %vm748, %v560, %v747
    %vm750 = vcmp.eq.f32.partialorder %v560, 0.0
    %v751 = vand.u32 %v560, 2147483648
    %v752 = vsel %vm750, %v751, %v749
    %v753 = vadd.f32 %v321, %v322
    %754 = vadd.xlane.f32.xlu0 %v753
    %v755 = vpop.xlane.xlu0 %754
    %v756 = vadd.f32 %v323, %v324
    %757 = vadd.xlane.f32.xlu0 %v756
    %v758 = vpop.xlane.xlu0 %757
    %v759 = vadd.f32 %v325, %v326
    %760 = vadd.xlane.f32.xlu0 %v759
    %v761 = vpop.xlane.xlu0 %760
    %v762 = vadd.f32 %v327, %v328
    %763 = vadd.xlane.f32.xlu0 %v762
    %v764 = vpop.xlane.xlu0 %763
    %v765 = vadd.f32 %v329, %v330
    %766 = vadd.xlane.f32.xlu0 %v765
    %v767 = vpop.xlane.xlu0 %766
    %v768 = vadd.f32 %v331, %v332
    %769 = vadd.xlane.f32.xlu0 %v768
    %v770 = vpop.xlane.xlu0 %769
    %v771 = vadd.f32 %v333, %v334
    %772 = vadd.xlane.f32.xlu0 %v771
    %v773 = vpop.xlane.xlu0 %772
    %v774 = vadd.f32 %v335, %v336
    %775 = vadd.xlane.f32.xlu0 %v774
    %v776 = vpop.xlane.xlu0 %775
    %v777 = vadd.f32 %v337, %v338
    %778 = vadd.xlane.f32.xlu0 %v777
    %v779 = vpop.xlane.xlu0 %778
    %v780 = vadd.f32 %v339, %v340
    %781 = vadd.xlane.f32.xlu0 %v780
    %v782 = vpop.xlane.xlu0 %781
    %v783 = vadd.f32 %v341, %v342
    %784 = vadd.xlane.f32.xlu0 %v783
    %v785 = vpop.xlane.xlu0 %784
    %v786 = vadd.f32 %v343, %v344
    %787 = vadd.xlane.f32.xlu0 %v786
    %v788 = vpop.xlane.xlu0 %787
    %v789 = vadd.f32 %v345, %v346
    %790 = vadd.xlane.f32.xlu0 %v789
    %v791 = vpop.xlane.xlu0 %790
    %v792 = vadd.f32 %v347, %v348
    %793 = vadd.xlane.f32.xlu0 %v792
    %v794 = vpop.xlane.xlu0 %793
    %v795 = vadd.f32 %v349, %v350
    %796 = vadd.xlane.f32.xlu0 %v795
    %v797 = vpop.xlane.xlu0 %796
    %v798 = vadd.f32 %v351, %v352
    %799 = vadd.xlane.f32.xlu0 %v798
    %v800 = vpop.xlane.xlu0 %799
    %v801 = vmul.f32 %v755, 0.00390625
    %v802 = vmul.f32 %v758, 0.00390625
    %v803 = vmul.f32 %v761, 0.00390625
    %v804 = vmul.f32 %v764, 0.00390625
    %v805 = vmul.f32 %v767, 0.00390625
    %v806 = vmul.f32 %v770, 0.00390625
    %v807 = vmul.f32 %v773, 0.00390625
    %v808 = vmul.f32 %v776, 0.00390625
    %v809 = vmul.f32 %v779, 0.00390625
    %v810 = vmul.f32 %v782, 0.00390625
    %v811 = vmul.f32 %v785, 0.00390625
    %v812 = vmul.f32 %v788, 0.00390625
    %v813 = vmul.f32 %v791, 0.00390625
    %v814 = vmul.f32 %v794, 0.00390625
    %v815 = vmul.f32 %v797, 0.00390625
    %v816 = vmul.f32 %v800, 0.00390625
    %v817 = vsub.f32 %v321, %v801
    %v818 = vsub.f32 %v322, %v801
    %v819 = vsub.f32 %v323, %v802
    %v820 = vsub.f32 %v324, %v802
    %v821 = vsub.f32 %v325, %v803
    %v822 = vsub.f32 %v326, %v803
    %v823 = vsub.f32 %v327, %v804
    %v824 = vsub.f32 %v328, %v804
    %v825 = vsub.f32 %v329, %v805
    %v826 = vsub.f32 %v330, %v805
    %v827 = vsub.f32 %v331, %v806
    %v828 = vsub.f32 %v332, %v806
    %v829 = vsub.f32 %v333, %v807
    %v830 = vsub.f32 %v334, %v807
    %v831 = vsub.f32 %v335, %v808
    %v832 = vsub.f32 %v336, %v808
    %v833 = vsub.f32 %v337, %v809
    %v834 = vsub.f32 %v338, %v809
    %v835 = vsub.f32 %v339, %v810
    %v836 = vsub.f32 %v340, %v810
    %v837 = vsub.f32 %v341, %v811
    %v838 = vsub.f32 %v342, %v811
    %v839 = vsub.f32 %v343, %v812
    %v840 = vsub.f32 %v344, %v812
    %v841 = vsub.f32 %v345, %v813
    %v842 = vsub.f32 %v346, %v813
    %v843 = vsub.f32 %v347, %v814
    %v844 = vsub.f32 %v348, %v814
    %v845 = vsub.f32 %v349, %v815
    %v846 = vsub.f32 %v350, %v815
    %v847 = vsub.f32 %v351, %v816
    %v848 = vsub.f32 %v352, %v816
    %v849 = vmul.f32 %v817, %v817
    %v850 = vmul.f32 %v818, %v818
    %v851 = vmul.f32 %v819, %v819
    %v852 = vmul.f32 %v820, %v820
    %v853 = vmul.f32 %v821, %v821
    %v854 = vmul.f32 %v822, %v822
    %v855 = vmul.f32 %v823, %v823
    %v856 = vmul.f32 %v824, %v824
    %v857 = vmul.f32 %v825, %v825
    %v858 = vmul.f32 %v826, %v826
    %v859 = vmul.f32 %v827, %v827
    %v860 = vmul.f32 %v828, %v828
    %v861 = vmul.f32 %v829, %v829
    %v862 = vmul.f32 %v830, %v830
    %v863 = vmul.f32 %v831, %v831
    %v864 = vmul.f32 %v832, %v832
    %v865 = vmul.f32 %v833, %v833
    %v866 = vmul.f32 %v834, %v834
    %v867 = vmul.f32 %v835, %v835
    %v868 = vmul.f32 %v836, %v836
    %v869 = vmul.f32 %v837, %v837
    %v870 = vmul.f32 %v838, %v838
    %v871 = vmul.f32 %v839, %v839
    %v872 = vmul.f32 %v840, %v840
    %v873 = vmul.f32 %v841, %v841
    %v874 = vmul.f32 %v842, %v842
    %v875 = vmul.f32 %v843, %v843
    %v876 = vmul.f32 %v844, %v844
    %v877 = vmul.f32 %v845, %v845
    %v878 = vmul.f32 %v846, %v846
    %v879 = vmul.f32 %v847, %v847
    %v880 = vmul.f32 %v848, %v848
    %v881 = vadd.f32 %v849, %v850
    %882 = vadd.xlane.f32.xlu0 %v881
    %v883 = vpop.xlane.xlu0 %882
    %v884 = vadd.f32 %v851, %v852
    %885 = vadd.xlane.f32.xlu0 %v884
    %v886 = vpop.xlane.xlu0 %885
    %v887 = vadd.f32 %v853, %v854
    %888 = vadd.xlane.f32.xlu0 %v887
    %v889 = vpop.xlane.xlu0 %888
    %v890 = vadd.f32 %v855, %v856
    %891 = vadd.xlane.f32.xlu0 %v890
    %v892 = vpop.xlane.xlu0 %891
    %v893 = vadd.f32 %v857, %v858
    %894 = vadd.xlane.f32.xlu0 %v893
    %v895 = vpop.xlane.xlu0 %894
    %v896 = vadd.f32 %v859, %v860
    %897 = vadd.xlane.f32.xlu0 %v896
    %v898 = vpop.xlane.xlu0 %897
    %v899 = vadd.f32 %v861, %v862
    %900 = vadd.xlane.f32.xlu0 %v899
    %v901 = vpop.xlane.xlu0 %900
    %v902 = vadd.f32 %v863, %v864
    %903 = vadd.xlane.f32.xlu0 %v902
    %v904 = vpop.xlane.xlu0 %903
    %v905 = vadd.f32 %v865, %v866
    %906 = vadd.xlane.f32.xlu0 %v905
    %v907 = vpop.xlane.xlu0 %906
    %v908 = vadd.f32 %v867, %v868
    %909 = vadd.xlane.f32.xlu0 %v908
    %v910 = vpop.xlane.xlu0 %909
    %v911 = vadd.f32 %v869, %v870
    %912 = vadd.xlane.f32.xlu0 %v911
    %v913 = vpop.xlane.xlu0 %912
    %v914 = vadd.f32 %v871, %v872
    %915 = vadd.xlane.f32.xlu0 %v914
    %v916 = vpop.xlane.xlu0 %915
    %v917 = vadd.f32 %v873, %v874
    %918 = vadd.xlane.f32.xlu0 %v917
    %v919 = vpop.xlane.xlu0 %918
    %v920 = vadd.f32 %v875, %v876
    %921 = vadd.xlane.f32.xlu0 %v920
    %v922 = vpop.xlane.xlu0 %921
    %v923 = vadd.f32 %v877, %v878
    %924 = vadd.xlane.f32.xlu0 %v923
    %v925 = vpop.xlane.xlu0 %924
    %v926 = vadd.f32 %v879, %v880
    %927 = vadd.xlane.f32.xlu0 %v926
    %v928 = vpop.xlane.xlu0 %927
    %v929 = vmul.f32 %v883, 0.003921569
    %v930 = vmul.f32 %v886, 0.003921569
    %v931 = vmul.f32 %v889, 0.003921569
    %v932 = vmul.f32 %v892, 0.003921569
    %v933 = vmul.f32 %v895, 0.003921569
    %v934 = vmul.f32 %v898, 0.003921569
    %v935 = vmul.f32 %v901, 0.003921569
    %v936 = vmul.f32 %v904, 0.003921569
    %v937 = vmul.f32 %v907, 0.003921569
    %v938 = vmul.f32 %v910, 0.003921569
    %v939 = vmul.f32 %v913, 0.003921569
    %v940 = vmul.f32 %v916, 0.003921569
    %v941 = vmul.f32 %v919, 0.003921569
    %v942 = vmul.f32 %v922, 0.003921569
    %v943 = vmul.f32 %v925, 0.003921569
    %v944 = vmul.f32 %v928, 0.003921569
    %v945 = vadd.f32 %v929, 1e-06
    %v946 = vadd.f32 %v930, 1e-06
    %v947 = vadd.f32 %v931, 1e-06
    %v948 = vadd.f32 %v932, 1e-06
    %v949 = vadd.f32 %v933, 1e-06
    %v950 = vadd.f32 %v934, 1e-06
    %v951 = vadd.f32 %v935, 1e-06
    %v952 = vadd.f32 %v936, 1e-06
    %v953 = vadd.f32 %v937, 1e-06
    %v954 = vadd.f32 %v938, 1e-06
    %v955 = vadd.f32 %v939, 1e-06
    %v956 = vadd.f32 %v940, 1e-06
    %v957 = vadd.f32 %v941, 1e-06
    %v958 = vadd.f32 %v942, 1e-06
    %v959 = vadd.f32 %v943, 1e-06
    %v960 = vadd.f32 %v944, 1e-06
    %v961 = vrsqrt.pop %v945
    %v962 = vmul.f32 %v961, %v945
    %v963 = vmul.f32 %v962, %v961
    %v964 = vmul.f32 0.5, %v963
    %v965 = vsub.f32 1.5, %v964
    %v966 = vmul.f32 %v961, %v965
    %v967 = vmul.f32 %v945, %v966
    %vm968 = vcmp.eq.f32.partialorder %v945, inf
    %v969 = vsel %vm968, %v945, %v967
    %vm970 = vcmp.eq.f32.partialorder %v945, 0.0
    %v971 = vand.u32 %v945, 2147483648
    %v972 = vsel %vm970, %v971, %v969
    %v973 = vrsqrt.pop %v946
    %v974 = vmul.f32 %v973, %v946
    %v975 = vmul.f32 %v974, %v973
    %v976 = vmul.f32 0.5, %v975
    %v977 = vsub.f32 1.5, %v976
    %v978 = vmul.f32 %v973, %v977
    %v979 = vmul.f32 %v946, %v978
    %vm980 = vcmp.eq.f32.partialorder %v946, inf
    %v981 = vsel %vm980, %v946, %v979
    %vm982 = vcmp.eq.f32.partialorder %v946, 0.0
    %v983 = vand.u32 %v946, 2147483648
    %v984 = vsel %vm982, %v983, %v981
    %v985 = vrsqrt.pop %v947
    %v986 = vmul.f32 %v985, %v947
    %v987 = vmul.f32 %v986, %v985
    %v988 = vmul.f32 0.5, %v987
    %v989 = vsub.f32 1.5, %v988
    %v990 = vmul.f32 %v985, %v989
    %v991 = vmul.f32 %v947, %v990
    %vm992 = vcmp.eq.f32.partialorder %v947, inf
    %v993 = vsel %vm992, %v947, %v991
    %vm994 = vcmp.eq.f32.partialorder %v947, 0.0
    %v995 = vand.u32 %v947, 2147483648
    %v996 = vsel %vm994, %v995, %v993
    %v997 = vrsqrt.pop %v948
    %v998 = vmul.f32 %v997, %v948
    %v999 = vmul.f32 %v998, %v997
    %v1000 = vmul.f32 0.5, %v999
    %v1001 = vsub.f32 1.5, %v1000
    %v1002 = vmul.f32 %v997, %v1001
    %v1003 = vmul.f32 %v948, %v1002
    %vm1004 = vcmp.eq.f32.partialorder %v948, inf
    %v1005 = vsel %vm1004, %v948, %v1003
    %vm1006 = vcmp.eq.f32.partialorder %v948, 0.0
    %v1007 = vand.u32 %v948, 2147483648
    %v1008 = vsel %vm1006, %v1007, %v1005
    %v1009 = vrsqrt.pop %v949
    %v1010 = vmul.f32 %v1009, %v949
    %v1011 = vmul.f32 %v1010, %v1009
    %v1012 = vmul.f32 0.5, %v1011
    %v1013 = vsub.f32 1.5, %v1012
    %v1014 = vmul.f32 %v1009, %v1013
    %v1015 = vmul.f32 %v949, %v1014
    %vm1016 = vcmp.eq.f32.partialorder %v949, inf
    %v1017 = vsel %vm1016, %v949, %v1015
    %vm1018 = vcmp.eq.f32.partialorder %v949, 0.0
    %v1019 = vand.u32 %v949, 2147483648
    %v1020 = vsel %vm1018, %v1019, %v1017
    %v1021 = vrsqrt.pop %v950
    %v1022 = vmul.f32 %v1021, %v950
    %v1023 = vmul.f32 %v1022, %v1021
    %v1024 = vmul.f32 0.5, %v1023
    %v1025 = vsub.f32 1.5, %v1024
    %v1026 = vmul.f32 %v1021, %v1025
    %v1027 = vmul.f32 %v950, %v1026
    %vm1028 = vcmp.eq.f32.partialorder %v950, inf
    %v1029 = vsel %vm1028, %v950, %v1027
    %vm1030 = vcmp.eq.f32.partialorder %v950, 0.0
    %v1031 = vand.u32 %v950, 2147483648
    %v1032 = vsel %vm1030, %v1031, %v1029
    %v1033 = vrsqrt.pop %v951
    %v1034 = vmul.f32 %v1033, %v951
    %v1035 = vmul.f32 %v1034, %v1033
    %v1036 = vmul.f32 0.5, %v1035
    %v1037 = vsub.f32 1.5, %v1036
    %v1038 = vmul.f32 %v1033, %v1037
    %v1039 = vmul.f32 %v951, %v1038
    %vm1040 = vcmp.eq.f32.partialorder %v951, inf
    %v1041 = vsel %vm1040, %v951, %v1039
    %vm1042 = vcmp.eq.f32.partialorder %v951, 0.0
    %v1043 = vand.u32 %v951, 2147483648
    %v1044 = vsel %vm1042, %v1043, %v1041
    %v1045 = vrsqrt.pop %v952
    %v1046 = vmul.f32 %v1045, %v952
    %v1047 = vmul.f32 %v1046, %v1045
    %v1048 = vmul.f32 0.5, %v1047
    %v1049 = vsub.f32 1.5, %v1048
    %v1050 = vmul.f32 %v1045, %v1049
    %v1051 = vmul.f32 %v952, %v1050
    %vm1052 = vcmp.eq.f32.partialorder %v952, inf
    %v1053 = vsel %vm1052, %v952, %v1051
    %vm1054 = vcmp.eq.f32.partialorder %v952, 0.0
    %v1055 = vand.u32 %v952, 2147483648
    %v1056 = vsel %vm1054, %v1055, %v1053
    %v1057 = vrsqrt.pop %v953
    %v1058 = vmul.f32 %v1057, %v953
    %v1059 = vmul.f32 %v1058, %v1057
    %v1060 = vmul.f32 0.5, %v1059
    %v1061 = vsub.f32 1.5, %v1060
    %v1062 = vmul.f32 %v1057, %v1061
    %v1063 = vmul.f32 %v953, %v1062
    %vm1064 = vcmp.eq.f32.partialorder %v953, inf
    %v1065 = vsel %vm1064, %v953, %v1063
    %vm1066 = vcmp.eq.f32.partialorder %v953, 0.0
    %v1067 = vand.u32 %v953, 2147483648
    %v1068 = vsel %vm1066, %v1067, %v1065
    %v1069 = vrsqrt.pop %v954
    %v1070 = vmul.f32 %v1069, %v954
    %v1071 = vmul.f32 %v1070, %v1069
    %v1072 = vmul.f32 0.5, %v1071
    %v1073 = vsub.f32 1.5, %v1072
    %v1074 = vmul.f32 %v1069, %v1073
    %v1075 = vmul.f32 %v954, %v1074
    %vm1076 = vcmp.eq.f32.partialorder %v954, inf
    %v1077 = vsel %vm1076, %v954, %v1075
    %vm1078 = vcmp.eq.f32.partialorder %v954, 0.0
    %v1079 = vand.u32 %v954, 2147483648
    %v1080 = vsel %vm1078, %v1079, %v1077
    %v1081 = vrsqrt.pop %v955
    %v1082 = vmul.f32 %v1081, %v955
    %v1083 = vmul.f32 %v1082, %v1081
    %v1084 = vmul.f32 0.5, %v1083
    %v1085 = vsub.f32 1.5, %v1084
    %v1086 = vmul.f32 %v1081, %v1085
    %v1087 = vmul.f32 %v955, %v1086
    %vm1088 = vcmp.eq.f32.partialorder %v955, inf
    %v1089 = vsel %vm1088, %v955, %v1087
    %vm1090 = vcmp.eq.f32.partialorder %v955, 0.0
    %v1091 = vand.u32 %v955, 2147483648
    %v1092 = vsel %vm1090, %v1091, %v1089
    %v1093 = vrsqrt.pop %v956
    %v1094 = vmul.f32 %v1093, %v956
    %v1095 = vmul.f32 %v1094, %v1093
    %v1096 = vmul.f32 0.5, %v1095
    %v1097 = vsub.f32 1.5, %v1096
    %v1098 = vmul.f32 %v1093, %v1097
    %v1099 = vmul.f32 %v956, %v1098
    %vm1100 = vcmp.eq.f32.partialorder %v956, inf
    %v1101 = vsel %vm1100, %v956, %v1099
    %vm1102 = vcmp.eq.f32.partialorder %v956, 0.0
    %v1103 = vand.u32 %v956, 2147483648
    %v1104 = vsel %vm1102, %v1103, %v1101
    %v1105 = vrsqrt.pop %v957
    %v1106 = vmul.f32 %v1105, %v957
    %v1107 = vmul.f32 %v1106, %v1105
    %v1108 = vmul.f32 0.5, %v1107
    %v1109 = vsub.f32 1.5, %v1108
    %v1110 = vmul.f32 %v1105, %v1109
    %v1111 = vmul.f32 %v957, %v1110
    %vm1112 = vcmp.eq.f32.partialorder %v957, inf
    %v1113 = vsel %vm1112, %v957, %v1111
    %vm1114 = vcmp.eq.f32.partialorder %v957, 0.0
    %v1115 = vand.u32 %v957, 2147483648
    %v1116 = vsel %vm1114, %v1115, %v1113
    %v1117 = vrsqrt.pop %v958
    %v1118 = vmul.f32 %v1117, %v958
    %v1119 = vmul.f32 %v1118, %v1117
    %v1120 = vmul.f32 0.5, %v1119
    %v1121 = vsub.f32 1.5, %v1120
    %v1122 = vmul.f32 %v1117, %v1121
    %v1123 = vmul.f32 %v958, %v1122
    %vm1124 = vcmp.eq.f32.partialorder %v958, inf
    %v1125 = vsel %vm1124, %v958, %v1123
    %vm1126 = vcmp.eq.f32.partialorder %v958, 0.0
    %v1127 = vand.u32 %v958, 2147483648
    %v1128 = vsel %vm1126, %v1127, %v1125
    %v1129 = vrsqrt.pop %v959
    %v1130 = vmul.f32 %v1129, %v959
    %v1131 = vmul.f32 %v1130, %v1129
    %v1132 = vmul.f32 0.5, %v1131
    %v1133 = vsub.f32 1.5, %v1132
    %v1134 = vmul.f32 %v1129, %v1133
    %v1135 = vmul.f32 %v959, %v1134
    %vm1136 = vcmp.eq.f32.partialorder %v959, inf
    %v1137 = vsel %vm1136, %v959, %v1135
    %vm1138 = vcmp.eq.f32.partialorder %v959, 0.0
    %v1139 = vand.u32 %v959, 2147483648
    %v1140 = vsel %vm1138, %v1139, %v1137
    %v1141 = vrsqrt.pop %v960
    %v1142 = vmul.f32 %v1141, %v960
    %v1143 = vmul.f32 %v1142, %v1141
    %v1144 = vmul.f32 0.5, %v1143
    %v1145 = vsub.f32 1.5, %v1144
    %v1146 = vmul.f32 %v1141, %v1145
    %v1147 = vmul.f32 %v960, %v1146
    %vm1148 = vcmp.eq.f32.partialorder %v960, inf
    %v1149 = vsel %vm1148, %v960, %v1147
    %vm1150 = vcmp.eq.f32.partialorder %v960, 0.0
    %v1151 = vand.u32 %v960, 2147483648
    %v1152 = vsel %vm1150, %v1151, %v1149
    %v1153 = vlaneseq
    %v1154 = vand.u32 %v1153, 127
    %v1155 = vld [vmem:[%s6] sm:$0xff]
    %v1156 = vld [vmem:[%s6 + $0x8] sm:$0xff]
    %v1157 = vld [vmem:[%s6 + $0x10] sm:$0xff]
    %v1158 = vld [vmem:[%s6 + $0x18] sm:$0xff]
    %v1159 = vld [vmem:[%s6 + $0x20] sm:$0xff]
    %v1160 = vld [vmem:[%s6 + $0x28] sm:$0xff]
    %v1161 = vld [vmem:[%s6 + $0x30] sm:$0xff]
    %v1162 = vld [vmem:[%s6 + $0x38] sm:$0xff]
    %v1163 = vld [vmem:[%s6 + $0x40] sm:$0xff]
    %v1164 = vld [vmem:[%s6 + $0x48] sm:$0xff]
    %v1165 = vld [vmem:[%s6 + $0x50] sm:$0xff]
    %v1166 = vld [vmem:[%s6 + $0x58] sm:$0xff]
    %v1167 = vld [vmem:[%s6 + $0x60] sm:$0xff]
    %v1168 = vld [vmem:[%s6 + $0x68] sm:$0xff]
    %v1169 = vld [vmem:[%s6 + $0x70] sm:$0xff]
    %v1170 = vld [vmem:[%s6 + $0x78] sm:$0xff]
    %1171 = vset.pattern.permute.xlu0 0
    %1172 = vperm.xlu0 %1171, %v1155
    %v1173 = vpop.permute.xlu0 %1172
    %1174 = vset.pattern.permute.xlu0 0
    %1175 = vperm.xlu0 %1174, %v1156
    %v1176 = vpop.permute.xlu0 %1175
    %1177 = vset.pattern.permute.xlu0 0
    %1178 = vperm.xlu0 %1177, %v1157
    %v1179 = vpop.permute.xlu0 %1178
    %1180 = vset.pattern.permute.xlu0 0
    %1181 = vperm.xlu0 %1180, %v1158
    %v1182 = vpop.permute.xlu0 %1181
    %1183 = vset.pattern.permute.xlu0 0
    %1184 = vperm.xlu0 %1183, %v1159
    %v1185 = vpop.permute.xlu0 %1184
    %1186 = vset.pattern.permute.xlu0 0
    %1187 = vperm.xlu0 %1186, %v1160
    %v1188 = vpop.permute.xlu0 %1187
    %1189 = vset.pattern.permute.xlu0 0
    %1190 = vperm.xlu0 %1189, %v1161
    %v1191 = vpop.permute.xlu0 %1190
    %1192 = vset.pattern.permute.xlu0 0
    %1193 = vperm.xlu0 %1192, %v1162
    %v1194 = vpop.permute.xlu0 %1193
    %1195 = vset.pattern.permute.xlu0 0
    %1196 = vperm.xlu0 %1195, %v1163
    %v1197 = vpop.permute.xlu0 %1196
    %1198 = vset.pattern.permute.xlu0 0
    %1199 = vperm.xlu0 %1198, %v1164
    %v1200 = vpop.permute.xlu0 %1199
    %1201 = vset.pattern.permute.xlu0 0
    %1202 = vperm.xlu0 %1201, %v1165
    %v1203 = vpop.permute.xlu0 %1202
    %1204 = vset.pattern.permute.xlu0 0
    %1205 = vperm.xlu0 %1204, %v1166
    %v1206 = vpop.permute.xlu0 %1205
    %1207 = vset.pattern.permute.xlu0 0
    %1208 = vperm.xlu0 %1207, %v1167
    %v1209 = vpop.permute.xlu0 %1208
    %1210 = vset.pattern.permute.xlu0 0
    %1211 = vperm.xlu0 %1210, %v1168
    %v1212 = vpop.permute.xlu0 %1211
    %1213 = vset.pattern.permute.xlu0 0
    %1214 = vperm.xlu0 %1213, %v1169
    %v1215 = vpop.permute.xlu0 %1214
    %1216 = vset.pattern.permute.xlu0 0
    %1217 = vperm.xlu0 %1216, %v1170
    %v1218 = vpop.permute.xlu0 %1217
    %vm1219 = vcmp.eq.s32.totalorder %v1154, %v1173
    %vm1220 = vcmp.eq.s32.totalorder %v1154, %v1176
    %vm1221 = vcmp.eq.s32.totalorder %v1154, %v1179
    %vm1222 = vcmp.eq.s32.totalorder %v1154, %v1182
    %vm1223 = vcmp.eq.s32.totalorder %v1154, %v1185
    %vm1224 = vcmp.eq.s32.totalorder %v1154, %v1188
    %vm1225 = vcmp.eq.s32.totalorder %v1154, %v1191
    %vm1226 = vcmp.eq.s32.totalorder %v1154, %v1194
    %vm1227 = vcmp.eq.s32.totalorder %v1154, %v1197
    %vm1228 = vcmp.eq.s32.totalorder %v1154, %v1200
    %vm1229 = vcmp.eq.s32.totalorder %v1154, %v1203
    %vm1230 = vcmp.eq.s32.totalorder %v1154, %v1206
    %vm1231 = vcmp.eq.s32.totalorder %v1154, %v1209
    %vm1232 = vcmp.eq.s32.totalorder %v1154, %v1212
    %vm1233 = vcmp.eq.s32.totalorder %v1154, %v1215
    %vm1234 = vcmp.eq.s32.totalorder %v1154, %v1218
    %v1235 = vsel %vm1219, 1.0, 0.0
    %v1236 = vsel %vm1220, 1.0, 0.0
    %v1237 = vsel %vm1221, 1.0, 0.0
    %v1238 = vsel %vm1222, 1.0, 0.0
    %v1239 = vsel %vm1223, 1.0, 0.0
    %v1240 = vsel %vm1224, 1.0, 0.0
    %v1241 = vsel %vm1225, 1.0, 0.0
    %v1242 = vsel %vm1226, 1.0, 0.0
    %v1243 = vsel %vm1227, 1.0, 0.0
    %v1244 = vsel %vm1228, 1.0, 0.0
    %v1245 = vsel %vm1229, 1.0, 0.0
    %v1246 = vsel %vm1230, 1.0, 0.0
    %v1247 = vsel %vm1231, 1.0, 0.0
    %v1248 = vsel %vm1232, 1.0, 0.0
    %v1249 = vsel %vm1233, 1.0, 0.0
    %v1250 = vsel %vm1234, 1.0, 0.0
    %v1251 = vld [vmem:[%s7] sm:$0xff]
    %v1252 = vld [vmem:[%s7 + $0x8] sm:$0xff]
    %v1253 = vld [vmem:[%s7 + $0x10] sm:$0xff]
    %v1254 = vld [vmem:[%s7 + $0x18] sm:$0xff]
    %v1255 = vld [vmem:[%s7 + $0x20] sm:$0xff]
    %v1256 = vld [vmem:[%s7 + $0x28] sm:$0xff]
    %v1257 = vld [vmem:[%s7 + $0x30] sm:$0xff]
    %v1258 = vld [vmem:[%s7 + $0x38] sm:$0xff]
    %v1259 = vld [vmem:[%s7 + $0x40] sm:$0xff]
    %v1260 = vld [vmem:[%s7 + $0x48] sm:$0xff]
    %v1261 = vld [vmem:[%s7 + $0x50] sm:$0xff]
    %v1262 = vld [vmem:[%s7 + $0x58] sm:$0xff]
    %v1263 = vld [vmem:[%s7 + $0x60] sm:$0xff]
    %v1264 = vld [vmem:[%s7 + $0x68] sm:$0xff]
    %v1265 = vld [vmem:[%s7 + $0x70] sm:$0xff]
    %v1266 = vld [vmem:[%s7 + $0x78] sm:$0xff]
    %1267 = vset.pattern.permute.xlu0 0
    %1268 = vperm.xlu0 %1267, %v1251
    %v1269 = vpop.permute.xlu0 %1268
    %1270 = vset.pattern.permute.xlu0 0
    %1271 = vperm.xlu0 %1270, %v1252
    %v1272 = vpop.permute.xlu0 %1271
    %1273 = vset.pattern.permute.xlu0 0
    %1274 = vperm.xlu0 %1273, %v1253
    %v1275 = vpop.permute.xlu0 %1274
    %1276 = vset.pattern.permute.xlu0 0
    %1277 = vperm.xlu0 %1276, %v1254
    %v1278 = vpop.permute.xlu0 %1277
    %1279 = vset.pattern.permute.xlu0 0
    %1280 = vperm.xlu0 %1279, %v1255
    %v1281 = vpop.permute.xlu0 %1280
    %1282 = vset.pattern.permute.xlu0 0
    %1283 = vperm.xlu0 %1282, %v1256
    %v1284 = vpop.permute.xlu0 %1283
    %1285 = vset.pattern.permute.xlu0 0
    %1286 = vperm.xlu0 %1285, %v1257
    %v1287 = vpop.permute.xlu0 %1286
    %1288 = vset.pattern.permute.xlu0 0
    %1289 = vperm.xlu0 %1288, %v1258
    %v1290 = vpop.permute.xlu0 %1289
    %1291 = vset.pattern.permute.xlu0 0
    %1292 = vperm.xlu0 %1291, %v1259
    %v1293 = vpop.permute.xlu0 %1292
    %1294 = vset.pattern.permute.xlu0 0
    %1295 = vperm.xlu0 %1294, %v1260
    %v1296 = vpop.permute.xlu0 %1295
    %1297 = vset.pattern.permute.xlu0 0
    %1298 = vperm.xlu0 %1297, %v1261
    %v1299 = vpop.permute.xlu0 %1298
    %1300 = vset.pattern.permute.xlu0 0
    %1301 = vperm.xlu0 %1300, %v1262
    %v1302 = vpop.permute.xlu0 %1301
    %1303 = vset.pattern.permute.xlu0 0
    %1304 = vperm.xlu0 %1303, %v1263
    %v1305 = vpop.permute.xlu0 %1304
    %1306 = vset.pattern.permute.xlu0 0
    %1307 = vperm.xlu0 %1306, %v1264
    %v1308 = vpop.permute.xlu0 %1307
    %1309 = vset.pattern.permute.xlu0 0
    %1310 = vperm.xlu0 %1309, %v1265
    %v1311 = vpop.permute.xlu0 %1310
    %1312 = vset.pattern.permute.xlu0 0
    %1313 = vperm.xlu0 %1312, %v1266
    %v1314 = vpop.permute.xlu0 %1313
    %vm1315 = vcmp.eq.s32.totalorder %v1154, %v1269
    %vm1316 = vcmp.eq.s32.totalorder %v1154, %v1272
    %vm1317 = vcmp.eq.s32.totalorder %v1154, %v1275
    %vm1318 = vcmp.eq.s32.totalorder %v1154, %v1278
    %vm1319 = vcmp.eq.s32.totalorder %v1154, %v1281
    %vm1320 = vcmp.eq.s32.totalorder %v1154, %v1284
    %vm1321 = vcmp.eq.s32.totalorder %v1154, %v1287
    %vm1322 = vcmp.eq.s32.totalorder %v1154, %v1290
    %vm1323 = vcmp.eq.s32.totalorder %v1154, %v1293
    %vm1324 = vcmp.eq.s32.totalorder %v1154, %v1296
    %vm1325 = vcmp.eq.s32.totalorder %v1154, %v1299
    %vm1326 = vcmp.eq.s32.totalorder %v1154, %v1302
    %vm1327 = vcmp.eq.s32.totalorder %v1154, %v1305
    %vm1328 = vcmp.eq.s32.totalorder %v1154, %v1308
    %vm1329 = vcmp.eq.s32.totalorder %v1154, %v1311
    %vm1330 = vcmp.eq.s32.totalorder %v1154, %v1314
    %v1331 = vsel %vm1315, 1.0, 0.0
    %v1332 = vsel %vm1316, 1.0, 0.0
    %v1333 = vsel %vm1317, 1.0, 0.0
    %v1334 = vsel %vm1318, 1.0, 0.0
    %v1335 = vsel %vm1319, 1.0, 0.0
    %v1336 = vsel %vm1320, 1.0, 0.0
    %v1337 = vsel %vm1321, 1.0, 0.0
    %v1338 = vsel %vm1322, 1.0, 0.0
    %v1339 = vsel %vm1323, 1.0, 0.0
    %v1340 = vsel %vm1324, 1.0, 0.0
    %v1341 = vsel %vm1325, 1.0, 0.0
    %v1342 = vsel %vm1326, 1.0, 0.0
    %v1343 = vsel %vm1327, 1.0, 0.0
    %v1344 = vsel %vm1328, 1.0, 0.0
    %v1345 = vsel %vm1329, 1.0, 0.0
    %v1346 = vsel %vm1330, 1.0, 0.0
    %v1347 = vld [vmem:[%s4] sm:$0xff]
    %v1348 = vld [vmem:[%s4 + $0x8] sm:$0xff]
    %v1349 = vld [vmem:[%s4 + $0x10] sm:$0xff]
    %v1350 = vld [vmem:[%s4 + $0x18] sm:$0xff]
    %v1351 = vld [vmem:[%s4 + $0x20] sm:$0xff]
    %v1352 = vld [vmem:[%s4 + $0x28] sm:$0xff]
    %v1353 = vld [vmem:[%s4 + $0x30] sm:$0xff]
    %v1354 = vld [vmem:[%s4 + $0x38] sm:$0xff]
    %v1355 = vld [vmem:[%s4 + $0x40] sm:$0xff]
    %v1356 = vld [vmem:[%s4 + $0x48] sm:$0xff]
    %v1357 = vld [vmem:[%s4 + $0x50] sm:$0xff]
    %v1358 = vld [vmem:[%s4 + $0x58] sm:$0xff]
    %v1359 = vld [vmem:[%s4 + $0x60] sm:$0xff]
    %v1360 = vld [vmem:[%s4 + $0x68] sm:$0xff]
    %v1361 = vld [vmem:[%s4 + $0x70] sm:$0xff]
    %v1362 = vld [vmem:[%s4 + $0x78] sm:$0xff]
    %v1363 = vld [vmem:[%s5] sm:$0xff]
    %v1364 = vld [vmem:[%s5 + $0x8] sm:$0xff]
    %v1365 = vld [vmem:[%s5 + $0x10] sm:$0xff]
    %v1366 = vld [vmem:[%s5 + $0x18] sm:$0xff]
    %v1367 = vld [vmem:[%s5 + $0x20] sm:$0xff]
    %v1368 = vld [vmem:[%s5 + $0x28] sm:$0xff]
    %v1369 = vld [vmem:[%s5 + $0x30] sm:$0xff]
    %v1370 = vld [vmem:[%s5 + $0x38] sm:$0xff]
    %v1371 = vld [vmem:[%s5 + $0x40] sm:$0xff]
    %v1372 = vld [vmem:[%s5 + $0x48] sm:$0xff]
    %v1373 = vld [vmem:[%s5 + $0x50] sm:$0xff]
    %v1374 = vld [vmem:[%s5 + $0x58] sm:$0xff]
    %v1375 = vld [vmem:[%s5 + $0x60] sm:$0xff]
    %v1376 = vld [vmem:[%s5 + $0x68] sm:$0xff]
    %v1377 = vld [vmem:[%s5 + $0x70] sm:$0xff]
    %v1378 = vld [vmem:[%s5 + $0x78] sm:$0xff]
    %v1379 = vmul.f32 %v401, %v1347
    %v1380 = vmul.f32 %v402, %v1348
    %v1381 = vmul.f32 %v403, %v1349
    %v1382 = vmul.f32 %v404, %v1350
    %v1383 = vmul.f32 %v405, %v1351
    %v1384 = vmul.f32 %v406, %v1352
    %v1385 = vmul.f32 %v407, %v1353
    %v1386 = vmul.f32 %v408, %v1354
    %v1387 = vmul.f32 %v409, %v1355
    %v1388 = vmul.f32 %v410, %v1356
    %v1389 = vmul.f32 %v411, %v1357
    %v1390 = vmul.f32 %v412, %v1358
    %v1391 = vmul.f32 %v413, %v1359
    %v1392 = vmul.f32 %v414, %v1360
    %v1393 = vmul.f32 %v415, %v1361
    %v1394 = vmul.f32 %v416, %v1362
    %1395 = vmatpush.msra.mxu0 %v816
    %1396 = vmatpush.msra.mxu0 %v815
    %1397 = vmatpush.msra.mxu0 %v814
    %1398 = vmatpush.msra.mxu0 %v813
    %1399 = vmatpush.msra.mxu0 %v812
    %1400 = vmatpush.msra.mxu0 %v811
    %1401 = vmatpush.msra.mxu0 %v810
    %1402 = vmatpush.msra.mxu0 %v809
    %1403 = vmatpush.msra.mxu0 %v808
    %1404 = vmatpush.msra.mxu0 %v807
    %1405 = vmatpush.msra.mxu0 %v806
    %1406 = vmatpush.msra.mxu0 %v805
    %1407 = vmatpush.msra.mxu0 %v804
    %1408 = vmatpush.msra.mxu0 %v803
    %1409 = vmatpush.msra.mxu0 %v802
    %1410 = vmatpush.msra.mxu0 %v801
    %1411 = vmatmul.f32.gmra.mxu0 %v1235
    %v1412 = vpop.f32.mrf.mxu0
    %v1413 = vadd.f32 0.0, %v1412
    %1414 = vmatmul.f32.gmra.mxu0 %v1236
    %v1415 = vpop.f32.mrf.mxu0
    %v1416 = vadd.f32 0.0, %v1415
    %1417 = vmatmul.f32.gmra.mxu0 %v1237
    %v1418 = vpop.f32.mrf.mxu0
    %v1419 = vadd.f32 0.0, %v1418
    %1420 = vmatmul.f32.gmra.mxu0 %v1238
    %v1421 = vpop.f32.mrf.mxu0
    %v1422 = vadd.f32 0.0, %v1421
    %1423 = vmatmul.f32.gmra.mxu0 %v1239
    %v1424 = vpop.f32.mrf.mxu0
    %v1425 = vadd.f32 0.0, %v1424
    %1426 = vmatmul.f32.gmra.mxu0 %v1240
    %v1427 = vpop.f32.mrf.mxu0
    %v1428 = vadd.f32 0.0, %v1427
    %1429 = vmatmul.f32.gmra.mxu0 %v1241
    %v1430 = vpop.f32.mrf.mxu0
    %v1431 = vadd.f32 0.0, %v1430
    %1432 = vmatmul.f32.gmra.mxu0 %v1242
    %v1433 = vpop.f32.mrf.mxu0
    %v1434 = vadd.f32 0.0, %v1433
    %1435 = vmatmul.f32.gmra.mxu0 %v1243
    %v1436 = vpop.f32.mrf.mxu0
    %v1437 = vadd.f32 0.0, %v1436
    %1438 = vmatmul.f32.gmra.mxu0 %v1244
    %v1439 = vpop.f32.mrf.mxu0
    %v1440 = vadd.f32 0.0, %v1439
    %1441 = vmatmul.f32.gmra.mxu0 %v1245
    %v1442 = vpop.f32.mrf.mxu0
    %v1443 = vadd.f32 0.0, %v1442
    %1444 = vmatmul.f32.gmra.mxu0 %v1246
    %v1445 = vpop.f32.mrf.mxu0
    %v1446 = vadd.f32 0.0, %v1445
    %1447 = vmatmul.f32.gmra.mxu0 %v1247
    %v1448 = vpop.f32.mrf.mxu0
    %v1449 = vadd.f32 0.0, %v1448
    %1450 = vmatmul.f32.gmra.mxu0 %v1248
    %v1451 = vpop.f32.mrf.mxu0
    %v1452 = vadd.f32 0.0, %v1451
    %1453 = vmatmul.f32.gmra.mxu0 %v1249
    %v1454 = vpop.f32.mrf.mxu0
    %v1455 = vadd.f32 0.0, %v1454
    %1456 = vmatmul.f32.gmra.mxu0 %v1250
    %v1457 = vpop.f32.mrf.mxu0
    %v1458 = vadd.f32 0.0, %v1457
    %1459 = vdwg.mxu0
    %v1460 = vsub.f32 1.0, %v1347
    %v1461 = vsub.f32 1.0, %v1348
    %v1462 = vsub.f32 1.0, %v1349
    %v1463 = vsub.f32 1.0, %v1350
    %v1464 = vsub.f32 1.0, %v1351
    %v1465 = vsub.f32 1.0, %v1352
    %v1466 = vsub.f32 1.0, %v1353
    %v1467 = vsub.f32 1.0, %v1354
    %v1468 = vsub.f32 1.0, %v1355
    %v1469 = vsub.f32 1.0, %v1356
    %v1470 = vsub.f32 1.0, %v1357
    %v1471 = vsub.f32 1.0, %v1358
    %v1472 = vsub.f32 1.0, %v1359
    %v1473 = vsub.f32 1.0, %v1360
    %v1474 = vsub.f32 1.0, %v1361
    %v1475 = vsub.f32 1.0, %v1362
    %v1476 = vmul.f32 %v1413, %v1460
    %v1477 = vmul.f32 %v1416, %v1461
    %v1478 = vmul.f32 %v1419, %v1462
    %v1479 = vmul.f32 %v1422, %v1463
    %v1480 = vmul.f32 %v1425, %v1464
    %v1481 = vmul.f32 %v1428, %v1465
    %v1482 = vmul.f32 %v1431, %v1466
    %v1483 = vmul.f32 %v1434, %v1467
    %v1484 = vmul.f32 %v1437, %v1468
    %v1485 = vmul.f32 %v1440, %v1469
    %v1486 = vmul.f32 %v1443, %v1470
    %v1487 = vmul.f32 %v1446, %v1471
    %v1488 = vmul.f32 %v1449, %v1472
    %v1489 = vmul.f32 %v1452, %v1473
    %v1490 = vmul.f32 %v1455, %v1474
    %v1491 = vmul.f32 %v1458, %v1475
    %v1492 = vadd.f32 %v1379, %v1476
    %v1493 = vadd.f32 %v1380, %v1477
    %v1494 = vadd.f32 %v1381, %v1478
    %v1495 = vadd.f32 %v1382, %v1479
    %v1496 = vadd.f32 %v1383, %v1480
    %v1497 = vadd.f32 %v1384, %v1481
    %v1498 = vadd.f32 %v1385, %v1482
    %v1499 = vadd.f32 %v1386, %v1483
    %v1500 = vadd.f32 %v1387, %v1484
    %v1501 = vadd.f32 %v1388, %v1485
    %v1502 = vadd.f32 %v1389, %v1486
    %v1503 = vadd.f32 %v1390, %v1487
    %v1504 = vadd.f32 %v1391, %v1488
    %v1505 = vadd.f32 %v1392, %v1489
    %v1506 = vadd.f32 %v1393, %v1490
    %v1507 = vadd.f32 %v1394, %v1491
    %v1508 = vmul.f32 %v572, %v1347
    %v1509 = vmul.f32 %v584, %v1348
    %v1510 = vmul.f32 %v596, %v1349
    %v1511 = vmul.f32 %v608, %v1350
    %v1512 = vmul.f32 %v620, %v1351
    %v1513 = vmul.f32 %v632, %v1352
    %v1514 = vmul.f32 %v644, %v1353
    %v1515 = vmul.f32 %v656, %v1354
    %v1516 = vmul.f32 %v668, %v1355
    %v1517 = vmul.f32 %v680, %v1356
    %v1518 = vmul.f32 %v692, %v1357
    %v1519 = vmul.f32 %v704, %v1358
    %v1520 = vmul.f32 %v716, %v1359
    %v1521 = vmul.f32 %v728, %v1360
    %v1522 = vmul.f32 %v740, %v1361
    %v1523 = vmul.f32 %v752, %v1362
    %1524 = vmatpush.msra.mxu0 %v1152
    %1525 = vmatpush.msra.mxu0 %v1140
    %1526 = vmatpush.msra.mxu0 %v1128
    %1527 = vmatpush.msra.mxu0 %v1116
    %1528 = vmatpush.msra.mxu0 %v1104
    %1529 = vmatpush.msra.mxu0 %v1092
    %1530 = vmatpush.msra.mxu0 %v1080
    %1531 = vmatpush.msra.mxu0 %v1068
    %1532 = vmatpush.msra.mxu0 %v1056
    %1533 = vmatpush.msra.mxu0 %v1044
    %1534 = vmatpush.msra.mxu0 %v1032
    %1535 = vmatpush.msra.mxu0 %v1020
    %1536 = vmatpush.msra.mxu0 %v1008
    %1537 = vmatpush.msra.mxu0 %v996
    %1538 = vmatpush.msra.mxu0 %v984
    %1539 = vmatpush.msra.mxu0 %v972
    %1540 = vmatmul.f32.gmra.mxu0 %v1235
    %v1541 = vpop.f32.mrf.mxu0
    %v1542 = vadd.f32 0.0, %v1541
    %1543 = vmatmul.f32.gmra.mxu0 %v1236
    %v1544 = vpop.f32.mrf.mxu0
    %v1545 = vadd.f32 0.0, %v1544
    %1546 = vmatmul.f32.gmra.mxu0 %v1237
    %v1547 = vpop.f32.mrf.mxu0
    %v1548 = vadd.f32 0.0, %v1547
    %1549 = vmatmul.f32.gmra.mxu0 %v1238
    %v1550 = vpop.f32.mrf.mxu0
    %v1551 = vadd.f32 0.0, %v1550
    %1552 = vmatmul.f32.gmra.mxu0 %v1239
    %v1553 = vpop.f32.mrf.mxu0
    %v1554 = vadd.f32 0.0, %v1553
    %1555 = vmatmul.f32.gmra.mxu0 %v1240
    %v1556 = vpop.f32.mrf.mxu0
    %v1557 = vadd.f32 0.0, %v1556
    %1558 = vmatmul.f32.gmra.mxu0 %v1241
    %v1559 = vpop.f32.mrf.mxu0
    %v1560 = vadd.f32 0.0, %v1559
    %1561 = vmatmul.f32.gmra.mxu0 %v1242
    %v1562 = vpop.f32.mrf.mxu0
    %v1563 = vadd.f32 0.0, %v1562
    %1564 = vmatmul.f32.gmra.mxu0 %v1243
    %v1565 = vpop.f32.mrf.mxu0
    %v1566 = vadd.f32 0.0, %v1565
    %1567 = vmatmul.f32.gmra.mxu0 %v1244
    %v1568 = vpop.f32.mrf.mxu0
    %v1569 = vadd.f32 0.0, %v1568
    %1570 = vmatmul.f32.gmra.mxu0 %v1245
    %v1571 = vpop.f32.mrf.mxu0
    %v1572 = vadd.f32 0.0, %v1571
    %1573 = vmatmul.f32.gmra.mxu0 %v1246
    %v1574 = vpop.f32.mrf.mxu0
    %v1575 = vadd.f32 0.0, %v1574
    %1576 = vmatmul.f32.gmra.mxu0 %v1247
    %v1577 = vpop.f32.mrf.mxu0
    %v1578 = vadd.f32 0.0, %v1577
    %1579 = vmatmul.f32.gmra.mxu0 %v1248
    %v1580 = vpop.f32.mrf.mxu0
    %v1581 = vadd.f32 0.0, %v1580
    %1582 = vmatmul.f32.gmra.mxu0 %v1249
    %v1583 = vpop.f32.mrf.mxu0
    %v1584 = vadd.f32 0.0, %v1583
    %1585 = vmatmul.f32.gmra.mxu0 %v1250
    %v1586 = vpop.f32.mrf.mxu0
    %v1587 = vadd.f32 0.0, %v1586
    %1588 = vdwg.mxu0
    %v1589 = vmul.f32 %v1542, %v1460
    %v1590 = vmul.f32 %v1545, %v1461
    %v1591 = vmul.f32 %v1548, %v1462
    %v1592 = vmul.f32 %v1551, %v1463
    %v1593 = vmul.f32 %v1554, %v1464
    %v1594 = vmul.f32 %v1557, %v1465
    %v1595 = vmul.f32 %v1560, %v1466
    %v1596 = vmul.f32 %v1563, %v1467
    %v1597 = vmul.f32 %v1566, %v1468
    %v1598 = vmul.f32 %v1569, %v1469
    %v1599 = vmul.f32 %v1572, %v1470
    %v1600 = vmul.f32 %v1575, %v1471
    %v1601 = vmul.f32 %v1578, %v1472
    %v1602 = vmul.f32 %v1581, %v1473
    %v1603 = vmul.f32 %v1584, %v1474
    %v1604 = vmul.f32 %v1587, %v1475
    %v1605 = vadd.f32 %v1508, %v1589
    %v1606 = vadd.f32 %v1509, %v1590
    %v1607 = vadd.f32 %v1510, %v1591
    %v1608 = vadd.f32 %v1511, %v1592
    %v1609 = vadd.f32 %v1512, %v1593
    %v1610 = vadd.f32 %v1513, %v1594
    %v1611 = vadd.f32 %v1514, %v1595
    %v1612 = vadd.f32 %v1515, %v1596
    %v1613 = vadd.f32 %v1516, %v1597
    %v1614 = vadd.f32 %v1517, %v1598
    %v1615 = vadd.f32 %v1518, %v1599
    %v1616 = vadd.f32 %v1519, %v1600
    %v1617 = vadd.f32 %v1520, %v1601
    %v1618 = vadd.f32 %v1521, %v1602
    %v1619 = vadd.f32 %v1522, %v1603
    %v1620 = vadd.f32 %v1523, %v1604
    %v1621 = vmul.f32 %v801, %v1363
    %v1622 = vmul.f32 %v802, %v1364
    %v1623 = vmul.f32 %v803, %v1365
    %v1624 = vmul.f32 %v804, %v1366
    %v1625 = vmul.f32 %v805, %v1367
    %v1626 = vmul.f32 %v806, %v1368
    %v1627 = vmul.f32 %v807, %v1369
    %v1628 = vmul.f32 %v808, %v1370
    %v1629 = vmul.f32 %v809, %v1371
    %v1630 = vmul.f32 %v810, %v1372
    %v1631 = vmul.f32 %v811, %v1373
    %v1632 = vmul.f32 %v812, %v1374
    %v1633 = vmul.f32 %v813, %v1375
    %v1634 = vmul.f32 %v814, %v1376
    %v1635 = vmul.f32 %v815, %v1377
    %v1636 = vmul.f32 %v816, %v1378
    %1637 = vmatpush.msra.mxu0 %v416
    %1638 = vmatpush.msra.mxu0 %v415
    %1639 = vmatpush.msra.mxu0 %v414
    %1640 = vmatpush.msra.mxu0 %v413
    %1641 = vmatpush.msra.mxu0 %v412
    %1642 = vmatpush.msra.mxu0 %v411
    %1643 = vmatpush.msra.mxu0 %v410
    %1644 = vmatpush.msra.mxu0 %v409
    %1645 = vmatpush.msra.mxu0 %v408
    %1646 = vmatpush.msra.mxu0 %v407
    %1647 = vmatpush.msra.mxu0 %v406
    %1648 = vmatpush.msra.mxu0 %v405
    %1649 = vmatpush.msra.mxu0 %v404
    %1650 = vmatpush.msra.mxu0 %v403
    %1651 = vmatpush.msra.mxu0 %v402
    %1652 = vmatpush.msra.mxu0 %v401
    %1653 = vmatmul.f32.gmra.mxu0 %v1331
    %v1654 = vpop.f32.mrf.mxu0
    %v1655 = vadd.f32 0.0, %v1654
    %1656 = vmatmul.f32.gmra.mxu0 %v1332
    %v1657 = vpop.f32.mrf.mxu0
    %v1658 = vadd.f32 0.0, %v1657
    %1659 = vmatmul.f32.gmra.mxu0 %v1333
    %v1660 = vpop.f32.mrf.mxu0
    %v1661 = vadd.f32 0.0, %v1660
    %1662 = vmatmul.f32.gmra.mxu0 %v1334
    %v1663 = vpop.f32.mrf.mxu0
    %v1664 = vadd.f32 0.0, %v1663
    %1665 = vmatmul.f32.gmra.mxu0 %v1335
    %v1666 = vpop.f32.mrf.mxu0
    %v1667 = vadd.f32 0.0, %v1666
    %1668 = vmatmul.f32.gmra.mxu0 %v1336
    %v1669 = vpop.f32.mrf.mxu0
    %v1670 = vadd.f32 0.0, %v1669
    %1671 = vmatmul.f32.gmra.mxu0 %v1337
    %v1672 = vpop.f32.mrf.mxu0
    %v1673 = vadd.f32 0.0, %v1672
    %1674 = vmatmul.f32.gmra.mxu0 %v1338
    %v1675 = vpop.f32.mrf.mxu0
    %v1676 = vadd.f32 0.0, %v1675
    %1677 = vmatmul.f32.gmra.mxu0 %v1339
    %v1678 = vpop.f32.mrf.mxu0
    %v1679 = vadd.f32 0.0, %v1678
    %1680 = vmatmul.f32.gmra.mxu0 %v1340
    %v1681 = vpop.f32.mrf.mxu0
    %v1682 = vadd.f32 0.0, %v1681
    %1683 = vmatmul.f32.gmra.mxu0 %v1341
    %v1684 = vpop.f32.mrf.mxu0
    %v1685 = vadd.f32 0.0, %v1684
    %1686 = vmatmul.f32.gmra.mxu0 %v1342
    %v1687 = vpop.f32.mrf.mxu0
    %v1688 = vadd.f32 0.0, %v1687
    %1689 = vmatmul.f32.gmra.mxu0 %v1343
    %v1690 = vpop.f32.mrf.mxu0
    %v1691 = vadd.f32 0.0, %v1690
    %1692 = vmatmul.f32.gmra.mxu0 %v1344
    %v1693 = vpop.f32.mrf.mxu0
    %v1694 = vadd.f32 0.0, %v1693
    %1695 = vmatmul.f32.gmra.mxu0 %v1345
    %v1696 = vpop.f32.mrf.mxu0
    %v1697 = vadd.f32 0.0, %v1696
    %1698 = vmatmul.f32.gmra.mxu0 %v1346
    %v1699 = vpop.f32.mrf.mxu0
    %v1700 = vadd.f32 0.0, %v1699
    %1701 = vdwg.mxu0
    %v1702 = vsub.f32 1.0, %v1363
    %v1703 = vsub.f32 1.0, %v1364
    %v1704 = vsub.f32 1.0, %v1365
    %v1705 = vsub.f32 1.0, %v1366
    %v1706 = vsub.f32 1.0, %v1367
    %v1707 = vsub.f32 1.0, %v1368
    %v1708 = vsub.f32 1.0, %v1369
    %v1709 = vsub.f32 1.0, %v1370
    %v1710 = vsub.f32 1.0, %v1371
    %v1711 = vsub.f32 1.0, %v1372
    %v1712 = vsub.f32 1.0, %v1373
    %v1713 = vsub.f32 1.0, %v1374
    %v1714 = vsub.f32 1.0, %v1375
    %v1715 = vsub.f32 1.0, %v1376
    %v1716 = vsub.f32 1.0, %v1377
    %v1717 = vsub.f32 1.0, %v1378
    %v1718 = vmul.f32 %v1655, %v1702
    %v1719 = vmul.f32 %v1658, %v1703
    %v1720 = vmul.f32 %v1661, %v1704
    %v1721 = vmul.f32 %v1664, %v1705
    %v1722 = vmul.f32 %v1667, %v1706
    %v1723 = vmul.f32 %v1670, %v1707
    %v1724 = vmul.f32 %v1673, %v1708
    %v1725 = vmul.f32 %v1676, %v1709
    %v1726 = vmul.f32 %v1679, %v1710
    %v1727 = vmul.f32 %v1682, %v1711
    %v1728 = vmul.f32 %v1685, %v1712
    %v1729 = vmul.f32 %v1688, %v1713
    %v1730 = vmul.f32 %v1691, %v1714
    %v1731 = vmul.f32 %v1694, %v1715
    %v1732 = vmul.f32 %v1697, %v1716
    %v1733 = vmul.f32 %v1700, %v1717
    %v1734 = vadd.f32 %v1621, %v1718
    %v1735 = vadd.f32 %v1622, %v1719
    %v1736 = vadd.f32 %v1623, %v1720
    %v1737 = vadd.f32 %v1624, %v1721
    %v1738 = vadd.f32 %v1625, %v1722
    %v1739 = vadd.f32 %v1626, %v1723
    %v1740 = vadd.f32 %v1627, %v1724
    %v1741 = vadd.f32 %v1628, %v1725
    %v1742 = vadd.f32 %v1629, %v1726
    %v1743 = vadd.f32 %v1630, %v1727
    %v1744 = vadd.f32 %v1631, %v1728
    %v1745 = vadd.f32 %v1632, %v1729
    %v1746 = vadd.f32 %v1633, %v1730
    %v1747 = vadd.f32 %v1634, %v1731
    %v1748 = vadd.f32 %v1635, %v1732
    %v1749 = vadd.f32 %v1636, %v1733
    %v1750 = vmul.f32 %v972, %v1363
    %v1751 = vmul.f32 %v984, %v1364
    %v1752 = vmul.f32 %v996, %v1365
    %v1753 = vmul.f32 %v1008, %v1366
    %v1754 = vmul.f32 %v1020, %v1367
    %v1755 = vmul.f32 %v1032, %v1368
    %v1756 = vmul.f32 %v1044, %v1369
    %v1757 = vmul.f32 %v1056, %v1370
    %v1758 = vmul.f32 %v1068, %v1371
    %v1759 = vmul.f32 %v1080, %v1372
    %v1760 = vmul.f32 %v1092, %v1373
    %v1761 = vmul.f32 %v1104, %v1374
    %v1762 = vmul.f32 %v1116, %v1375
    %v1763 = vmul.f32 %v1128, %v1376
    %v1764 = vmul.f32 %v1140, %v1377
    %v1765 = vmul.f32 %v1152, %v1378
    %1766 = vmatpush.msra.mxu0 %v752
    %1767 = vmatpush.msra.mxu0 %v740
    %1768 = vmatpush.msra.mxu0 %v728
    %1769 = vmatpush.msra.mxu0 %v716
    %1770 = vmatpush.msra.mxu0 %v704
    %1771 = vmatpush.msra.mxu0 %v692
    %1772 = vmatpush.msra.mxu0 %v680
    %1773 = vmatpush.msra.mxu0 %v668
    %1774 = vmatpush.msra.mxu0 %v656
    %1775 = vmatpush.msra.mxu0 %v644
    %1776 = vmatpush.msra.mxu0 %v632
    %1777 = vmatpush.msra.mxu0 %v620
    %1778 = vmatpush.msra.mxu0 %v608
    %1779 = vmatpush.msra.mxu0 %v596
    %1780 = vmatpush.msra.mxu0 %v584
    %1781 = vmatpush.msra.mxu0 %v572
    %1782 = vmatmul.f32.gmra.mxu0 %v1331
    %v1783 = vpop.f32.mrf.mxu0
    %v1784 = vadd.f32 0.0, %v1783
    %1785 = vmatmul.f32.gmra.mxu0 %v1332
    %v1786 = vpop.f32.mrf.mxu0
    %v1787 = vadd.f32 0.0, %v1786
    %1788 = vmatmul.f32.gmra.mxu0 %v1333
    %v1789 = vpop.f32.mrf.mxu0
    %v1790 = vadd.f32 0.0, %v1789
    %1791 = vmatmul.f32.gmra.mxu0 %v1334
    %v1792 = vpop.f32.mrf.mxu0
    %v1793 = vadd.f32 0.0, %v1792
    %1794 = vmatmul.f32.gmra.mxu0 %v1335
    %v1795 = vpop.f32.mrf.mxu0
    %v1796 = vadd.f32 0.0, %v1795
    %1797 = vmatmul.f32.gmra.mxu0 %v1336
    %v1798 = vpop.f32.mrf.mxu0
    %v1799 = vadd.f32 0.0, %v1798
    %1800 = vmatmul.f32.gmra.mxu0 %v1337
    %v1801 = vpop.f32.mrf.mxu0
    %v1802 = vadd.f32 0.0, %v1801
    %1803 = vmatmul.f32.gmra.mxu0 %v1338
    %v1804 = vpop.f32.mrf.mxu0
    %v1805 = vadd.f32 0.0, %v1804
    %1806 = vmatmul.f32.gmra.mxu0 %v1339
    %v1807 = vpop.f32.mrf.mxu0
    %v1808 = vadd.f32 0.0, %v1807
    %1809 = vmatmul.f32.gmra.mxu0 %v1340
    %v1810 = vpop.f32.mrf.mxu0
    %v1811 = vadd.f32 0.0, %v1810
    %1812 = vmatmul.f32.gmra.mxu0 %v1341
    %v1813 = vpop.f32.mrf.mxu0
    %v1814 = vadd.f32 0.0, %v1813
    %1815 = vmatmul.f32.gmra.mxu0 %v1342
    %v1816 = vpop.f32.mrf.mxu0
    %v1817 = vadd.f32 0.0, %v1816
    %1818 = vmatmul.f32.gmra.mxu0 %v1343
    %v1819 = vpop.f32.mrf.mxu0
    %v1820 = vadd.f32 0.0, %v1819
    %1821 = vmatmul.f32.gmra.mxu0 %v1344
    %v1822 = vpop.f32.mrf.mxu0
    %v1823 = vadd.f32 0.0, %v1822
    %1824 = vmatmul.f32.gmra.mxu0 %v1345
    %v1825 = vpop.f32.mrf.mxu0
    %v1826 = vadd.f32 0.0, %v1825
    %1827 = vmatmul.f32.gmra.mxu0 %v1346
    %v1828 = vpop.f32.mrf.mxu0
    %v1829 = vadd.f32 0.0, %v1828
    %1830 = vdwg.mxu0
    %v1831 = vmul.f32 %v1784, %v1702
    %v1832 = vmul.f32 %v1787, %v1703
    %v1833 = vmul.f32 %v1790, %v1704
    %v1834 = vmul.f32 %v1793, %v1705
    %v1835 = vmul.f32 %v1796, %v1706
    %v1836 = vmul.f32 %v1799, %v1707
    %v1837 = vmul.f32 %v1802, %v1708
    %v1838 = vmul.f32 %v1805, %v1709
    %v1839 = vmul.f32 %v1808, %v1710
    %v1840 = vmul.f32 %v1811, %v1711
    %v1841 = vmul.f32 %v1814, %v1712
    %v1842 = vmul.f32 %v1817, %v1713
    %v1843 = vmul.f32 %v1820, %v1714
    %v1844 = vmul.f32 %v1823, %v1715
    %v1845 = vmul.f32 %v1826, %v1716
    %v1846 = vmul.f32 %v1829, %v1717
    %v1847 = vadd.f32 %v1750, %v1831
    %v1848 = vadd.f32 %v1751, %v1832
    %v1849 = vadd.f32 %v1752, %v1833
    %v1850 = vadd.f32 %v1753, %v1834
    %v1851 = vadd.f32 %v1754, %v1835
    %v1852 = vadd.f32 %v1755, %v1836
    %v1853 = vadd.f32 %v1756, %v1837
    %v1854 = vadd.f32 %v1757, %v1838
    %v1855 = vadd.f32 %v1758, %v1839
    %v1856 = vadd.f32 %v1759, %v1840
    %v1857 = vadd.f32 %v1760, %v1841
    %v1858 = vadd.f32 %v1761, %v1842
    %v1859 = vadd.f32 %v1762, %v1843
    %v1860 = vadd.f32 %v1763, %v1844
    %v1861 = vadd.f32 %v1764, %v1845
    %v1862 = vadd.f32 %v1765, %v1846
    %v1863 = vrcp.pop %v572
    %v1864 = vmul.f32 %v572, %v1863
    %v1865 = vsub.f32 1.0, %v1864
    %v1866 = vmul.f32 %v1863, %v1865
    %v1867 = vadd.f32 %v1863, %v1866
    %vm1868 = vweird.f32 %v572
    %vm1869 = vweird.f32 %v1863
    %vm1870 = vmor %vm1868, %vm1869
    %v1871 = vsel %vm1870, %v1863, %v1867
    %v1872 = vand.u32 2147483647, %v572
    %vm1873 = vcmp.eq.f32.partialorder %v1872, 8.507059e+37
    %v1874 = vand.u32 %v572, 2147483648
    %v1875 = vor.u32 1.1754944e-38, %v1874
    %v1876 = vsel %vm1873, %v1875, %v1871
    %v1877 = vmul.f32 %v1605, %v1876
    %v1878 = vrcp.pop %v584
    %v1879 = vmul.f32 %v584, %v1878
    %v1880 = vsub.f32 1.0, %v1879
    %v1881 = vmul.f32 %v1878, %v1880
    %v1882 = vadd.f32 %v1878, %v1881
    %vm1883 = vweird.f32 %v584
    %vm1884 = vweird.f32 %v1878
    %vm1885 = vmor %vm1883, %vm1884
    %v1886 = vsel %vm1885, %v1878, %v1882
    %v1887 = vand.u32 2147483647, %v584
    %vm1888 = vcmp.eq.f32.partialorder %v1887, 8.507059e+37
    %v1889 = vand.u32 %v584, 2147483648
    %v1890 = vor.u32 1.1754944e-38, %v1889
    %v1891 = vsel %vm1888, %v1890, %v1886
    %v1892 = vmul.f32 %v1606, %v1891
    %v1893 = vrcp.pop %v596
    %v1894 = vmul.f32 %v596, %v1893
    %v1895 = vsub.f32 1.0, %v1894
    %v1896 = vmul.f32 %v1893, %v1895
    %v1897 = vadd.f32 %v1893, %v1896
    %vm1898 = vweird.f32 %v596
    %vm1899 = vweird.f32 %v1893
    %vm1900 = vmor %vm1898, %vm1899
    %v1901 = vsel %vm1900, %v1893, %v1897
    %v1902 = vand.u32 2147483647, %v596
    %vm1903 = vcmp.eq.f32.partialorder %v1902, 8.507059e+37
    %v1904 = vand.u32 %v596, 2147483648
    %v1905 = vor.u32 1.1754944e-38, %v1904
    %v1906 = vsel %vm1903, %v1905, %v1901
    %v1907 = vmul.f32 %v1607, %v1906
    %v1908 = vrcp.pop %v608
    %v1909 = vmul.f32 %v608, %v1908
    %v1910 = vsub.f32 1.0, %v1909
    %v1911 = vmul.f32 %v1908, %v1910
    %v1912 = vadd.f32 %v1908, %v1911
    %vm1913 = vweird.f32 %v608
    %vm1914 = vweird.f32 %v1908
    %vm1915 = vmor %vm1913, %vm1914
    %v1916 = vsel %vm1915, %v1908, %v1912
    %v1917 = vand.u32 2147483647, %v608
    %vm1918 = vcmp.eq.f32.partialorder %v1917, 8.507059e+37
    %v1919 = vand.u32 %v608, 2147483648
    %v1920 = vor.u32 1.1754944e-38, %v1919
    %v1921 = vsel %vm1918, %v1920, %v1916
    %v1922 = vmul.f32 %v1608, %v1921
    %v1923 = vrcp.pop %v620
    %v1924 = vmul.f32 %v620, %v1923
    %v1925 = vsub.f32 1.0, %v1924
    %v1926 = vmul.f32 %v1923, %v1925
    %v1927 = vadd.f32 %v1923, %v1926
    %vm1928 = vweird.f32 %v620
    %vm1929 = vweird.f32 %v1923
    %vm1930 = vmor %vm1928, %vm1929
    %v1931 = vsel %vm1930, %v1923, %v1927
    %v1932 = vand.u32 2147483647, %v620
    %vm1933 = vcmp.eq.f32.partialorder %v1932, 8.507059e+37
    %v1934 = vand.u32 %v620, 2147483648
    %v1935 = vor.u32 1.1754944e-38, %v1934
    %v1936 = vsel %vm1933, %v1935, %v1931
    %v1937 = vmul.f32 %v1609, %v1936
    %v1938 = vrcp.pop %v632
    %v1939 = vmul.f32 %v632, %v1938
    %v1940 = vsub.f32 1.0, %v1939
    %v1941 = vmul.f32 %v1938, %v1940
    %v1942 = vadd.f32 %v1938, %v1941
    %vm1943 = vweird.f32 %v632
    %vm1944 = vweird.f32 %v1938
    %vm1945 = vmor %vm1943, %vm1944
    %v1946 = vsel %vm1945, %v1938, %v1942
    %v1947 = vand.u32 2147483647, %v632
    %vm1948 = vcmp.eq.f32.partialorder %v1947, 8.507059e+37
    %v1949 = vand.u32 %v632, 2147483648
    %v1950 = vor.u32 1.1754944e-38, %v1949
    %v1951 = vsel %vm1948, %v1950, %v1946
    %v1952 = vmul.f32 %v1610, %v1951
    %v1953 = vrcp.pop %v644
    %v1954 = vmul.f32 %v644, %v1953
    %v1955 = vsub.f32 1.0, %v1954
    %v1956 = vmul.f32 %v1953, %v1955
    %v1957 = vadd.f32 %v1953, %v1956
    %vm1958 = vweird.f32 %v644
    %vm1959 = vweird.f32 %v1953
    %vm1960 = vmor %vm1958, %vm1959
    %v1961 = vsel %vm1960, %v1953, %v1957
    %v1962 = vand.u32 2147483647, %v644
    %vm1963 = vcmp.eq.f32.partialorder %v1962, 8.507059e+37
    %v1964 = vand.u32 %v644, 2147483648
    %v1965 = vor.u32 1.1754944e-38, %v1964
    %v1966 = vsel %vm1963, %v1965, %v1961
    %v1967 = vmul.f32 %v1611, %v1966
    %v1968 = vrcp.pop %v656
    %v1969 = vmul.f32 %v656, %v1968
    %v1970 = vsub.f32 1.0, %v1969
    %v1971 = vmul.f32 %v1968, %v1970
    %v1972 = vadd.f32 %v1968, %v1971
    %vm1973 = vweird.f32 %v656
    %vm1974 = vweird.f32 %v1968
    %vm1975 = vmor %vm1973, %vm1974
    %v1976 = vsel %vm1975, %v1968, %v1972
    %v1977 = vand.u32 2147483647, %v656
    %vm1978 = vcmp.eq.f32.partialorder %v1977, 8.507059e+37
    %v1979 = vand.u32 %v656, 2147483648
    %v1980 = vor.u32 1.1754944e-38, %v1979
    %v1981 = vsel %vm1978, %v1980, %v1976
    %v1982 = vmul.f32 %v1612, %v1981
    %v1983 = vrcp.pop %v668
    %v1984 = vmul.f32 %v668, %v1983
    %v1985 = vsub.f32 1.0, %v1984
    %v1986 = vmul.f32 %v1983, %v1985
    %v1987 = vadd.f32 %v1983, %v1986
    %vm1988 = vweird.f32 %v668
    %vm1989 = vweird.f32 %v1983
    %vm1990 = vmor %vm1988, %vm1989
    %v1991 = vsel %vm1990, %v1983, %v1987
    %v1992 = vand.u32 2147483647, %v668
    %vm1993 = vcmp.eq.f32.partialorder %v1992, 8.507059e+37
    %v1994 = vand.u32 %v668, 2147483648
    %v1995 = vor.u32 1.1754944e-38, %v1994
    %v1996 = vsel %vm1993, %v1995, %v1991
    %v1997 = vmul.f32 %v1613, %v1996
    %v1998 = vrcp.pop %v680
    %v1999 = vmul.f32 %v680, %v1998
    %v2000 = vsub.f32 1.0, %v1999
    %v2001 = vmul.f32 %v1998, %v2000
    %v2002 = vadd.f32 %v1998, %v2001
    %vm2003 = vweird.f32 %v680
    %vm2004 = vweird.f32 %v1998
    %vm2005 = vmor %vm2003, %vm2004
    %v2006 = vsel %vm2005, %v1998, %v2002
    %v2007 = vand.u32 2147483647, %v680
    %vm2008 = vcmp.eq.f32.partialorder %v2007, 8.507059e+37
    %v2009 = vand.u32 %v680, 2147483648
    %v2010 = vor.u32 1.1754944e-38, %v2009
    %v2011 = vsel %vm2008, %v2010, %v2006
    %v2012 = vmul.f32 %v1614, %v2011
    %v2013 = vrcp.pop %v692
    %v2014 = vmul.f32 %v692, %v2013
    %v2015 = vsub.f32 1.0, %v2014
    %v2016 = vmul.f32 %v2013, %v2015
    %v2017 = vadd.f32 %v2013, %v2016
    %vm2018 = vweird.f32 %v692
    %vm2019 = vweird.f32 %v2013
    %vm2020 = vmor %vm2018, %vm2019
    %v2021 = vsel %vm2020, %v2013, %v2017
    %v2022 = vand.u32 2147483647, %v692
    %vm2023 = vcmp.eq.f32.partialorder %v2022, 8.507059e+37
    %v2024 = vand.u32 %v692, 2147483648
    %v2025 = vor.u32 1.1754944e-38, %v2024
    %v2026 = vsel %vm2023, %v2025, %v2021
    %v2027 = vmul.f32 %v1615, %v2026
    %v2028 = vrcp.pop %v704
    %v2029 = vmul.f32 %v704, %v2028
    %v2030 = vsub.f32 1.0, %v2029
    %v2031 = vmul.f32 %v2028, %v2030
    %v2032 = vadd.f32 %v2028, %v2031
    %vm2033 = vweird.f32 %v704
    %vm2034 = vweird.f32 %v2028
    %vm2035 = vmor %vm2033, %vm2034
    %v2036 = vsel %vm2035, %v2028, %v2032
    %v2037 = vand.u32 2147483647, %v704
    %vm2038 = vcmp.eq.f32.partialorder %v2037, 8.507059e+37
    %v2039 = vand.u32 %v704, 2147483648
    %v2040 = vor.u32 1.1754944e-38, %v2039
    %v2041 = vsel %vm2038, %v2040, %v2036
    %v2042 = vmul.f32 %v1616, %v2041
    %v2043 = vrcp.pop %v716
    %v2044 = vmul.f32 %v716, %v2043
    %v2045 = vsub.f32 1.0, %v2044
    %v2046 = vmul.f32 %v2043, %v2045
    %v2047 = vadd.f32 %v2043, %v2046
    %vm2048 = vweird.f32 %v716
    %vm2049 = vweird.f32 %v2043
    %vm2050 = vmor %vm2048, %vm2049
    %v2051 = vsel %vm2050, %v2043, %v2047
    %v2052 = vand.u32 2147483647, %v716
    %vm2053 = vcmp.eq.f32.partialorder %v2052, 8.507059e+37
    %v2054 = vand.u32 %v716, 2147483648
    %v2055 = vor.u32 1.1754944e-38, %v2054
    %v2056 = vsel %vm2053, %v2055, %v2051
    %v2057 = vmul.f32 %v1617, %v2056
    %v2058 = vrcp.pop %v728
    %v2059 = vmul.f32 %v728, %v2058
    %v2060 = vsub.f32 1.0, %v2059
    %v2061 = vmul.f32 %v2058, %v2060
    %v2062 = vadd.f32 %v2058, %v2061
    %vm2063 = vweird.f32 %v728
    %vm2064 = vweird.f32 %v2058
    %vm2065 = vmor %vm2063, %vm2064
    %v2066 = vsel %vm2065, %v2058, %v2062
    %v2067 = vand.u32 2147483647, %v728
    %vm2068 = vcmp.eq.f32.partialorder %v2067, 8.507059e+37
    %v2069 = vand.u32 %v728, 2147483648
    %v2070 = vor.u32 1.1754944e-38, %v2069
    %v2071 = vsel %vm2068, %v2070, %v2066
    %v2072 = vmul.f32 %v1618, %v2071
    %v2073 = vrcp.pop %v740
    %v2074 = vmul.f32 %v740, %v2073
    %v2075 = vsub.f32 1.0, %v2074
    %v2076 = vmul.f32 %v2073, %v2075
    %v2077 = vadd.f32 %v2073, %v2076
    %vm2078 = vweird.f32 %v740
    %vm2079 = vweird.f32 %v2073
    %vm2080 = vmor %vm2078, %vm2079
    %v2081 = vsel %vm2080, %v2073, %v2077
    %v2082 = vand.u32 2147483647, %v740
    %vm2083 = vcmp.eq.f32.partialorder %v2082, 8.507059e+37
    %v2084 = vand.u32 %v740, 2147483648
    %v2085 = vor.u32 1.1754944e-38, %v2084
    %v2086 = vsel %vm2083, %v2085, %v2081
    %v2087 = vmul.f32 %v1619, %v2086
    %v2088 = vrcp.pop %v752
    %v2089 = vmul.f32 %v752, %v2088
    %v2090 = vsub.f32 1.0, %v2089
    %v2091 = vmul.f32 %v2088, %v2090
    %v2092 = vadd.f32 %v2088, %v2091
    %vm2093 = vweird.f32 %v752
    %vm2094 = vweird.f32 %v2088
    %vm2095 = vmor %vm2093, %vm2094
    %v2096 = vsel %vm2095, %v2088, %v2092
    %v2097 = vand.u32 2147483647, %v752
    %vm2098 = vcmp.eq.f32.partialorder %v2097, 8.507059e+37
    %v2099 = vand.u32 %v752, 2147483648
    %v2100 = vor.u32 1.1754944e-38, %v2099
    %v2101 = vsel %vm2098, %v2100, %v2096
    %v2102 = vmul.f32 %v1620, %v2101
    %v2103 = vrcp.pop %v972
    %v2104 = vmul.f32 %v972, %v2103
    %v2105 = vsub.f32 1.0, %v2104
    %v2106 = vmul.f32 %v2103, %v2105
    %v2107 = vadd.f32 %v2103, %v2106
    %vm2108 = vweird.f32 %v972
    %vm2109 = vweird.f32 %v2103
    %vm2110 = vmor %vm2108, %vm2109
    %v2111 = vsel %vm2110, %v2103, %v2107
    %v2112 = vand.u32 2147483647, %v972
    %vm2113 = vcmp.eq.f32.partialorder %v2112, 8.507059e+37
    %v2114 = vand.u32 %v972, 2147483648
    %v2115 = vor.u32 1.1754944e-38, %v2114
    %v2116 = vsel %vm2113, %v2115, %v2111
    %v2117 = vmul.f32 %v1847, %v2116
    %v2118 = vrcp.pop %v984
    %v2119 = vmul.f32 %v984, %v2118
    %v2120 = vsub.f32 1.0, %v2119
    %v2121 = vmul.f32 %v2118, %v2120
    %v2122 = vadd.f32 %v2118, %v2121
    %vm2123 = vweird.f32 %v984
    %vm2124 = vweird.f32 %v2118
    %vm2125 = vmor %vm2123, %vm2124
    %v2126 = vsel %vm2125, %v2118, %v2122
    %v2127 = vand.u32 2147483647, %v984
    %vm2128 = vcmp.eq.f32.partialorder %v2127, 8.507059e+37
    %v2129 = vand.u32 %v984, 2147483648
    %v2130 = vor.u32 1.1754944e-38, %v2129
    %v2131 = vsel %vm2128, %v2130, %v2126
    %v2132 = vmul.f32 %v1848, %v2131
    %v2133 = vrcp.pop %v996
    %v2134 = vmul.f32 %v996, %v2133
    %v2135 = vsub.f32 1.0, %v2134
    %v2136 = vmul.f32 %v2133, %v2135
    %v2137 = vadd.f32 %v2133, %v2136
    %vm2138 = vweird.f32 %v996
    %vm2139 = vweird.f32 %v2133
    %vm2140 = vmor %vm2138, %vm2139
    %v2141 = vsel %vm2140, %v2133, %v2137
    %v2142 = vand.u32 2147483647, %v996
    %vm2143 = vcmp.eq.f32.partialorder %v2142, 8.507059e+37
    %v2144 = vand.u32 %v996, 2147483648
    %v2145 = vor.u32 1.1754944e-38, %v2144
    %v2146 = vsel %vm2143, %v2145, %v2141
    %v2147 = vmul.f32 %v1849, %v2146
    %v2148 = vrcp.pop %v1008
    %v2149 = vmul.f32 %v1008, %v2148
    %v2150 = vsub.f32 1.0, %v2149
    %v2151 = vmul.f32 %v2148, %v2150
    %v2152 = vadd.f32 %v2148, %v2151
    %vm2153 = vweird.f32 %v1008
    %vm2154 = vweird.f32 %v2148
    %vm2155 = vmor %vm2153, %vm2154
    %v2156 = vsel %vm2155, %v2148, %v2152
    %v2157 = vand.u32 2147483647, %v1008
    %vm2158 = vcmp.eq.f32.partialorder %v2157, 8.507059e+37
    %v2159 = vand.u32 %v1008, 2147483648
    %v2160 = vor.u32 1.1754944e-38, %v2159
    %v2161 = vsel %vm2158, %v2160, %v2156
    %v2162 = vmul.f32 %v1850, %v2161
    %v2163 = vrcp.pop %v1020
    %v2164 = vmul.f32 %v1020, %v2163
    %v2165 = vsub.f32 1.0, %v2164
    %v2166 = vmul.f32 %v2163, %v2165
    %v2167 = vadd.f32 %v2163, %v2166
    %vm2168 = vweird.f32 %v1020
    %vm2169 = vweird.f32 %v2163
    %vm2170 = vmor %vm2168, %vm2169
    %v2171 = vsel %vm2170, %v2163, %v2167
    %v2172 = vand.u32 2147483647, %v1020
    %vm2173 = vcmp.eq.f32.partialorder %v2172, 8.507059e+37
    %v2174 = vand.u32 %v1020, 2147483648
    %v2175 = vor.u32 1.1754944e-38, %v2174
    %v2176 = vsel %vm2173, %v2175, %v2171
    %v2177 = vmul.f32 %v1851, %v2176
    %v2178 = vrcp.pop %v1032
    %v2179 = vmul.f32 %v1032, %v2178
    %v2180 = vsub.f32 1.0, %v2179
    %v2181 = vmul.f32 %v2178, %v2180
    %v2182 = vadd.f32 %v2178, %v2181
    %vm2183 = vweird.f32 %v1032
    %vm2184 = vweird.f32 %v2178
    %vm2185 = vmor %vm2183, %vm2184
    %v2186 = vsel %vm2185, %v2178, %v2182
    %v2187 = vand.u32 2147483647, %v1032
    %vm2188 = vcmp.eq.f32.partialorder %v2187, 8.507059e+37
    %v2189 = vand.u32 %v1032, 2147483648
    %v2190 = vor.u32 1.1754944e-38, %v2189
    %v2191 = vsel %vm2188, %v2190, %v2186
    %v2192 = vmul.f32 %v1852, %v2191
    %v2193 = vrcp.pop %v1044
    %v2194 = vmul.f32 %v1044, %v2193
    %v2195 = vsub.f32 1.0, %v2194
    %v2196 = vmul.f32 %v2193, %v2195
    %v2197 = vadd.f32 %v2193, %v2196
    %vm2198 = vweird.f32 %v1044
    %vm2199 = vweird.f32 %v2193
    %vm2200 = vmor %vm2198, %vm2199
    %v2201 = vsel %vm2200, %v2193, %v2197
    %v2202 = vand.u32 2147483647, %v1044
    %vm2203 = vcmp.eq.f32.partialorder %v2202, 8.507059e+37
    %v2204 = vand.u32 %v1044, 2147483648
    %v2205 = vor.u32 1.1754944e-38, %v2204
    %v2206 = vsel %vm2203, %v2205, %v2201
    %v2207 = vmul.f32 %v1853, %v2206
    %v2208 = vrcp.pop %v1056
    %v2209 = vmul.f32 %v1056, %v2208
    %v2210 = vsub.f32 1.0, %v2209
    %v2211 = vmul.f32 %v2208, %v2210
    %v2212 = vadd.f32 %v2208, %v2211
    %vm2213 = vweird.f32 %v1056
    %vm2214 = vweird.f32 %v2208
    %vm2215 = vmor %vm2213, %vm2214
    %v2216 = vsel %vm2215, %v2208, %v2212
    %v2217 = vand.u32 2147483647, %v1056
    %vm2218 = vcmp.eq.f32.partialorder %v2217, 8.507059e+37
    %v2219 = vand.u32 %v1056, 2147483648
    %v2220 = vor.u32 1.1754944e-38, %v2219
    %v2221 = vsel %vm2218, %v2220, %v2216
    %v2222 = vmul.f32 %v1854, %v2221
    %v2223 = vrcp.pop %v1068
    %v2224 = vmul.f32 %v1068, %v2223
    %v2225 = vsub.f32 1.0, %v2224
    %v2226 = vmul.f32 %v2223, %v2225
    %v2227 = vadd.f32 %v2223, %v2226
    %vm2228 = vweird.f32 %v1068
    %vm2229 = vweird.f32 %v2223
    %vm2230 = vmor %vm2228, %vm2229
    %v2231 = vsel %vm2230, %v2223, %v2227
    %v2232 = vand.u32 2147483647, %v1068
    %vm2233 = vcmp.eq.f32.partialorder %v2232, 8.507059e+37
    %v2234 = vand.u32 %v1068, 2147483648
    %v2235 = vor.u32 1.1754944e-38, %v2234
    %v2236 = vsel %vm2233, %v2235, %v2231
    %v2237 = vmul.f32 %v1855, %v2236
    %v2238 = vrcp.pop %v1080
    %v2239 = vmul.f32 %v1080, %v2238
    %v2240 = vsub.f32 1.0, %v2239
    %v2241 = vmul.f32 %v2238, %v2240
    %v2242 = vadd.f32 %v2238, %v2241
    %vm2243 = vweird.f32 %v1080
    %vm2244 = vweird.f32 %v2238
    %vm2245 = vmor %vm2243, %vm2244
    %v2246 = vsel %vm2245, %v2238, %v2242
    %v2247 = vand.u32 2147483647, %v1080
    %vm2248 = vcmp.eq.f32.partialorder %v2247, 8.507059e+37
    %v2249 = vand.u32 %v1080, 2147483648
    %v2250 = vor.u32 1.1754944e-38, %v2249
    %v2251 = vsel %vm2248, %v2250, %v2246
    %v2252 = vmul.f32 %v1856, %v2251
    %v2253 = vrcp.pop %v1092
    %v2254 = vmul.f32 %v1092, %v2253
    %v2255 = vsub.f32 1.0, %v2254
    %v2256 = vmul.f32 %v2253, %v2255
    %v2257 = vadd.f32 %v2253, %v2256
    %vm2258 = vweird.f32 %v1092
    %vm2259 = vweird.f32 %v2253
    %vm2260 = vmor %vm2258, %vm2259
    %v2261 = vsel %vm2260, %v2253, %v2257
    %v2262 = vand.u32 2147483647, %v1092
    %vm2263 = vcmp.eq.f32.partialorder %v2262, 8.507059e+37
    %v2264 = vand.u32 %v1092, 2147483648
    %v2265 = vor.u32 1.1754944e-38, %v2264
    %v2266 = vsel %vm2263, %v2265, %v2261
    %v2267 = vmul.f32 %v1857, %v2266
    %v2268 = vrcp.pop %v1104
    %v2269 = vmul.f32 %v1104, %v2268
    %v2270 = vsub.f32 1.0, %v2269
    %v2271 = vmul.f32 %v2268, %v2270
    %v2272 = vadd.f32 %v2268, %v2271
    %vm2273 = vweird.f32 %v1104
    %vm2274 = vweird.f32 %v2268
    %vm2275 = vmor %vm2273, %vm2274
    %v2276 = vsel %vm2275, %v2268, %v2272
    %v2277 = vand.u32 2147483647, %v1104
    %vm2278 = vcmp.eq.f32.partialorder %v2277, 8.507059e+37
    %v2279 = vand.u32 %v1104, 2147483648
    %v2280 = vor.u32 1.1754944e-38, %v2279
    %v2281 = vsel %vm2278, %v2280, %v2276
    %v2282 = vmul.f32 %v1858, %v2281
    %v2283 = vrcp.pop %v1116
    %v2284 = vmul.f32 %v1116, %v2283
    %v2285 = vsub.f32 1.0, %v2284
    %v2286 = vmul.f32 %v2283, %v2285
    %v2287 = vadd.f32 %v2283, %v2286
    %vm2288 = vweird.f32 %v1116
    %vm2289 = vweird.f32 %v2283
    %vm2290 = vmor %vm2288, %vm2289
    %v2291 = vsel %vm2290, %v2283, %v2287
    %v2292 = vand.u32 2147483647, %v1116
    %vm2293 = vcmp.eq.f32.partialorder %v2292, 8.507059e+37
    %v2294 = vand.u32 %v1116, 2147483648
    %v2295 = vor.u32 1.1754944e-38, %v2294
    %v2296 = vsel %vm2293, %v2295, %v2291
    %v2297 = vmul.f32 %v1859, %v2296
    %v2298 = vrcp.pop %v1128
    %v2299 = vmul.f32 %v1128, %v2298
    %v2300 = vsub.f32 1.0, %v2299
    %v2301 = vmul.f32 %v2298, %v2300
    %v2302 = vadd.f32 %v2298, %v2301
    %vm2303 = vweird.f32 %v1128
    %vm2304 = vweird.f32 %v2298
    %vm2305 = vmor %vm2303, %vm2304
    %v2306 = vsel %vm2305, %v2298, %v2302
    %v2307 = vand.u32 2147483647, %v1128
    %vm2308 = vcmp.eq.f32.partialorder %v2307, 8.507059e+37
    %v2309 = vand.u32 %v1128, 2147483648
    %v2310 = vor.u32 1.1754944e-38, %v2309
    %v2311 = vsel %vm2308, %v2310, %v2306
    %v2312 = vmul.f32 %v1860, %v2311
    %v2313 = vrcp.pop %v1140
    %v2314 = vmul.f32 %v1140, %v2313
    %v2315 = vsub.f32 1.0, %v2314
    %v2316 = vmul.f32 %v2313, %v2315
    %v2317 = vadd.f32 %v2313, %v2316
    %vm2318 = vweird.f32 %v1140
    %vm2319 = vweird.f32 %v2313
    %vm2320 = vmor %vm2318, %vm2319
    %v2321 = vsel %vm2320, %v2313, %v2317
    %v2322 = vand.u32 2147483647, %v1140
    %vm2323 = vcmp.eq.f32.partialorder %v2322, 8.507059e+37
    %v2324 = vand.u32 %v1140, 2147483648
    %v2325 = vor.u32 1.1754944e-38, %v2324
    %v2326 = vsel %vm2323, %v2325, %v2321
    %v2327 = vmul.f32 %v1861, %v2326
    %v2328 = vrcp.pop %v1152
    %v2329 = vmul.f32 %v1152, %v2328
    %v2330 = vsub.f32 1.0, %v2329
    %v2331 = vmul.f32 %v2328, %v2330
    %v2332 = vadd.f32 %v2328, %v2331
    %vm2333 = vweird.f32 %v1152
    %vm2334 = vweird.f32 %v2328
    %vm2335 = vmor %vm2333, %vm2334
    %v2336 = vsel %vm2335, %v2328, %v2332
    %v2337 = vand.u32 2147483647, %v1152
    %vm2338 = vcmp.eq.f32.partialorder %v2337, 8.507059e+37
    %v2339 = vand.u32 %v1152, 2147483648
    %v2340 = vor.u32 1.1754944e-38, %v2339
    %v2341 = vsel %vm2338, %v2340, %v2336
    %v2342 = vmul.f32 %v1862, %v2341
    %v2343 = vmul.f32 %v401, %v1877
    %v2344 = vmul.f32 %v402, %v1892
    %v2345 = vmul.f32 %v403, %v1907
    %v2346 = vmul.f32 %v404, %v1922
    %v2347 = vmul.f32 %v405, %v1937
    %v2348 = vmul.f32 %v406, %v1952
    %v2349 = vmul.f32 %v407, %v1967
    %v2350 = vmul.f32 %v408, %v1982
    %v2351 = vmul.f32 %v409, %v1997
    %v2352 = vmul.f32 %v410, %v2012
    %v2353 = vmul.f32 %v411, %v2027
    %v2354 = vmul.f32 %v412, %v2042
    %v2355 = vmul.f32 %v413, %v2057
    %v2356 = vmul.f32 %v414, %v2072
    %v2357 = vmul.f32 %v415, %v2087
    %v2358 = vmul.f32 %v416, %v2102
    %v2359 = vsub.f32 %v1492, %v2343
    %v2360 = vsub.f32 %v1493, %v2344
    %v2361 = vsub.f32 %v1494, %v2345
    %v2362 = vsub.f32 %v1495, %v2346
    %v2363 = vsub.f32 %v1496, %v2347
    %v2364 = vsub.f32 %v1497, %v2348
    %v2365 = vsub.f32 %v1498, %v2349
    %v2366 = vsub.f32 %v1499, %v2350
    %v2367 = vsub.f32 %v1500, %v2351
    %v2368 = vsub.f32 %v1501, %v2352
    %v2369 = vsub.f32 %v1502, %v2353
    %v2370 = vsub.f32 %v1503, %v2354
    %v2371 = vsub.f32 %v1504, %v2355
    %v2372 = vsub.f32 %v1505, %v2356
    %v2373 = vsub.f32 %v1506, %v2357
    %v2374 = vsub.f32 %v1507, %v2358
    %v2375 = vmul.f32 %v801, %v2117
    %v2376 = vmul.f32 %v802, %v2132
    %v2377 = vmul.f32 %v803, %v2147
    %v2378 = vmul.f32 %v804, %v2162
    %v2379 = vmul.f32 %v805, %v2177
    %v2380 = vmul.f32 %v806, %v2192
    %v2381 = vmul.f32 %v807, %v2207
    %v2382 = vmul.f32 %v808, %v2222
    %v2383 = vmul.f32 %v809, %v2237
    %v2384 = vmul.f32 %v810, %v2252
    %v2385 = vmul.f32 %v811, %v2267
    %v2386 = vmul.f32 %v812, %v2282
    %v2387 = vmul.f32 %v813, %v2297
    %v2388 = vmul.f32 %v814, %v2312
    %v2389 = vmul.f32 %v815, %v2327
    %v2390 = vmul.f32 %v816, %v2342
    %v2391 = vsub.f32 %v1734, %v2375
    %v2392 = vsub.f32 %v1735, %v2376
    %v2393 = vsub.f32 %v1736, %v2377
    %v2394 = vsub.f32 %v1737, %v2378
    %v2395 = vsub.f32 %v1738, %v2379
    %v2396 = vsub.f32 %v1739, %v2380
    %v2397 = vsub.f32 %v1740, %v2381
    %v2398 = vsub.f32 %v1741, %v2382
    %v2399 = vsub.f32 %v1742, %v2383
    %v2400 = vsub.f32 %v1743, %v2384
    %v2401 = vsub.f32 %v1744, %v2385
    %v2402 = vsub.f32 %v1745, %v2386
    %v2403 = vsub.f32 %v1746, %v2387
    %v2404 = vsub.f32 %v1747, %v2388
    %v2405 = vsub.f32 %v1748, %v2389
    %v2406 = vsub.f32 %v1749, %v2390
    %2408 = vset.pattern.permute.xlu0 0
    %2409 = vperm.xlu0 %2408, %v1877
    %v2410 = vpop.permute.xlu0 %2409
    %2413 = vset.pattern.permute.xlu0 0
    %2414 = vperm.xlu0 %2413, %v1892
    %v2415 = vpop.permute.xlu0 %2414
    %2418 = vset.pattern.permute.xlu0 0
    %2419 = vperm.xlu0 %2418, %v1907
    %v2420 = vpop.permute.xlu0 %2419
    %2423 = vset.pattern.permute.xlu0 0
    %2424 = vperm.xlu0 %2423, %v1922
    %v2425 = vpop.permute.xlu0 %2424
    %2428 = vset.pattern.permute.xlu0 0
    %2429 = vperm.xlu0 %2428, %v1937
    %v2430 = vpop.permute.xlu0 %2429
    %2433 = vset.pattern.permute.xlu0 0
    %2434 = vperm.xlu0 %2433, %v1952
    %v2435 = vpop.permute.xlu0 %2434
    %2438 = vset.pattern.permute.xlu0 0
    %2439 = vperm.xlu0 %2438, %v1967
    %v2440 = vpop.permute.xlu0 %2439
    %2443 = vset.pattern.permute.xlu0 0
    %2444 = vperm.xlu0 %2443, %v1982
    %v2445 = vpop.permute.xlu0 %2444
    %2448 = vset.pattern.permute.xlu0 0
    %2449 = vperm.xlu0 %2448, %v1997
    %v2450 = vpop.permute.xlu0 %2449
    %2453 = vset.pattern.permute.xlu0 0
    %2454 = vperm.xlu0 %2453, %v2012
    %v2455 = vpop.permute.xlu0 %2454
    %2458 = vset.pattern.permute.xlu0 0
    %2459 = vperm.xlu0 %2458, %v2027
    %v2460 = vpop.permute.xlu0 %2459
    %2463 = vset.pattern.permute.xlu0 0
    %2464 = vperm.xlu0 %2463, %v2042
    %v2465 = vpop.permute.xlu0 %2464
    %2468 = vset.pattern.permute.xlu0 0
    %2469 = vperm.xlu0 %2468, %v2057
    %v2470 = vpop.permute.xlu0 %2469
    %2473 = vset.pattern.permute.xlu0 0
    %2474 = vperm.xlu0 %2473, %v2072
    %v2475 = vpop.permute.xlu0 %2474
    %2478 = vset.pattern.permute.xlu0 0
    %2479 = vperm.xlu0 %2478, %v2087
    %v2480 = vpop.permute.xlu0 %2479
    %2483 = vset.pattern.permute.xlu0 0
    %2484 = vperm.xlu0 %2483, %v2102
    %v2485 = vpop.permute.xlu0 %2484
    %v2487 = vmul.f32 %v161, %v2410
    %v2488 = vmul.f32 %v162, %v2410
    %v2489 = vmul.f32 %v163, %v2415
    %v2490 = vmul.f32 %v164, %v2415
    %v2491 = vmul.f32 %v165, %v2420
    %v2492 = vmul.f32 %v166, %v2420
    %v2493 = vmul.f32 %v167, %v2425
    %v2494 = vmul.f32 %v168, %v2425
    %v2495 = vmul.f32 %v169, %v2430
    %v2496 = vmul.f32 %v170, %v2430
    %v2497 = vmul.f32 %v171, %v2435
    %v2498 = vmul.f32 %v172, %v2435
    %v2499 = vmul.f32 %v173, %v2440
    %v2500 = vmul.f32 %v174, %v2440
    %v2501 = vmul.f32 %v175, %v2445
    %v2502 = vmul.f32 %v176, %v2445
    %v2503 = vmul.f32 %v177, %v2450
    %v2504 = vmul.f32 %v178, %v2450
    %v2505 = vmul.f32 %v179, %v2455
    %v2506 = vmul.f32 %v180, %v2455
    %v2507 = vmul.f32 %v181, %v2460
    %v2508 = vmul.f32 %v182, %v2460
    %v2509 = vmul.f32 %v183, %v2465
    %v2510 = vmul.f32 %v184, %v2465
    %v2511 = vmul.f32 %v185, %v2470
    %v2512 = vmul.f32 %v186, %v2470
    %v2513 = vmul.f32 %v187, %v2475
    %v2514 = vmul.f32 %v188, %v2475
    %v2515 = vmul.f32 %v189, %v2480
    %v2516 = vmul.f32 %v190, %v2480
    %v2517 = vmul.f32 %v191, %v2485
    %v2518 = vmul.f32 %v192, %v2485
    %2520 = vset.pattern.permute.xlu0 0
    %2521 = vperm.xlu0 %2520, %v2359
    %v2522 = vpop.permute.xlu0 %2521
    %2525 = vset.pattern.permute.xlu0 0
    %2526 = vperm.xlu0 %2525, %v2360
    %v2527 = vpop.permute.xlu0 %2526
    %2530 = vset.pattern.permute.xlu0 0
    %2531 = vperm.xlu0 %2530, %v2361
    %v2532 = vpop.permute.xlu0 %2531
    %2535 = vset.pattern.permute.xlu0 0
    %2536 = vperm.xlu0 %2535, %v2362
    %v2537 = vpop.permute.xlu0 %2536
    %2540 = vset.pattern.permute.xlu0 0
    %2541 = vperm.xlu0 %2540, %v2363
    %v2542 = vpop.permute.xlu0 %2541
    %2545 = vset.pattern.permute.xlu0 0
    %2546 = vperm.xlu0 %2545, %v2364
    %v2547 = vpop.permute.xlu0 %2546
    %2550 = vset.pattern.permute.xlu0 0
    %2551 = vperm.xlu0 %2550, %v2365
    %v2552 = vpop.permute.xlu0 %2551
    %2555 = vset.pattern.permute.xlu0 0
    %2556 = vperm.xlu0 %2555, %v2366
    %v2557 = vpop.permute.xlu0 %2556
    %2560 = vset.pattern.permute.xlu0 0
    %2561 = vperm.xlu0 %2560, %v2367
    %v2562 = vpop.permute.xlu0 %2561
    %2565 = vset.pattern.permute.xlu0 0
    %2566 = vperm.xlu0 %2565, %v2368
    %v2567 = vpop.permute.xlu0 %2566
    %2570 = vset.pattern.permute.xlu0 0
    %2571 = vperm.xlu0 %2570, %v2369
    %v2572 = vpop.permute.xlu0 %2571
    %2575 = vset.pattern.permute.xlu0 0
    %2576 = vperm.xlu0 %2575, %v2370
    %v2577 = vpop.permute.xlu0 %2576
    %2580 = vset.pattern.permute.xlu0 0
    %2581 = vperm.xlu0 %2580, %v2371
    %v2582 = vpop.permute.xlu0 %2581
    %2585 = vset.pattern.permute.xlu0 0
    %2586 = vperm.xlu0 %2585, %v2372
    %v2587 = vpop.permute.xlu0 %2586
    %2590 = vset.pattern.permute.xlu0 0
    %2591 = vperm.xlu0 %2590, %v2373
    %v2592 = vpop.permute.xlu0 %2591
    %2595 = vset.pattern.permute.xlu0 0
    %2596 = vperm.xlu0 %2595, %v2374
    %v2597 = vpop.permute.xlu0 %2596
    %v2599 = vadd.f32 %v2487, %v2522
    %v2600 = vadd.f32 %v2488, %v2522
    %v2601 = vadd.f32 %v2489, %v2527
    %v2602 = vadd.f32 %v2490, %v2527
    %v2603 = vadd.f32 %v2491, %v2532
    %v2604 = vadd.f32 %v2492, %v2532
    %v2605 = vadd.f32 %v2493, %v2537
    %v2606 = vadd.f32 %v2494, %v2537
    %v2607 = vadd.f32 %v2495, %v2542
    %v2608 = vadd.f32 %v2496, %v2542
    %v2609 = vadd.f32 %v2497, %v2547
    %v2610 = vadd.f32 %v2498, %v2547
    %v2611 = vadd.f32 %v2499, %v2552
    %v2612 = vadd.f32 %v2500, %v2552
    %v2613 = vadd.f32 %v2501, %v2557
    %v2614 = vadd.f32 %v2502, %v2557
    %v2615 = vadd.f32 %v2503, %v2562
    %v2616 = vadd.f32 %v2504, %v2562
    %v2617 = vadd.f32 %v2505, %v2567
    %v2618 = vadd.f32 %v2506, %v2567
    %v2619 = vadd.f32 %v2507, %v2572
    %v2620 = vadd.f32 %v2508, %v2572
    %v2621 = vadd.f32 %v2509, %v2577
    %v2622 = vadd.f32 %v2510, %v2577
    %v2623 = vadd.f32 %v2511, %v2582
    %v2624 = vadd.f32 %v2512, %v2582
    %v2625 = vadd.f32 %v2513, %v2587
    %v2626 = vadd.f32 %v2514, %v2587
    %v2627 = vadd.f32 %v2515, %v2592
    %v2628 = vadd.f32 %v2516, %v2592
    %v2629 = vadd.f32 %v2517, %v2597
    %v2630 = vadd.f32 %v2518, %v2597
    %2631 = vst [vmem:[#allocation2] sm:$0xff] %v2599
    %2632 = vst [vmem:[#allocation2 + $0x8] sm:$0xff] %v2600
    %2633 = vst [vmem:[#allocation2 + $0x10] sm:$0xff] %v2601
    %2634 = vst [vmem:[#allocation2 + $0x18] sm:$0xff] %v2602
    %2635 = vst [vmem:[#allocation2 + $0x20] sm:$0xff] %v2603
    %2636 = vst [vmem:[#allocation2 + $0x28] sm:$0xff] %v2604
    %2637 = vst [vmem:[#allocation2 + $0x30] sm:$0xff] %v2605
    %2638 = vst [vmem:[#allocation2 + $0x38] sm:$0xff] %v2606
    %2639 = vst [vmem:[#allocation2 + $0x40] sm:$0xff] %v2607
    %2640 = vst [vmem:[#allocation2 + $0x48] sm:$0xff] %v2608
    %2641 = vst [vmem:[#allocation2 + $0x50] sm:$0xff] %v2609
    %2642 = vst [vmem:[#allocation2 + $0x58] sm:$0xff] %v2610
    %2643 = vst [vmem:[#allocation2 + $0x60] sm:$0xff] %v2611
    %2644 = vst [vmem:[#allocation2 + $0x68] sm:$0xff] %v2612
    %2645 = vst [vmem:[#allocation2 + $0x70] sm:$0xff] %v2613
    %2646 = vst [vmem:[#allocation2 + $0x78] sm:$0xff] %v2614
    %2647 = vst [vmem:[#allocation2 + $0x80] sm:$0xff] %v2615
    %2648 = vst [vmem:[#allocation2 + $0x88] sm:$0xff] %v2616
    %2649 = vst [vmem:[#allocation2 + $0x90] sm:$0xff] %v2617
    %2650 = vst [vmem:[#allocation2 + $0x98] sm:$0xff] %v2618
    %2651 = vst [vmem:[#allocation2 + $0xa0] sm:$0xff] %v2619
    %2652 = vst [vmem:[#allocation2 + $0xa8] sm:$0xff] %v2620
    %2653 = vst [vmem:[#allocation2 + $0xb0] sm:$0xff] %v2621
    %2654 = vst [vmem:[#allocation2 + $0xb8] sm:$0xff] %v2622
    %2655 = vst [vmem:[#allocation2 + $0xc0] sm:$0xff] %v2623
    %2656 = vst [vmem:[#allocation2 + $0xc8] sm:$0xff] %v2624
    %2657 = vst [vmem:[#allocation2 + $0xd0] sm:$0xff] %v2625
    %2658 = vst [vmem:[#allocation2 + $0xd8] sm:$0xff] %v2626
    %2659 = vst [vmem:[#allocation2 + $0xe0] sm:$0xff] %v2627
    %2660 = vst [vmem:[#allocation2 + $0xe8] sm:$0xff] %v2628
    %2661 = vst [vmem:[#allocation2 + $0xf0] sm:$0xff] %v2629
    %2662 = vst [vmem:[#allocation2 + $0xf8] sm:$0xff] %v2630
    %2664 = vset.pattern.permute.xlu0 0
    %2665 = vperm.xlu0 %2664, %v2117
    %v2666 = vpop.permute.xlu0 %2665
    %2669 = vset.pattern.permute.xlu0 0
    %2670 = vperm.xlu0 %2669, %v2132
    %v2671 = vpop.permute.xlu0 %2670
    %2674 = vset.pattern.permute.xlu0 0
    %2675 = vperm.xlu0 %2674, %v2147
    %v2676 = vpop.permute.xlu0 %2675
    %2679 = vset.pattern.permute.xlu0 0
    %2680 = vperm.xlu0 %2679, %v2162
    %v2681 = vpop.permute.xlu0 %2680
    %2684 = vset.pattern.permute.xlu0 0
    %2685 = vperm.xlu0 %2684, %v2177
    %v2686 = vpop.permute.xlu0 %2685
    %2689 = vset.pattern.permute.xlu0 0
    %2690 = vperm.xlu0 %2689, %v2192
    %v2691 = vpop.permute.xlu0 %2690
    %2694 = vset.pattern.permute.xlu0 0
    %2695 = vperm.xlu0 %2694, %v2207
    %v2696 = vpop.permute.xlu0 %2695
    %2699 = vset.pattern.permute.xlu0 0
    %2700 = vperm.xlu0 %2699, %v2222
    %v2701 = vpop.permute.xlu0 %2700
    %2704 = vset.pattern.permute.xlu0 0
    %2705 = vperm.xlu0 %2704, %v2237
    %v2706 = vpop.permute.xlu0 %2705
    %2709 = vset.pattern.permute.xlu0 0
    %2710 = vperm.xlu0 %2709, %v2252
    %v2711 = vpop.permute.xlu0 %2710
    %2714 = vset.pattern.permute.xlu0 0
    %2715 = vperm.xlu0 %2714, %v2267
    %v2716 = vpop.permute.xlu0 %2715
    %2719 = vset.pattern.permute.xlu0 0
    %2720 = vperm.xlu0 %2719, %v2282
    %v2721 = vpop.permute.xlu0 %2720
    %2724 = vset.pattern.permute.xlu0 0
    %2725 = vperm.xlu0 %2724, %v2297
    %v2726 = vpop.permute.xlu0 %2725
    %2729 = vset.pattern.permute.xlu0 0
    %2730 = vperm.xlu0 %2729, %v2312
    %v2731 = vpop.permute.xlu0 %2730
    %2734 = vset.pattern.permute.xlu0 0
    %2735 = vperm.xlu0 %2734, %v2327
    %v2736 = vpop.permute.xlu0 %2735
    %2739 = vset.pattern.permute.xlu0 0
    %2740 = vperm.xlu0 %2739, %v2342
    %v2741 = vpop.permute.xlu0 %2740
    %v2743 = vmul.f32 %v321, %v2666
    %v2744 = vmul.f32 %v322, %v2666
    %v2745 = vmul.f32 %v323, %v2671
    %v2746 = vmul.f32 %v324, %v2671
    %v2747 = vmul.f32 %v325, %v2676
    %v2748 = vmul.f32 %v326, %v2676
    %v2749 = vmul.f32 %v327, %v2681
    %v2750 = vmul.f32 %v328, %v2681
    %v2751 = vmul.f32 %v329, %v2686
    %v2752 = vmul.f32 %v330, %v2686
    %v2753 = vmul.f32 %v331, %v2691
    %v2754 = vmul.f32 %v332, %v2691
    %v2755 = vmul.f32 %v333, %v2696
    %v2756 = vmul.f32 %v334, %v2696
    %v2757 = vmul.f32 %v335, %v2701
    %v2758 = vmul.f32 %v336, %v2701
    %v2759 = vmul.f32 %v337, %v2706
    %v2760 = vmul.f32 %v338, %v2706
    %v2761 = vmul.f32 %v339, %v2711
    %v2762 = vmul.f32 %v340, %v2711
    %v2763 = vmul.f32 %v341, %v2716
    %v2764 = vmul.f32 %v342, %v2716
    %v2765 = vmul.f32 %v343, %v2721
    %v2766 = vmul.f32 %v344, %v2721
    %v2767 = vmul.f32 %v345, %v2726
    %v2768 = vmul.f32 %v346, %v2726
    %v2769 = vmul.f32 %v347, %v2731
    %v2770 = vmul.f32 %v348, %v2731
    %v2771 = vmul.f32 %v349, %v2736
    %v2772 = vmul.f32 %v350, %v2736
    %v2773 = vmul.f32 %v351, %v2741
    %v2774 = vmul.f32 %v352, %v2741
    %2776 = vset.pattern.permute.xlu0 0
    %2777 = vperm.xlu0 %2776, %v2391
    %v2778 = vpop.permute.xlu0 %2777
    %2781 = vset.pattern.permute.xlu0 0
    %2782 = vperm.xlu0 %2781, %v2392
    %v2783 = vpop.permute.xlu0 %2782
    %2786 = vset.pattern.permute.xlu0 0
    %2787 = vperm.xlu0 %2786, %v2393
    %v2788 = vpop.permute.xlu0 %2787
    %2791 = vset.pattern.permute.xlu0 0
    %2792 = vperm.xlu0 %2791, %v2394
    %v2793 = vpop.permute.xlu0 %2792
    %2796 = vset.pattern.permute.xlu0 0
    %2797 = vperm.xlu0 %2796, %v2395
    %v2798 = vpop.permute.xlu0 %2797
    %2801 = vset.pattern.permute.xlu0 0
    %2802 = vperm.xlu0 %2801, %v2396
    %v2803 = vpop.permute.xlu0 %2802
    %2806 = vset.pattern.permute.xlu0 0
    %2807 = vperm.xlu0 %2806, %v2397
    %v2808 = vpop.permute.xlu0 %2807
    %2811 = vset.pattern.permute.xlu0 0
    %2812 = vperm.xlu0 %2811, %v2398
    %v2813 = vpop.permute.xlu0 %2812
    %2816 = vset.pattern.permute.xlu0 0
    %2817 = vperm.xlu0 %2816, %v2399
    %v2818 = vpop.permute.xlu0 %2817
    %2821 = vset.pattern.permute.xlu0 0
    %2822 = vperm.xlu0 %2821, %v2400
    %v2823 = vpop.permute.xlu0 %2822
    %2826 = vset.pattern.permute.xlu0 0
    %2827 = vperm.xlu0 %2826, %v2401
    %v2828 = vpop.permute.xlu0 %2827
    %2831 = vset.pattern.permute.xlu0 0
    %2832 = vperm.xlu0 %2831, %v2402
    %v2833 = vpop.permute.xlu0 %2832
    %2836 = vset.pattern.permute.xlu0 0
    %2837 = vperm.xlu0 %2836, %v2403
    %v2838 = vpop.permute.xlu0 %2837
    %2841 = vset.pattern.permute.xlu0 0
    %2842 = vperm.xlu0 %2841, %v2404
    %v2843 = vpop.permute.xlu0 %2842
    %2846 = vset.pattern.permute.xlu0 0
    %2847 = vperm.xlu0 %2846, %v2405
    %v2848 = vpop.permute.xlu0 %2847
    %2851 = vset.pattern.permute.xlu0 0
    %2852 = vperm.xlu0 %2851, %v2406
    %v2853 = vpop.permute.xlu0 %2852
    %v2855 = vadd.f32 %v2743, %v2778
    %v2856 = vadd.f32 %v2744, %v2778
    %v2857 = vadd.f32 %v2745, %v2783
    %v2858 = vadd.f32 %v2746, %v2783
    %v2859 = vadd.f32 %v2747, %v2788
    %v2860 = vadd.f32 %v2748, %v2788
    %v2861 = vadd.f32 %v2749, %v2793
    %v2862 = vadd.f32 %v2750, %v2793
    %v2863 = vadd.f32 %v2751, %v2798
    %v2864 = vadd.f32 %v2752, %v2798
    %v2865 = vadd.f32 %v2753, %v2803
    %v2866 = vadd.f32 %v2754, %v2803
    %v2867 = vadd.f32 %v2755, %v2808
    %v2868 = vadd.f32 %v2756, %v2808
    %v2869 = vadd.f32 %v2757, %v2813
    %v2870 = vadd.f32 %v2758, %v2813
    %v2871 = vadd.f32 %v2759, %v2818
    %v2872 = vadd.f32 %v2760, %v2818
    %v2873 = vadd.f32 %v2761, %v2823
    %v2874 = vadd.f32 %v2762, %v2823
    %v2875 = vadd.f32 %v2763, %v2828
    %v2876 = vadd.f32 %v2764, %v2828
    %v2877 = vadd.f32 %v2765, %v2833
    %v2878 = vadd.f32 %v2766, %v2833
    %v2879 = vadd.f32 %v2767, %v2838
    %v2880 = vadd.f32 %v2768, %v2838
    %v2881 = vadd.f32 %v2769, %v2843
    %v2882 = vadd.f32 %v2770, %v2843
    %v2883 = vadd.f32 %v2771, %v2848
    %v2884 = vadd.f32 %v2772, %v2848
    %v2885 = vadd.f32 %v2773, %v2853
    %v2886 = vadd.f32 %v2774, %v2853
    %2887 = vst [vmem:[#allocation4] sm:$0xff] %v2855
    %2888 = vst [vmem:[#allocation4 + $0x8] sm:$0xff] %v2856
    %2889 = vst [vmem:[#allocation4 + $0x10] sm:$0xff] %v2857
    %2890 = vst [vmem:[#allocation4 + $0x18] sm:$0xff] %v2858
    %2891 = vst [vmem:[#allocation4 + $0x20] sm:$0xff] %v2859
    %2892 = vst [vmem:[#allocation4 + $0x28] sm:$0xff] %v2860
    %2893 = vst [vmem:[#allocation4 + $0x30] sm:$0xff] %v2861
    %2894 = vst [vmem:[#allocation4 + $0x38] sm:$0xff] %v2862
    %2895 = vst [vmem:[#allocation4 + $0x40] sm:$0xff] %v2863
    %2896 = vst [vmem:[#allocation4 + $0x48] sm:$0xff] %v2864
    %2897 = vst [vmem:[#allocation4 + $0x50] sm:$0xff] %v2865
    %2898 = vst [vmem:[#allocation4 + $0x58] sm:$0xff] %v2866
    %2899 = vst [vmem:[#allocation4 + $0x60] sm:$0xff] %v2867
    %2900 = vst [vmem:[#allocation4 + $0x68] sm:$0xff] %v2868
    %2901 = vst [vmem:[#allocation4 + $0x70] sm:$0xff] %v2869
    %2902 = vst [vmem:[#allocation4 + $0x78] sm:$0xff] %v2870
    %2903 = vst [vmem:[#allocation4 + $0x80] sm:$0xff] %v2871
    %2904 = vst [vmem:[#allocation4 + $0x88] sm:$0xff] %v2872
    %2905 = vst [vmem:[#allocation4 + $0x90] sm:$0xff] %v2873
    %2906 = vst [vmem:[#allocation4 + $0x98] sm:$0xff] %v2874
    %2907 = vst [vmem:[#allocation4 + $0xa0] sm:$0xff] %v2875
    %2908 = vst [vmem:[#allocation4 + $0xa8] sm:$0xff] %v2876
    %2909 = vst [vmem:[#allocation4 + $0xb0] sm:$0xff] %v2877
    %2910 = vst [vmem:[#allocation4 + $0xb8] sm:$0xff] %v2878
    %2911 = vst [vmem:[#allocation4 + $0xc0] sm:$0xff] %v2879
    %2912 = vst [vmem:[#allocation4 + $0xc8] sm:$0xff] %v2880
    %2913 = vst [vmem:[#allocation4 + $0xd0] sm:$0xff] %v2881
    %2914 = vst [vmem:[#allocation4 + $0xd8] sm:$0xff] %v2882
    %2915 = vst [vmem:[#allocation4 + $0xe0] sm:$0xff] %v2883
    %2916 = vst [vmem:[#allocation4 + $0xe8] sm:$0xff] %v2884
    %2917 = vst [vmem:[#allocation4 + $0xf0] sm:$0xff] %v2885
    %2918 = vst [vmem:[#allocation4 + $0xf8] sm:$0xff] %v2886
    // Predicated region
    $region34: #{mccsdg_forward_pallas.1} parent=1 // pred_check
      _
    $region35: #{mccsdg_forward_pallas.1} parent=1 // pred_check_branch
      %2920 = sbr.rel (0) target = $region37
    $region36: #{mccsdg_forward_pallas.1} parent=1 // pred_region
      %2922 = vsyncadd [#allocation3], 0
      %s2923 = sshll.u32 [#allocation2], 4
      %s2924 = int_to_ptr.vmem [resolvable:$true] %s2923
      %s2925 = sshll.u32 %s8, 4
      %s2926 = int_to_ptr.hbm [resolvable:$true] %s2925
      %2931 = dma.vmem_to_hbm [thread:$0]  %s2924, 4096, %s2926, [#allocation3], 256, 256, 16
    $region37: #{mccsdg_forward_pallas.1} parent=1 // pred_fallthru
      _
    // Predicated region
    $region38: #{mccsdg_forward_pallas.1} parent=1 // pred_check
      _
    $region39: #{mccsdg_forward_pallas.1} parent=1 // pred_check_branch
      %2933 = sbr.rel (0) target = $region41
    $region40: #{mccsdg_forward_pallas.1} parent=1 // pred_region
      %2935 = vsyncadd [#allocation5], 0
      %s2936 = sshll.u32 [#allocation4], 4
      %s2937 = int_to_ptr.vmem [resolvable:$true] %s2936
      %s2938 = sshll.u32 %s9, 4
      %s2939 = int_to_ptr.hbm [resolvable:$true] %s2938
      %2944 = dma.vmem_to_hbm [thread:$0]  %s2937, 4096, %s2939, [#allocation5], 256, 256, 16
    $region41: #{mccsdg_forward_pallas.1} parent=1 // pred_fallthru
      _
    // Predicated region
    $region42: #{mccsdg_forward_pallas.1} parent=1 // pred_check
      _
    $region43: #{mccsdg_forward_pallas.1} parent=1 // pred_check_branch
      %2946 = sbr.rel (0) target = $region45
    $region44: #{mccsdg_forward_pallas.1} parent=1 // pred_region
      %2948 = dma.done [#allocation3], 4096
    $region45: #{mccsdg_forward_pallas.1} parent=1 // pred_fallthru
      _
    // Predicated region
    $region46: #{mccsdg_forward_pallas.1} parent=1 // pred_check
      _
    $region47: #{mccsdg_forward_pallas.1} parent=1 // pred_check_branch
      %2950 = sbr.rel (0) target = $region49
    $region48: #{mccsdg_forward_pallas.1} parent=1 // pred_region
      %2952 = dma.done [#allocation5], 4096
    $region49: #{mccsdg_forward_pallas.1} parent=1 // pred_fallthru
      _
    %2953 = vsyncpa [#allocation3], 1
    %2954 = vsyncpa [#allocation5], 1

</llo_original>
